<compile_context>
chip_gen: v6e
topology: v6e:2x2x1
jax: 0.10.0
libtpu: 0.0.40
codegen_flags: <defaults>
</compile_context>

<pallas_src>
import functools

import jax
import jax.numpy as jnp
import numpy as np
from jax.experimental import pallas as pl
from jax.experimental.pallas import tpu as pltpu


def _round_up(x, m):
    return (x + m - 1) // m * m


def _plan_chunks(c_in, max_c_chunk=1 << 15):
    """Pick (c_chunk, n_chunks): 1 step unless C_in is huge."""
    c_pad0 = _round_up(c_in, 128)
    n_chunks = max(1, -(-c_pad0 // max_c_chunk))
    c_chunk = _round_up(-(-c_in // n_chunks), 128)
    return c_chunk, n_chunks


def prepare_weights(weight, c_pad):
    """One-time (offline) transform of the ConvTranspose2d weight parameter.

    weight: (C_in, 1, K, K) f32 (PyTorch layout) -> (K*K, C_pad) bf16,
    lane-dense in C (long contiguous HBM rows) and zero-padded so padded
    channels contribute nothing.  Called once, outside the hot path.
    """
    c_in, c_out, kh, kw = weight.shape
    assert c_out == 1 and kh == kw
    w2 = jnp.transpose(weight.reshape(c_in, kh * kw)).astype(jnp.bfloat16)
    return jnp.pad(w2, ((0, 0), (0, c_pad - c_in)))


def _convt_silu_kernel(x_ref, w_ref, sel_ref, b_ref, o_ref, acc_ref):
    """One grid step of the C_in reduction (+ finalize on the last step).

    x_ref:   (HW, C_CHUNK) bf16  activations (pixel rows, channel lanes)
    w_ref:   (KK, C_CHUNK) bf16  weights (tap rows, channel lanes)
    sel_ref: (HW, KK, Q)   f32   0/1 overlap-add selectors (constant)
    b_ref:   (1,)          f32   bias (SMEM scalar)
    o_ref:   (1, Q)        f32   flat output row (q = oh*W_out + ow)
    acc_ref: (KK, HW)      f32   per-tap, per-pixel accumulator (scratch)
    """
    step = pl.program_id(0)

    @pl.when(step == 0)
    def _init():
        acc_ref[...] = jnp.zeros_like(acc_ref)

    # Single lane-dense MXU contraction over this C_in chunk; channels sit on
    # the lane axis of BOTH operands (A @ B.T form), so only the tiny x tile
    # needs an implicit relayout:  (KK, C) x (HW, C) -> (KK, HW), f32 acc.
    acc_ref[...] += jax.lax.dot_general(
        w_ref[...], x_ref[...],
        dimension_numbers=(((1,), (1,)), ((), ())),
        preferred_element_type=jnp.float32,
    )

    @pl.when(step == pl.num_programs(0) - 1)
    def _finalize():
        taps = acc_ref[...]                       # (KK, HW) f32
        hw = taps.shape[1]
        kk, q = sel_ref.shape[1], sel_ref.shape[2]
        # Overlap-add of the transposed conv: output pixel q receives tap t
        # of input pixel p iff sel[p, t, q] == 1.  HW is tiny (3..24), so
        # this is a short unrolled VPU loop over (KK, Q) tiles, followed by
        # one sublane reduction.
        g = jnp.zeros((kk, q), jnp.float32)
        for p in range(hw):
            g = g + taps[:, p:p + 1] * sel_ref[p]
        v1 = jnp.sum(g, axis=0, keepdims=True) + b_ref[0]      # (1, Q)
        # SiLU: v1 * sigmoid(v1).  For very negative v1, exp(-v1) -> inf and
        # sigmoid -> 0, so v1 * 0 = 0 which is the correct SiLU limit.
        v2 = 1.0 / (1.0 + jnp.exp(-v1))
        o_ref[...] = v1 * v2


@functools.partial(jax.jit, static_argnames=("padding", "c_chunk", "n_chunks"))
def conv_transpose_silu(x_nchw, w_prep, bias, *, padding, c_chunk, n_chunks):
    """ConvTranspose2d(C_in, 1, K, stride=1, padding) + SiLU (hot path).

    x_nchw: (1, C_in, H, W) f32; w_prep: (K*K, C_pad) bf16 from
    prepare_weights(); bias: (1,) f32.  Returns (1, 1, H_out, W_out) f32.
    """
    n, c_in, h, w = x_nchw.shape
    assert n == 1
    kk, c_pad = w_prep.shape
    assert c_pad == c_chunk * n_chunks
    k = int(round(kk ** 0.5))
    assert k * k == kk
    h_out = h + k - 1 - 2 * padding
    w_out = w + k - 1 - 2 * padding
    hw, q = h * w, h_out * w_out

    # Activations: (1, C, H, W) -> (HW, C_pad) bf16.  x is tiny (~2*C_pad*HW
    # bytes), so this single transpose/cast/pad is negligible; keeping C on
    # the lane axis avoids a (C_pad, HW->128-lane) padded HBM buffer.
    x2 = jnp.transpose(x_nchw[0].reshape(c_in, hw)).astype(jnp.bfloat16)
    x2 = jnp.pad(x2, ((0, 0), (0, c_pad - c_in)))

    # Static 0/1 selectors: sel[p, t, q] = 1 iff input pixel p shifted by tap
    # t lands on output pixel q (scatter form of the transposed conv).
    ih, iw = np.arange(hw) // w, np.arange(hw) % w
    tr, tc = np.arange(kk) // k, np.arange(kk) % k
    oh, ow = np.arange(q) // w_out, np.arange(q) % w_out
    sel = ((ih[:, None, None] + tr[None, :, None] == oh[None, None, :] + padding)
           & (iw[:, None, None] + tc[None, :, None] == ow[None, None, :] + padding)
           ).astype(np.float32)

    bias_f32 = bias.reshape(1).astype(jnp.float32)

    out_row = pl.pallas_call(
        _convt_silu_kernel,
        out_shape=jax.ShapeDtypeStruct((1, q), jnp.float32),
        grid_spec=pltpu.PrefetchScalarGridSpec(
            num_scalar_prefetch=0,
            grid=(n_chunks,),
            in_specs=[
                pl.BlockSpec((hw, c_chunk), lambda i: (0, i)),      # x
                pl.BlockSpec((kk, c_chunk), lambda i: (0, i)),      # weights
                pl.BlockSpec((hw, kk, q), lambda i: (0, 0, 0)),     # selectors
                pl.BlockSpec(memory_space=pltpu.MemorySpace.SMEM),  # bias
            ],
            out_specs=pl.BlockSpec((1, q), lambda i: (0, 0)),
            scratch_shapes=[pltpu.VMEM((kk, hw), jnp.float32)],
        ),
        compiler_params=pltpu.CompilerParams(
            dimension_semantics=("arbitrary",)),
    )(x2, w_prep, jnp.asarray(sel), bias_f32)

    return out_row.reshape(h_out, w_out)[None, None]


def reference(x_nchw, weight, bias, *, padding=1):
    """Pure-JAX reference (scatter form of ConvTranspose2d, stride=1) + SiLU."""
    n, c_in, h, w = x_nchw.shape
    _, c_out, k, _ = weight.shape
    full = jnp.zeros((n, c_out, h + k - 1, w + k - 1), jnp.float32)
    for r in range(k):
        for c in range(k):
            contrib = jnp.einsum('nchw,co->nohw', x_nchw, weight[:, :, r, c])
            full = full.at[:, :, r:r + h, c:c + w].add(contrib)
    v1 = full[:, :, padding:h + k - 1 - padding,
              padding:w + k - 1 - padding] + bias[None, :, None, None]
    return v1 * jax.nn.sigmoid(v1)


if __name__ == "__main__":
    K, PAD = 7, 1
    # (C_in, H, W, max_c_chunk):
    #   * first config matches the module's ConvTranspose2d(7338, 1, 7) with
    #     its tiny (1, 3) spatial input (single-step grid, c_pad=7424),
    #   * second is a smaller stand-in with a 2-D overlap-add,
    #   * third forces the multi-chunk reduction path (3 grid steps) and a
    #     non-multiple-of-128 channel count.
    configs = [
        (7338, 1, 3, 1 << 15),
        (384, 4, 6, 1 << 15),
        (300, 1, 3, 128),
    ]
    for c_in, h, w, max_c_chunk in configs:
        key = jax.random.PRNGKey(0)
        k_x, k_w, k_b = jax.random.split(key, 3)
        x1 = jax.random.normal(k_x, (1, c_in, h, w), dtype=jnp.float32)
        bound = 1.0 / (K * K) ** 0.5
        weight = jax.random.uniform(k_w, (c_in, 1, K, K), jnp.float32,
                                    -bound, bound)
        bias = jax.random.uniform(k_b, (1,), jnp.float32, -bound, bound)

        c_chunk, n_chunks = _plan_chunks(c_in, max_c_chunk)
        w_prep = prepare_weights(weight, c_chunk * n_chunks)   # one-time prep

        out = conv_transpose_silu(x1, w_prep, bias, padding=PAD,
                                  c_chunk=c_chunk, n_chunks=n_chunks)
        out = jax.block_until_ready(out)

        # Compare against a reference on the same bf16-rounded operands
        # (kernel uses bf16 MXU operands with f32 accumulation).
        xq = x1.astype(jnp.bfloat16).astype(jnp.float32)
        wq = weight.astype(jnp.bfloat16).astype(jnp.float32)
        ref = reference(xq, wq, bias, padding=PAD)

        h_out = h + K - 1 - 2 * PAD
        w_out = w + K - 1 - 2 * PAD
        assert out.shape == ref.shape == (1, 1, h_out, w_out)
        err = float(jnp.max(jnp.abs(out - ref)))
        assert jnp.allclose(out, ref, rtol=2e-2, atol=2e-2), (
            f"mismatch vs reference for C_in={c_in}, H={h}, W={w}: "
            f"max err {err}")
    print("KERNEL_OK")
</pallas_src>

<mosaic_0001>
module attributes {stable_mosaic.version = 11 : i64} {
  func.func @_convt_silu_kernel(%arg0: i32, %arg1: memref<3x7424xbf16, #tpu.memory_space<vmem>>, %arg2: memref<49x7424xbf16, #tpu.memory_space<vmem>>, %arg3: memref<3x49x35xf32, #tpu.memory_space<vmem>>, %arg4: memref<1xf32, #tpu.memory_space<smem>>, %arg5: memref<1x35xf32, #tpu.memory_space<vmem>>, %arg6: memref<49x3xf32, #tpu.memory_space<vmem>>) attributes {dimension_semantics = [#tpu.dimension_semantics<arbitrary>], iteration_bounds = array<i64: 1>, scalar_prefetch = 0 : i64, scratch_operands = 1 : i64, tpu.core_type = #tpu.core_type<tc>, window_params = [{transform_indices = @transform_0, window_bounds = array<i64: 3, 7424>}, {transform_indices = @transform_1, window_bounds = array<i64: 49, 7424>}, {pipeline_mode = #tpu.pipeline_mode<synchronous>, transform_indices = @transform_2, window_bounds = array<i64: 3, 49, 35>}, {transform_indices = @transform_3, window_bounds = array<i64: 1>}, {pipeline_mode = #tpu.pipeline_mode<synchronous>, transform_indices = @transform_4, window_bounds = array<i64: 1, 35>}]} {
    %c0_i32 = arith.constant 0 : i32
    %0 = arith.cmpi eq, %arg0, %c0_i32 : i32
    %1 = arith.extui %0 : i1 to i32
    %c0_i32_0 = arith.constant 0 : i32
    %2 = arith.cmpi ne, %1, %c0_i32_0 : i32
    scf.if %2 {
      %cst_10 = arith.constant 0.000000e+00 : f32
      %12 = vector.broadcast %cst_10 : f32 to vector<49x3xf32>
      %c0_11 = arith.constant 0 : index
      %c0_12 = arith.constant 0 : index
      %13 = vector.load %arg6[%c0_11, %c0_12] : memref<49x3xf32, #tpu.memory_space<vmem>>, vector<49x3xf32>
      tpu.vector_store %arg6[%c0_11, %c0_12], %12 {strides = array<i32>} : memref<49x3xf32, #tpu.memory_space<vmem>>, vector<49x3xf32>,
    } else {
    }
    %c0 = arith.constant 0 : index
    %c0_1 = arith.constant 0 : index
    %3 = vector.load %arg6[%c0, %c0_1] : memref<49x3xf32, #tpu.memory_space<vmem>>, vector<49x3xf32>
    %c0_2 = arith.constant 0 : index
    %c0_3 = arith.constant 0 : index
    %4 = vector.load %arg2[%c0_2, %c0_3] : memref<49x7424xbf16, #tpu.memory_space<vmem>>, vector<49x7424xbf16>
    %c0_4 = arith.constant 0 : index
    %c0_5 = arith.constant 0 : index
    %5 = vector.load %arg1[%c0_4, %c0_5] : memref<3x7424xbf16, #tpu.memory_space<vmem>>, vector<3x7424xbf16>
    %cst = arith.constant dense<0.000000e+00> : vector<49x3xf32>
    %6 = tpu.matmul %4, %5, %cst {dimension_numbers = #tpu.dot_dimension_numbers<[1], [1], [0], [0], [0, 0, 1, 0], [], []>} : vector<49x7424xbf16>, vector<3x7424xbf16>, vector<49x3xf32> -> vector<49x3xf32>
    %7 = arith.addf %3, %6 : vector<49x3xf32>
    %c0_6 = arith.constant 0 : index
    %c0_7 = arith.constant 0 : index
    %8 = vector.load %arg6[%c0_6, %c0_7] : memref<49x3xf32, #tpu.memory_space<vmem>>, vector<49x3xf32>
    tpu.vector_store %arg6[%c0_6, %c0_7], %7 {strides = array<i32>} : memref<49x3xf32, #tpu.memory_space<vmem>>, vector<49x3xf32>,
    %c0_i32_8 = arith.constant 0 : i32
    %9 = arith.cmpi eq, %arg0, %c0_i32_8 : i32
    %10 = arith.extui %9 : i1 to i32
    %c0_i32_9 = arith.constant 0 : i32
    %11 = arith.cmpi ne, %10, %c0_i32_9 : i32
    scf.if %11 {
      %c0_10 = arith.constant 0 : index
      %c0_11 = arith.constant 0 : index
      %12 = vector.load %arg6[%c0_10, %c0_11] : memref<49x3xf32, #tpu.memory_space<vmem>>, vector<49x3xf32>
      %cst_12 = arith.constant 0.000000e+00 : f32
      %13 = vector.broadcast %cst_12 : f32 to vector<49x35xf32>
      %14 = vector.extract_strided_slice %12 {offsets = [0, 0], sizes = [49, 1], strides = [1, 1]} : vector<49x3xf32> to vector<49x1xf32>
      %c0_13 = arith.constant 0 : index
      %c0_14 = arith.constant 0 : index
      %c0_15 = arith.constant 0 : index
      %15 = vector.load %arg3[%c0_13, %c0_14, %c0_15] : memref<3x49x35xf32, #tpu.memory_space<vmem>>, vector<1x49x35xf32>
      %16 = vector.shape_cast %15 : vector<1x49x35xf32> to vector<49x35xf32>
      %17 = vector.broadcast %14 : vector<49x1xf32> to vector<49x35xf32>
      %18 = arith.mulf %17, %16 : vector<49x35xf32>
      %19 = arith.addf %13, %18 : vector<49x35xf32>
      %20 = vector.extract_strided_slice %12 {offsets = [0, 1], sizes = [49, 1], strides = [1, 1]} : vector<49x3xf32> to vector<49x1xf32>
      %c1 = arith.constant 1 : index
      %c0_16 = arith.constant 0 : index
      %c0_17 = arith.constant 0 : index
      %21 = vector.load %arg3[%c1, %c0_16, %c0_17] : memref<3x49x35xf32, #tpu.memory_space<vmem>>, vector<1x49x35xf32>
      %22 = vector.shape_cast %21 : vector<1x49x35xf32> to vector<49x35xf32>
      %23 = vector.broadcast %20 : vector<49x1xf32> to vector<49x35xf32>
      %24 = arith.mulf %23, %22 : vector<49x35xf32>
      %25 = arith.addf %19, %24 : vector<49x35xf32>
      %26 = vector.extract_strided_slice %12 {offsets = [0, 2], sizes = [49, 1], strides = [1, 1]} : vector<49x3xf32> to vector<49x1xf32>
      %c2 = arith.constant 2 : index
      %c0_18 = arith.constant 0 : index
      %c0_19 = arith.constant 0 : index
      %27 = vector.load %arg3[%c2, %c0_18, %c0_19] : memref<3x49x35xf32, #tpu.memory_space<vmem>>, vector<1x49x35xf32>
      %28 = vector.shape_cast %27 : vector<1x49x35xf32> to vector<49x35xf32>
      %29 = vector.broadcast %26 : vector<49x1xf32> to vector<49x35xf32>
      %30 = arith.mulf %29, %28 : vector<49x35xf32>
      %31 = arith.addf %25, %30 : vector<49x35xf32>
      %cst_20 = arith.constant dense<0.000000e+00> : vector<35xf32>
      %32 = vector.multi_reduction <add>, %31, %cst_20 [0] : vector<49x35xf32> to vector<35xf32>
      %33 = vector.shape_cast %32 : vector<35xf32> to vector<1x35xf32>
      %c0_21 = arith.constant 0 : index
      %34 = memref.load %arg4[%c0_21] : memref<1xf32, #tpu.memory_space<smem>>
      %35 = vector.broadcast %34 : f32 to vector<1x35xf32>
      %36 = arith.addf %33, %35 : vector<1x35xf32>
      %cst_22 = arith.constant 0.000000e+00 : f32
      %37 = vector.broadcast %cst_22 : f32 to vector<1x35xf32>
      %38 = arith.subf %37, %36 : vector<1x35xf32>
      %39 = math.exp %38 : vector<1x35xf32>
      %cst_23 = arith.constant 1.000000e+00 : f32
      %40 = vector.broadcast %cst_23 : f32 to vector<1x35xf32>
      %41 = arith.addf %40, %39 : vector<1x35xf32>
      %cst_24 = arith.constant 1.000000e+00 : f32
      %42 = vector.broadcast %cst_24 : f32 to vector<1x35xf32>
      %43 = arith.divf %42, %41 : vector<1x35xf32>
      %44 = arith.mulf %36, %43 : vector<1x35xf32>
      %c0_25 = arith.constant 0 : index
      %c0_26 = arith.constant 0 : index
      %45 = vector.load %arg5[%c0_25, %c0_26] : memref<1x35xf32, #tpu.memory_space<vmem>>, vector<1x35xf32>
      tpu.vector_store %arg5[%c0_25, %c0_26], %44 {strides = array<i32>} : memref<1x35xf32, #tpu.memory_space<vmem>>, vector<1x35xf32>,
    } else {
    }
    return
  }
  func.func @transform_0(%arg0: i32) -> (i32, i32) {
    %c0_i32 = arith.constant 0 : i32
    %c0_i32_0 = arith.constant 0 : i32
    return %c0_i32, %arg0 : i32, i32
  }
  func.func @transform_1(%arg0: i32) -> (i32, i32) {
    %c0_i32 = arith.constant 0 : i32
    %c0_i32_0 = arith.constant 0 : i32
    return %c0_i32, %arg0 : i32, i32
  }
  func.func @transform_2(%arg0: i32) -> (i32, i32, i32) {
    %c0_i32 = arith.constant 0 : i32
    %c0_i32_0 = arith.constant 0 : i32
    %c0_i32_1 = arith.constant 0 : i32
    %c0_i32_2 = arith.constant 0 : i32
    return %c0_i32, %c0_i32_0, %c0_i32_1 : i32, i32, i32
  }
  func.func @transform_3(%arg0: i32) -> i32 {
    %c0_i32 = arith.constant 0 : i32
    %c0_i32_0 = arith.constant 0 : i32
    return %c0_i32 : i32
  }
  func.func @transform_4(%arg0: i32) -> (i32, i32) {
    %c0_i32 = arith.constant 0 : i32
    %c0_i32_0 = arith.constant 0 : i32
    %c0_i32_1 = arith.constant 0 : i32
    return %c0_i32, %c0_i32_0 : i32, i32
  }
}

</mosaic_0001>

<llo_original>
// kernel: conv_transpose_silu.1
$region0: #{conv_transpose_silu.1}
  #allocation0 [shape = 'u32[]', space=smem, size = 0x4, offset = 0x4, fixed_abs, tag = 'smem constant byte address 0x4 - core index']
  #allocation1 [shape = 'u32[144,128]{1,0:T(1,128)}', space=vmem, size = 0x12000, scoped, tag = 'internal scratch']
  #allocation2 [shape = 'f32[49,3]{1,0:T(8,128)}', space=vmem, size = 0x7000, scoped, tag = 'scratch operand']
  #allocation3 [shape = 'f32[1]{0:T(128)S(6)}', space=smem, size = 0x200, scoped, tag = 'scoped memory for conv_transpose_silu.1']
  %s0 = inlined_call_operand.vmem [shape: bf16[3,7424], index: 0, kind: input, shape index: {}]
  %s1 = inlined_call_operand.hbm [shape: bf16[49,7424], index: 1, kind: input, shape index: {}]
  %s2 = inlined_call_operand.vmem [shape: f32[3,49,35], index: 2, kind: input, shape index: {}]
  %s3 = inlined_call_operand.<no memory space> [shape: f32[1], index: 3, kind: input, shape index: {}]
  %s4 = inlined_call_operand.vmem [shape: f32[1,35], index: 4, kind: output, shape index: {}]
  %s5 = sld [smem:[#allocation0]]
  $region38: #{conv_transpose_silu.1} parent=0
    _
  %s7 = ssub.s32 1, %s5
  %s8 = scalar_select 0, %s7, %s5
  %9 = sst [smem:[#allocation3]] %s3
  $region1: #{conv_transpose_silu.1} parent=0
    #allocation4 [shape = 'u8[831488]{0}', space=vmem, size = 0xcb000, scoped, tag = 'input window, operand 1, single buffered']
    #allocation5 [shape = 's32[1]{0}', space=sflag, size = 0x4, scoped, tag = 'scoped memory for conv_transpose_silu.1']
    %10 = vsyncpa [#allocation5], 0
    // Predicated region
    $region2: #{conv_transpose_silu.1} parent=1 // pred_check
      _
    $region3: #{conv_transpose_silu.1} parent=1 // pred_check_branch
      %12 = sbr.rel (0) target = $region5
    $region4: #{conv_transpose_silu.1} parent=1 // pred_region
      _
    $region5: #{conv_transpose_silu.1} parent=1 // pred_fallthru
      _
    // Predicated region
    $region6: #{conv_transpose_silu.1} parent=1 // pred_check
      _
    $region7: #{conv_transpose_silu.1} parent=1 // pred_check_branch
      %14 = sbr.rel (0) target = $region9
    $region8: #{conv_transpose_silu.1} parent=1 // pred_region
      %s16 = ssub.s32 25984, 25984
      %17 = vsyncadd [#allocation5], %s16
      %s18 = sshll.u32 [#allocation4], 4
      %s19 = int_to_ptr.vmem [resolvable:$true] %s18
      %24 = dma.hbm_to_vmem [thread:$0]  %s1, 25984, %s19, [#allocation5], 3712, 3712, 232
    $region9: #{conv_transpose_silu.1} parent=1 // pred_fallthru
      _
    // Predicated region
    $region10: #{conv_transpose_silu.1} parent=1 // pred_check
      _
    $region11: #{conv_transpose_silu.1} parent=1 // pred_check_branch
      %26 = sbr.rel (0) target = $region13
    $region12: #{conv_transpose_silu.1} parent=1 // pred_region
      _
    $region13: #{conv_transpose_silu.1} parent=1 // pred_fallthru
      _
    // Predicated region
    $region14: #{conv_transpose_silu.1} parent=1 // pred_check
      _
    $region15: #{conv_transpose_silu.1} parent=1 // pred_check_branch
      %28 = sbr.rel (0) target = $region17
    $region16: #{conv_transpose_silu.1} parent=1 // pred_region
      _
    $region17: #{conv_transpose_silu.1} parent=1 // pred_fallthru
      _
    // Predicated region
    $region18: #{conv_transpose_silu.1} parent=1 // pred_check
      _
    $region19: #{conv_transpose_silu.1} parent=1 // pred_check_branch
      %30 = sbr.rel (0) target = $region21
    $region20: #{conv_transpose_silu.1} parent=1 // pred_region
      %31 = dma.done [#allocation5], 25984
    $region21: #{conv_transpose_silu.1} parent=1 // pred_fallthru
      _
    %p33 = scmp.eq.s32.totalorder 0, 0
    // Predicated region
    $region22: #{conv_transpose_silu.1} parent=1 // pred_check
      %p34 = pneg %p33
    $region23: #{conv_transpose_silu.1} parent=1 // pred_check_branch
      %36 = sbr.rel (%p34) target = $region25
    $region24: #{conv_transpose_silu.1} parent=1 // pred_region
      %vm37 = vcmask 23552
      %38 = vst.msk [vmem:[#allocation2] sm:$0xff] %vm37, 0.0
      %39 = vst.msk [vmem:[#allocation2 + $0x8] sm:$0xff] %vm37, 0.0
      %40 = vst.msk [vmem:[#allocation2 + $0x10] sm:$0xff] %vm37, 0.0
      %41 = vst.msk [vmem:[#allocation2 + $0x18] sm:$0xff] %vm37, 0.0
      %42 = vst.msk [vmem:[#allocation2 + $0x20] sm:$0xff] %vm37, 0.0
      %43 = vst.msk [vmem:[#allocation2 + $0x28] sm:$0xff] %vm37, 0.0
      %vm44 = vcmask 16384
      %45 = vst.msk [vmem:[#allocation2 + $0x30] sm:$0x1] %vm44, 0.0
    $region25: #{conv_transpose_silu.1} parent=1 // pred_fallthru
      _
    %v46 = vld [vmem:[#allocation2] sm:$0xff]
    %v47 = vld [vmem:[#allocation2 + $0x8] sm:$0xff]
    %v48 = vld [vmem:[#allocation2 + $0x10] sm:$0xff]
    %v49 = vld [vmem:[#allocation2 + $0x18] sm:$0xff]
    %v50 = vld [vmem:[#allocation2 + $0x20] sm:$0xff]
    %v51 = vld [vmem:[#allocation2 + $0x28] sm:$0xff]
    %v52 = vld [vmem:[#allocation2 + $0x30] sm:$0x1]
    %v53 = vld [vmem:[#allocation4] sm:$0xff]
    %v54 = vld [vmem:[#allocation4 + $0x8] sm:$0xff]
    %v55 = vld [vmem:[#allocation4 + $0x10] sm:$0xff]
    %v56 = vld [vmem:[#allocation4 + $0x18] sm:$0xff]
    %v57 = vld [vmem:[#allocation4 + $0x20] sm:$0xff]
    %v58 = vld [vmem:[#allocation4 + $0x28] sm:$0xff]
    %v59 = vld [vmem:[#allocation4 + $0x30] sm:$0xff]
    %v60 = vld [vmem:[#allocation4 + $0x38] sm:$0xff]
    %v61 = vld [vmem:[#allocation4 + $0x40] sm:$0xff]
    %v62 = vld [vmem:[#allocation4 + $0x48] sm:$0xff]
    %v63 = vld [vmem:[#allocation4 + $0x50] sm:$0xff]
    %v64 = vld [vmem:[#allocation4 + $0x58] sm:$0xff]
    %v65 = vld [vmem:[#allocation4 + $0x60] sm:$0xff]
    %v66 = vld [vmem:[#allocation4 + $0x68] sm:$0xff]
    %v67 = vld [vmem:[#allocation4 + $0x70] sm:$0xff]
    %v68 = vld [vmem:[#allocation4 + $0x78] sm:$0xff]
    %v69 = vld [vmem:[#allocation4 + $0x80] sm:$0xff]
    %v70 = vld [vmem:[#allocation4 + $0x88] sm:$0xff]
    %v71 = vld [vmem:[#allocation4 + $0x90] sm:$0xff]
    %v72 = vld [vmem:[#allocation4 + $0x98] sm:$0xff]
    %v73 = vld [vmem:[#allocation4 + $0xa0] sm:$0xff]
    %v74 = vld [vmem:[#allocation4 + $0xa8] sm:$0xff]
    %v75 = vld [vmem:[#allocation4 + $0xb0] sm:$0xff]
    %v76 = vld [vmem:[#allocation4 + $0xb8] sm:$0xff]
    %v77 = vld [vmem:[#allocation4 + $0xc0] sm:$0xff]
    %v78 = vld [vmem:[#allocation4 + $0xc8] sm:$0xff]
    %v79 = vld [vmem:[#allocation4 + $0xd0] sm:$0xff]
    %v80 = vld [vmem:[#allocation4 + $0xd8] sm:$0xff]
    %v81 = vld [vmem:[#allocation4 + $0xe0] sm:$0xff]
    %v82 = vld [vmem:[#allocation4 + $0xe8] sm:$0xff]
    %v83 = vld [vmem:[#allocation4 + $0xf0] sm:$0xff]
    %v84 = vld [vmem:[#allocation4 + $0xf8] sm:$0xff]
    %v85 = vld [vmem:[#allocation4 + $0x100] sm:$0xff]
    %v86 = vld [vmem:[#allocation4 + $0x108] sm:$0xff]
    %v87 = vld [vmem:[#allocation4 + $0x110] sm:$0xff]
    %v88 = vld [vmem:[#allocation4 + $0x118] sm:$0xff]
    %v89 = vld [vmem:[#allocation4 + $0x120] sm:$0xff]
    %v90 = vld [vmem:[#allocation4 + $0x128] sm:$0xff]
    %v91 = vld [vmem:[#allocation4 + $0x130] sm:$0xff]
    %v92 = vld [vmem:[#allocation4 + $0x138] sm:$0xff]
    %v93 = vld [vmem:[#allocation4 + $0x140] sm:$0xff]
    %v94 = vld [vmem:[#allocation4 + $0x148] sm:$0xff]
    %v95 = vld [vmem:[#allocation4 + $0x150] sm:$0xff]
    %v96 = vld [vmem:[#allocation4 + $0x158] sm:$0xff]
    %v97 = vld [vmem:[#allocation4 + $0x160] sm:$0xff]
    %v98 = vld [vmem:[#allocation4 + $0x168] sm:$0xff]
    %v99 = vld [vmem:[#allocation4 + $0x170] sm:$0xff]
    %v100 = vld [vmem:[#allocation4 + $0x178] sm:$0xff]
    %v101 = vld [vmem:[#allocation4 + $0x180] sm:$0xff]
    %v102 = vld [vmem:[#allocation4 + $0x188] sm:$0xff]
    %v103 = vld [vmem:[#allocation4 + $0x190] sm:$0xff]
    %v104 = vld [vmem:[#allocation4 + $0x198] sm:$0xff]
    %v105 = vld [vmem:[#allocation4 + $0x1a0] sm:$0xff]
    %v106 = vld [vmem:[#allocation4 + $0x1a8] sm:$0xff]
    %v107 = vld [vmem:[#allocation4 + $0x1b0] sm:$0xff]
    %v108 = vld [vmem:[#allocation4 + $0x1b8] sm:$0xff]
    %v109 = vld [vmem:[#allocation4 + $0x1c0] sm:$0xff]
    %v110 = vld [vmem:[#allocation4 + $0x1c8] sm:$0xff]
    %v111 = vld [vmem:[#allocation4 + $0x1d0] sm:$0xff]
    %v112 = vld [vmem:[#allocation4 + $0x1d8] sm:$0xff]
    %v113 = vld [vmem:[#allocation4 + $0x1e0] sm:$0xff]
    %v114 = vld [vmem:[#allocation4 + $0x1e8] sm:$0xff]
    %v115 = vld [vmem:[#allocation4 + $0x1f0] sm:$0xff]
    %v116 = vld [vmem:[#allocation4 + $0x1f8] sm:$0xff]
    %v117 = vld [vmem:[#allocation4 + $0x200] sm:$0xff]
    %v118 = vld [vmem:[#allocation4 + $0x208] sm:$0xff]
    %v119 = vld [vmem:[#allocation4 + $0x210] sm:$0xff]
    %v120 = vld [vmem:[#allocation4 + $0x218] sm:$0xff]
    %v121 = vld [vmem:[#allocation4 + $0x220] sm:$0xff]
    %v122 = vld [vmem:[#allocation4 + $0x228] sm:$0xff]
    %v123 = vld [vmem:[#allocation4 + $0x230] sm:$0xff]
    %v124 = vld [vmem:[#allocation4 + $0x238] sm:$0xff]
    %v125 = vld [vmem:[#allocation4 + $0x240] sm:$0xff]
    %v126 = vld [vmem:[#allocation4 + $0x248] sm:$0xff]
    %v127 = vld [vmem:[#allocation4 + $0x250] sm:$0xff]
    %v128 = vld [vmem:[#allocation4 + $0x258] sm:$0xff]
    %v129 = vld [vmem:[#allocation4 + $0x260] sm:$0xff]
    %v130 = vld [vmem:[#allocation4 + $0x268] sm:$0xff]
    %v131 = vld [vmem:[#allocation4 + $0x270] sm:$0xff]
    %v132 = vld [vmem:[#allocation4 + $0x278] sm:$0xff]
    %v133 = vld [vmem:[#allocation4 + $0x280] sm:$0xff]
    %v134 = vld [vmem:[#allocation4 + $0x288] sm:$0xff]
    %v135 = vld [vmem:[#allocation4 + $0x290] sm:$0xff]
    %v136 = vld [vmem:[#allocation4 + $0x298] sm:$0xff]
    %v137 = vld [vmem:[#allocation4 + $0x2a0] sm:$0xff]
    %v138 = vld [vmem:[#allocation4 + $0x2a8] sm:$0xff]
    %v139 = vld [vmem:[#allocation4 + $0x2b0] sm:$0xff]
    %v140 = vld [vmem:[#allocation4 + $0x2b8] sm:$0xff]
    %v141 = vld [vmem:[#allocation4 + $0x2c0] sm:$0xff]
    %v142 = vld [vmem:[#allocation4 + $0x2c8] sm:$0xff]
    %v143 = vld [vmem:[#allocation4 + $0x2d0] sm:$0xff]
    %v144 = vld [vmem:[#allocation4 + $0x2d8] sm:$0xff]
    %v145 = vld [vmem:[#allocation4 + $0x2e0] sm:$0xff]
    %v146 = vld [vmem:[#allocation4 + $0x2e8] sm:$0xff]
    %v147 = vld [vmem:[#allocation4 + $0x2f0] sm:$0xff]
    %v148 = vld [vmem:[#allocation4 + $0x2f8] sm:$0xff]
    %v149 = vld [vmem:[#allocation4 + $0x300] sm:$0xff]
    %v150 = vld [vmem:[#allocation4 + $0x308] sm:$0xff]
    %v151 = vld [vmem:[#allocation4 + $0x310] sm:$0xff]
    %v152 = vld [vmem:[#allocation4 + $0x318] sm:$0xff]
    %v153 = vld [vmem:[#allocation4 + $0x320] sm:$0xff]
    %v154 = vld [vmem:[#allocation4 + $0x328] sm:$0xff]
    %v155 = vld [vmem:[#allocation4 + $0x330] sm:$0xff]
    %v156 = vld [vmem:[#allocation4 + $0x338] sm:$0xff]
    %v157 = vld [vmem:[#allocation4 + $0x340] sm:$0xff]
    %v158 = vld [vmem:[#allocation4 + $0x348] sm:$0xff]
    %v159 = vld [vmem:[#allocation4 + $0x350] sm:$0xff]
    %v160 = vld [vmem:[#allocation4 + $0x358] sm:$0xff]
    %v161 = vld [vmem:[#allocation4 + $0x360] sm:$0xff]
    %v162 = vld [vmem:[#allocation4 + $0x368] sm:$0xff]
    %v163 = vld [vmem:[#allocation4 + $0x370] sm:$0xff]
    %v164 = vld [vmem:[#allocation4 + $0x378] sm:$0xff]
    %v165 = vld [vmem:[#allocation4 + $0x380] sm:$0xff]
    %v166 = vld [vmem:[#allocation4 + $0x388] sm:$0xff]
    %v167 = vld [vmem:[#allocation4 + $0x390] sm:$0xff]
    %v168 = vld [vmem:[#allocation4 + $0x398] sm:$0xff]
    %v169 = vld [vmem:[#allocation4 + $0x3a0] sm:$0xff]
    %v170 = vld [vmem:[#allocation4 + $0x3a8] sm:$0xff]
    %v171 = vld [vmem:[#allocation4 + $0x3b0] sm:$0xff]
    %v172 = vld [vmem:[#allocation4 + $0x3b8] sm:$0xff]
    %v173 = vld [vmem:[#allocation4 + $0x3c0] sm:$0xff]
    %v174 = vld [vmem:[#allocation4 + $0x3c8] sm:$0xff]
    %v175 = vld [vmem:[#allocation4 + $0x3d0] sm:$0xff]
    %v176 = vld [vmem:[#allocation4 + $0x3d8] sm:$0xff]
    %v177 = vld [vmem:[#allocation4 + $0x3e0] sm:$0xff]
    %v178 = vld [vmem:[#allocation4 + $0x3e8] sm:$0xff]
    %v179 = vld [vmem:[#allocation4 + $0x3f0] sm:$0xff]
    %v180 = vld [vmem:[#allocation4 + $0x3f8] sm:$0xff]
    %v181 = vld [vmem:[#allocation4 + $0x400] sm:$0xff]
    %v182 = vld [vmem:[#allocation4 + $0x408] sm:$0xff]
    %v183 = vld [vmem:[#allocation4 + $0x410] sm:$0xff]
    %v184 = vld [vmem:[#allocation4 + $0x418] sm:$0xff]
    %v185 = vld [vmem:[#allocation4 + $0x420] sm:$0xff]
    %v186 = vld [vmem:[#allocation4 + $0x428] sm:$0xff]
    %v187 = vld [vmem:[#allocation4 + $0x430] sm:$0xff]
    %v188 = vld [vmem:[#allocation4 + $0x438] sm:$0xff]
    %v189 = vld [vmem:[#allocation4 + $0x440] sm:$0xff]
    %v190 = vld [vmem:[#allocation4 + $0x448] sm:$0xff]
    %v191 = vld [vmem:[#allocation4 + $0x450] sm:$0xff]
    %v192 = vld [vmem:[#allocation4 + $0x458] sm:$0xff]
    %v193 = vld [vmem:[#allocation4 + $0x460] sm:$0xff]
    %v194 = vld [vmem:[#allocation4 + $0x468] sm:$0xff]
    %v195 = vld [vmem:[#allocation4 + $0x470] sm:$0xff]
    %v196 = vld [vmem:[#allocation4 + $0x478] sm:$0xff]
    %v197 = vld [vmem:[#allocation4 + $0x480] sm:$0xff]
    %v198 = vld [vmem:[#allocation4 + $0x488] sm:$0xff]
    %v199 = vld [vmem:[#allocation4 + $0x490] sm:$0xff]
    %v200 = vld [vmem:[#allocation4 + $0x498] sm:$0xff]
    %v201 = vld [vmem:[#allocation4 + $0x4a0] sm:$0xff]
    %v202 = vld [vmem:[#allocation4 + $0x4a8] sm:$0xff]
    %v203 = vld [vmem:[#allocation4 + $0x4b0] sm:$0xff]
    %v204 = vld [vmem:[#allocation4 + $0x4b8] sm:$0xff]
    %v205 = vld [vmem:[#allocation4 + $0x4c0] sm:$0xff]
    %v206 = vld [vmem:[#allocation4 + $0x4c8] sm:$0xff]
    %v207 = vld [vmem:[#allocation4 + $0x4d0] sm:$0xff]
    %v208 = vld [vmem:[#allocation4 + $0x4d8] sm:$0xff]
    %v209 = vld [vmem:[#allocation4 + $0x4e0] sm:$0xff]
    %v210 = vld [vmem:[#allocation4 + $0x4e8] sm:$0xff]
    %v211 = vld [vmem:[#allocation4 + $0x4f0] sm:$0xff]
    %v212 = vld [vmem:[#allocation4 + $0x4f8] sm:$0xff]
    %v213 = vld [vmem:[#allocation4 + $0x500] sm:$0xff]
    %v214 = vld [vmem:[#allocation4 + $0x508] sm:$0xff]
    %v215 = vld [vmem:[#allocation4 + $0x510] sm:$0xff]
    %v216 = vld [vmem:[#allocation4 + $0x518] sm:$0xff]
    %v217 = vld [vmem:[#allocation4 + $0x520] sm:$0xff]
    %v218 = vld [vmem:[#allocation4 + $0x528] sm:$0xff]
    %v219 = vld [vmem:[#allocation4 + $0x530] sm:$0xff]
    %v220 = vld [vmem:[#allocation4 + $0x538] sm:$0xff]
    %v221 = vld [vmem:[#allocation4 + $0x540] sm:$0xff]
    %v222 = vld [vmem:[#allocation4 + $0x548] sm:$0xff]
    %v223 = vld [vmem:[#allocation4 + $0x550] sm:$0xff]
    %v224 = vld [vmem:[#allocation4 + $0x558] sm:$0xff]
    %v225 = vld [vmem:[#allocation4 + $0x560] sm:$0xff]
    %v226 = vld [vmem:[#allocation4 + $0x568] sm:$0xff]
    %v227 = vld [vmem:[#allocation4 + $0x570] sm:$0x11]
    %v228 = vld [vmem:[#allocation4 + $0x578] sm:$0x11]
    %v229 = vld [vmem:[#allocation4 + $0x580] sm:$0x11]
    %v230 = vld [vmem:[#allocation4 + $0x588] sm:$0x11]
    %v231 = vld [vmem:[#allocation4 + $0x590] sm:$0x11]
    %v232 = vld [vmem:[#allocation4 + $0x598] sm:$0x11]
    %v233 = vld [vmem:[#allocation4 + $0x5a0] sm:$0x11]
    %v234 = vld [vmem:[#allocation4 + $0x5a8] sm:$0x11]
    %v235 = vld [vmem:[#allocation4 + $0x5b0] sm:$0x11]
    %v236 = vld [vmem:[#allocation4 + $0x5b8] sm:$0x11]
    %v237 = vld [vmem:[#allocation4 + $0x5c0] sm:$0x11]
    %v238 = vld [vmem:[#allocation4 + $0x5c8] sm:$0x11]
    %v239 = vld [vmem:[#allocation4 + $0x5d0] sm:$0x11]
    %v240 = vld [vmem:[#allocation4 + $0x5d8] sm:$0x11]
    %v241 = vld [vmem:[#allocation4 + $0x5e0] sm:$0x11]
    %v242 = vld [vmem:[#allocation4 + $0x5e8] sm:$0x11]
    %v243 = vld [vmem:[#allocation4 + $0x5f0] sm:$0x11]
    %v244 = vld [vmem:[#allocation4 + $0x5f8] sm:$0x11]
    %v245 = vld [vmem:[#allocation4 + $0x600] sm:$0x11]
    %v246 = vld [vmem:[#allocation4 + $0x608] sm:$0x11]
    %v247 = vld [vmem:[#allocation4 + $0x610] sm:$0x11]
    %v248 = vld [vmem:[#allocation4 + $0x618] sm:$0x11]
    %v249 = vld [vmem:[#allocation4 + $0x620] sm:$0x11]
    %v250 = vld [vmem:[#allocation4 + $0x628] sm:$0x11]
    %v251 = vld [vmem:[#allocation4 + $0x630] sm:$0x11]
    %v252 = vld [vmem:[#allocation4 + $0x638] sm:$0x11]
    %v253 = vld [vmem:[#allocation4 + $0x640] sm:$0x11]
    %v254 = vld [vmem:[#allocation4 + $0x648] sm:$0x11]
    %v255 = vld [vmem:[#allocation4 + $0x650] sm:$0x11]
    %v256 = vld [vmem:[%s0] sm:$0xff]
    %v257 = vld [vmem:[%s0 + $0x8] sm:$0xff]
    %v258 = vld [vmem:[%s0 + $0x10] sm:$0xff]
    %v259 = vld [vmem:[%s0 + $0x18] sm:$0xff]
    %v260 = vld [vmem:[%s0 + $0x20] sm:$0xff]
    %v261 = vld [vmem:[%s0 + $0x28] sm:$0xff]
    %v262 = vld [vmem:[%s0 + $0x30] sm:$0xff]
    %v263 = vld [vmem:[%s0 + $0x38] sm:$0xff]
    %v264 = vld [vmem:[%s0 + $0x40] sm:$0xff]
    %v265 = vld [vmem:[%s0 + $0x48] sm:$0xff]
    %v266 = vld [vmem:[%s0 + $0x50] sm:$0xff]
    %v267 = vld [vmem:[%s0 + $0x58] sm:$0xff]
    %v268 = vld [vmem:[%s0 + $0x60] sm:$0xff]
    %v269 = vld [vmem:[%s0 + $0x68] sm:$0xff]
    %v270 = vld [vmem:[%s0 + $0x70] sm:$0xf]
    %v474 = vunpack.c.l.b16 %v53
    %v475 = vunpack.c.h.b16 %v53
    %v476 = vunpack.c.l.b16 %v54
    %v477 = vunpack.c.h.b16 %v54
    %v478 = vunpack.c.l.b16 %v55
    %v479 = vunpack.c.h.b16 %v55
    %v480 = vunpack.c.l.b16 %v56
    %v481 = vunpack.c.h.b16 %v56
    %v482 = vunpack.c.l.b16 %v57
    %v483 = vunpack.c.h.b16 %v57
    %v484 = vunpack.c.l.b16 %v58
    %v485 = vunpack.c.h.b16 %v58
    %v486 = vunpack.c.l.b16 %v59
    %v487 = vunpack.c.h.b16 %v59
    %v488 = vunpack.c.l.b16 %v60
    %v489 = vunpack.c.h.b16 %v60
    %v490 = vunpack.c.l.b16 %v61
    %v491 = vunpack.c.h.b16 %v61
    %v492 = vunpack.c.l.b16 %v62
    %v493 = vunpack.c.h.b16 %v62
    %v494 = vunpack.c.l.b16 %v63
    %v495 = vunpack.c.h.b16 %v63
    %v496 = vunpack.c.l.b16 %v64
    %v497 = vunpack.c.h.b16 %v64
    %v498 = vunpack.c.l.b16 %v65
    %v499 = vunpack.c.h.b16 %v65
    %v500 = vunpack.c.l.b16 %v66
    %v501 = vunpack.c.h.b16 %v66
    %v502 = vunpack.c.l.b16 %v67
    %v503 = vunpack.c.h.b16 %v67
    %v504 = vunpack.c.l.b16 %v68
    %v505 = vunpack.c.h.b16 %v68
    %v506 = vunpack.c.l.b16 %v69
    %v507 = vunpack.c.h.b16 %v69
    %v508 = vunpack.c.l.b16 %v70
    %v509 = vunpack.c.h.b16 %v70
    %v510 = vunpack.c.l.b16 %v71
    %v511 = vunpack.c.h.b16 %v71
    %v512 = vunpack.c.l.b16 %v72
    %v513 = vunpack.c.h.b16 %v72
    %v514 = vunpack.c.l.b16 %v73
    %v515 = vunpack.c.h.b16 %v73
    %v516 = vunpack.c.l.b16 %v74
    %v517 = vunpack.c.h.b16 %v74
    %v518 = vunpack.c.l.b16 %v75
    %v519 = vunpack.c.h.b16 %v75
    %v520 = vunpack.c.l.b16 %v76
    %v521 = vunpack.c.h.b16 %v76
    %v522 = vunpack.c.l.b16 %v77
    %v523 = vunpack.c.h.b16 %v77
    %v524 = vunpack.c.l.b16 %v78
    %v525 = vunpack.c.h.b16 %v78
    %v526 = vunpack.c.l.b16 %v79
    %v527 = vunpack.c.h.b16 %v79
    %v528 = vunpack.c.l.b16 %v80
    %v529 = vunpack.c.h.b16 %v80
    %v530 = vunpack.c.l.b16 %v81
    %v531 = vunpack.c.h.b16 %v81
    %v532 = vunpack.c.l.b16 %v82
    %v533 = vunpack.c.h.b16 %v82
    %v534 = vunpack.c.l.b16 %v83
    %v535 = vunpack.c.h.b16 %v83
    %v536 = vunpack.c.l.b16 %v84
    %v537 = vunpack.c.h.b16 %v84
    %v538 = vunpack.c.l.b16 %v85
    %v539 = vunpack.c.h.b16 %v85
    %v540 = vunpack.c.l.b16 %v86
    %v541 = vunpack.c.h.b16 %v86
    %v542 = vunpack.c.l.b16 %v87
    %v543 = vunpack.c.h.b16 %v87
    %v544 = vunpack.c.l.b16 %v88
    %v545 = vunpack.c.h.b16 %v88
    %v546 = vunpack.c.l.b16 %v89
    %v547 = vunpack.c.h.b16 %v89
    %v548 = vunpack.c.l.b16 %v90
    %v549 = vunpack.c.h.b16 %v90
    %v550 = vunpack.c.l.b16 %v91
    %v551 = vunpack.c.h.b16 %v91
    %v552 = vunpack.c.l.b16 %v92
    %v553 = vunpack.c.h.b16 %v92
    %v554 = vunpack.c.l.b16 %v93
    %v555 = vunpack.c.h.b16 %v93
    %v556 = vunpack.c.l.b16 %v94
    %v557 = vunpack.c.h.b16 %v94
    %v558 = vunpack.c.l.b16 %v95
    %v559 = vunpack.c.h.b16 %v95
    %v560 = vunpack.c.l.b16 %v96
    %v561 = vunpack.c.h.b16 %v96
    %v562 = vunpack.c.l.b16 %v97
    %v563 = vunpack.c.h.b16 %v97
    %v564 = vunpack.c.l.b16 %v98
    %v565 = vunpack.c.h.b16 %v98
    %v566 = vunpack.c.l.b16 %v99
    %v567 = vunpack.c.h.b16 %v99
    %v568 = vunpack.c.l.b16 %v100
    %v569 = vunpack.c.h.b16 %v100
    %v570 = vunpack.c.l.b16 %v101
    %v571 = vunpack.c.h.b16 %v101
    %v572 = vunpack.c.l.b16 %v102
    %v573 = vunpack.c.h.b16 %v102
    %v574 = vunpack.c.l.b16 %v103
    %v575 = vunpack.c.h.b16 %v103
    %v576 = vunpack.c.l.b16 %v104
    %v577 = vunpack.c.h.b16 %v104
    %v578 = vunpack.c.l.b16 %v105
    %v579 = vunpack.c.h.b16 %v105
    %v580 = vunpack.c.l.b16 %v106
    %v581 = vunpack.c.h.b16 %v106
    %v582 = vunpack.c.l.b16 %v107
    %v583 = vunpack.c.h.b16 %v107
    %v584 = vunpack.c.l.b16 %v108
    %v585 = vunpack.c.h.b16 %v108
    %v586 = vunpack.c.l.b16 %v109
    %v587 = vunpack.c.h.b16 %v109
    %v588 = vunpack.c.l.b16 %v110
    %v589 = vunpack.c.h.b16 %v110
    %v590 = vunpack.c.l.b16 %v111
    %v591 = vunpack.c.h.b16 %v111
    %v592 = vunpack.c.l.b16 %v112
    %v593 = vunpack.c.h.b16 %v112
    %v594 = vunpack.c.l.b16 %v113
    %v595 = vunpack.c.h.b16 %v113
    %v596 = vunpack.c.l.b16 %v114
    %v597 = vunpack.c.h.b16 %v114
    %v598 = vunpack.c.l.b16 %v115
    %v599 = vunpack.c.h.b16 %v115
    %v600 = vunpack.c.l.b16 %v116
    %v601 = vunpack.c.h.b16 %v116
    %v602 = vunpack.c.l.b16 %v117
    %v603 = vunpack.c.h.b16 %v117
    %v604 = vunpack.c.l.b16 %v118
    %v605 = vunpack.c.h.b16 %v118
    %v606 = vunpack.c.l.b16 %v119
    %v607 = vunpack.c.h.b16 %v119
    %v608 = vunpack.c.l.b16 %v120
    %v609 = vunpack.c.h.b16 %v120
    %v610 = vunpack.c.l.b16 %v121
    %v611 = vunpack.c.h.b16 %v121
    %v612 = vunpack.c.l.b16 %v122
    %v613 = vunpack.c.h.b16 %v122
    %v614 = vunpack.c.l.b16 %v123
    %v615 = vunpack.c.h.b16 %v123
    %v616 = vunpack.c.l.b16 %v124
    %v617 = vunpack.c.h.b16 %v124
    %v618 = vunpack.c.l.b16 %v125
    %v619 = vunpack.c.h.b16 %v125
    %v620 = vunpack.c.l.b16 %v126
    %v621 = vunpack.c.h.b16 %v126
    %v622 = vunpack.c.l.b16 %v127
    %v623 = vunpack.c.h.b16 %v127
    %v624 = vunpack.c.l.b16 %v128
    %v625 = vunpack.c.h.b16 %v128
    %v626 = vunpack.c.l.b16 %v129
    %v627 = vunpack.c.h.b16 %v129
    %v628 = vunpack.c.l.b16 %v130
    %v629 = vunpack.c.h.b16 %v130
    %v630 = vunpack.c.l.b16 %v131
    %v631 = vunpack.c.h.b16 %v131
    %v632 = vunpack.c.l.b16 %v132
    %v633 = vunpack.c.h.b16 %v132
    %v634 = vunpack.c.l.b16 %v133
    %v635 = vunpack.c.h.b16 %v133
    %v636 = vunpack.c.l.b16 %v134
    %v637 = vunpack.c.h.b16 %v134
    %v638 = vunpack.c.l.b16 %v135
    %v639 = vunpack.c.h.b16 %v135
    %v640 = vunpack.c.l.b16 %v136
    %v641 = vunpack.c.h.b16 %v136
    %v642 = vunpack.c.l.b16 %v137
    %v643 = vunpack.c.h.b16 %v137
    %v644 = vunpack.c.l.b16 %v138
    %v645 = vunpack.c.h.b16 %v138
    %v646 = vunpack.c.l.b16 %v139
    %v647 = vunpack.c.h.b16 %v139
    %v648 = vunpack.c.l.b16 %v140
    %v649 = vunpack.c.h.b16 %v140
    %v650 = vunpack.c.l.b16 %v141
    %v651 = vunpack.c.h.b16 %v141
    %v652 = vunpack.c.l.b16 %v142
    %v653 = vunpack.c.h.b16 %v142
    %v654 = vunpack.c.l.b16 %v143
    %v655 = vunpack.c.h.b16 %v143
    %v656 = vunpack.c.l.b16 %v144
    %v657 = vunpack.c.h.b16 %v144
    %v658 = vunpack.c.l.b16 %v145
    %v659 = vunpack.c.h.b16 %v145
    %v660 = vunpack.c.l.b16 %v146
    %v661 = vunpack.c.h.b16 %v146
    %v662 = vunpack.c.l.b16 %v147
    %v663 = vunpack.c.h.b16 %v147
    %v664 = vunpack.c.l.b16 %v148
    %v665 = vunpack.c.h.b16 %v148
    %v666 = vunpack.c.l.b16 %v149
    %v667 = vunpack.c.h.b16 %v149
    %v668 = vunpack.c.l.b16 %v150
    %v669 = vunpack.c.h.b16 %v150
    %v670 = vunpack.c.l.b16 %v151
    %v671 = vunpack.c.h.b16 %v151
    %v672 = vunpack.c.l.b16 %v152
    %v673 = vunpack.c.h.b16 %v152
    %v674 = vunpack.c.l.b16 %v153
    %v675 = vunpack.c.h.b16 %v153
    %v676 = vunpack.c.l.b16 %v154
    %v677 = vunpack.c.h.b16 %v154
    %v678 = vunpack.c.l.b16 %v155
    %v679 = vunpack.c.h.b16 %v155
    %v680 = vunpack.c.l.b16 %v156
    %v681 = vunpack.c.h.b16 %v156
    %v682 = vunpack.c.l.b16 %v157
    %v683 = vunpack.c.h.b16 %v157
    %v684 = vunpack.c.l.b16 %v158
    %v685 = vunpack.c.h.b16 %v158
    %v686 = vunpack.c.l.b16 %v159
    %v687 = vunpack.c.h.b16 %v159
    %v688 = vunpack.c.l.b16 %v160
    %v689 = vunpack.c.h.b16 %v160
    %v690 = vunpack.c.l.b16 %v161
    %v691 = vunpack.c.h.b16 %v161
    %v692 = vunpack.c.l.b16 %v162
    %v693 = vunpack.c.h.b16 %v162
    %v694 = vunpack.c.l.b16 %v163
    %v695 = vunpack.c.h.b16 %v163
    %v696 = vunpack.c.l.b16 %v164
    %v697 = vunpack.c.h.b16 %v164
    %v698 = vunpack.c.l.b16 %v165
    %v699 = vunpack.c.h.b16 %v165
    %v700 = vunpack.c.l.b16 %v166
    %v701 = vunpack.c.h.b16 %v166
    %v702 = vunpack.c.l.b16 %v167
    %v703 = vunpack.c.h.b16 %v167
    %v704 = vunpack.c.l.b16 %v168
    %v705 = vunpack.c.h.b16 %v168
    %v706 = vunpack.c.l.b16 %v169
    %v707 = vunpack.c.h.b16 %v169
    %v708 = vunpack.c.l.b16 %v170
    %v709 = vunpack.c.h.b16 %v170
    %v710 = vunpack.c.l.b16 %v171
    %v711 = vunpack.c.h.b16 %v171
    %v712 = vunpack.c.l.b16 %v172
    %v713 = vunpack.c.h.b16 %v172
    %v714 = vunpack.c.l.b16 %v173
    %v715 = vunpack.c.h.b16 %v173
    %v716 = vunpack.c.l.b16 %v174
    %v717 = vunpack.c.h.b16 %v174
    %v718 = vunpack.c.l.b16 %v175
    %v719 = vunpack.c.h.b16 %v175
    %v720 = vunpack.c.l.b16 %v176
    %v721 = vunpack.c.h.b16 %v176
    %v722 = vunpack.c.l.b16 %v177
    %v723 = vunpack.c.h.b16 %v177
    %v724 = vunpack.c.l.b16 %v178
    %v725 = vunpack.c.h.b16 %v178
    %v726 = vunpack.c.l.b16 %v179
    %v727 = vunpack.c.h.b16 %v179
    %v728 = vunpack.c.l.b16 %v180
    %v729 = vunpack.c.h.b16 %v180
    %v730 = vunpack.c.l.b16 %v181
    %v731 = vunpack.c.h.b16 %v181
    %v732 = vunpack.c.l.b16 %v182
    %v733 = vunpack.c.h.b16 %v182
    %v734 = vunpack.c.l.b16 %v183
    %v735 = vunpack.c.h.b16 %v183
    %v736 = vunpack.c.l.b16 %v184
    %v737 = vunpack.c.h.b16 %v184
    %v738 = vunpack.c.l.b16 %v185
    %v739 = vunpack.c.h.b16 %v185
    %v740 = vunpack.c.l.b16 %v186
    %v741 = vunpack.c.h.b16 %v186
    %v742 = vunpack.c.l.b16 %v187
    %v743 = vunpack.c.h.b16 %v187
    %v744 = vunpack.c.l.b16 %v188
    %v745 = vunpack.c.h.b16 %v188
    %v746 = vunpack.c.l.b16 %v189
    %v747 = vunpack.c.h.b16 %v189
    %v748 = vunpack.c.l.b16 %v190
    %v749 = vunpack.c.h.b16 %v190
    %v750 = vunpack.c.l.b16 %v191
    %v751 = vunpack.c.h.b16 %v191
    %v752 = vunpack.c.l.b16 %v192
    %v753 = vunpack.c.h.b16 %v192
    %v754 = vunpack.c.l.b16 %v193
    %v755 = vunpack.c.h.b16 %v193
    %v756 = vunpack.c.l.b16 %v194
    %v757 = vunpack.c.h.b16 %v194
    %v758 = vunpack.c.l.b16 %v195
    %v759 = vunpack.c.h.b16 %v195
    %v760 = vunpack.c.l.b16 %v196
    %v761 = vunpack.c.h.b16 %v196
    %v762 = vunpack.c.l.b16 %v197
    %v763 = vunpack.c.h.b16 %v197
    %v764 = vunpack.c.l.b16 %v198
    %v765 = vunpack.c.h.b16 %v198
    %v766 = vunpack.c.l.b16 %v199
    %v767 = vunpack.c.h.b16 %v199
    %v768 = vunpack.c.l.b16 %v200
    %v769 = vunpack.c.h.b16 %v200
    %v770 = vunpack.c.l.b16 %v201
    %v771 = vunpack.c.h.b16 %v201
    %v772 = vunpack.c.l.b16 %v202
    %v773 = vunpack.c.h.b16 %v202
    %v774 = vunpack.c.l.b16 %v203
    %v775 = vunpack.c.h.b16 %v203
    %v776 = vunpack.c.l.b16 %v204
    %v777 = vunpack.c.h.b16 %v204
    %v778 = vunpack.c.l.b16 %v205
    %v779 = vunpack.c.h.b16 %v205
    %v780 = vunpack.c.l.b16 %v206
    %v781 = vunpack.c.h.b16 %v206
    %v782 = vunpack.c.l.b16 %v207
    %v783 = vunpack.c.h.b16 %v207
    %v784 = vunpack.c.l.b16 %v208
    %v785 = vunpack.c.h.b16 %v208
    %v786 = vunpack.c.l.b16 %v209
    %v787 = vunpack.c.h.b16 %v209
    %v788 = vunpack.c.l.b16 %v210
    %v789 = vunpack.c.h.b16 %v210
    %v790 = vunpack.c.l.b16 %v211
    %v791 = vunpack.c.h.b16 %v211
    %v792 = vunpack.c.l.b16 %v212
    %v793 = vunpack.c.h.b16 %v212
    %v794 = vunpack.c.l.b16 %v213
    %v795 = vunpack.c.h.b16 %v213
    %v796 = vunpack.c.l.b16 %v214
    %v797 = vunpack.c.h.b16 %v214
    %v798 = vunpack.c.l.b16 %v215
    %v799 = vunpack.c.h.b16 %v215
    %v800 = vunpack.c.l.b16 %v216
    %v801 = vunpack.c.h.b16 %v216
    %v802 = vunpack.c.l.b16 %v217
    %v803 = vunpack.c.h.b16 %v217
    %v804 = vunpack.c.l.b16 %v218
    %v805 = vunpack.c.h.b16 %v218
    %v806 = vunpack.c.l.b16 %v219
    %v807 = vunpack.c.h.b16 %v219
    %v808 = vunpack.c.l.b16 %v220
    %v809 = vunpack.c.h.b16 %v220
    %v810 = vunpack.c.l.b16 %v221
    %v811 = vunpack.c.h.b16 %v221
    %v812 = vunpack.c.l.b16 %v222
    %v813 = vunpack.c.h.b16 %v222
    %v814 = vunpack.c.l.b16 %v223
    %v815 = vunpack.c.h.b16 %v223
    %v816 = vunpack.c.l.b16 %v224
    %v817 = vunpack.c.h.b16 %v224
    %v818 = vunpack.c.l.b16 %v225
    %v819 = vunpack.c.h.b16 %v225
    %v820 = vunpack.c.l.b16 %v226
    %v821 = vunpack.c.h.b16 %v226
    %v822 = vunpack.c.l.b16 %v227
    %v823 = vunpack.c.h.b16 %v227
    %v824 = vunpack.c.l.b16 %v228
    %v825 = vunpack.c.h.b16 %v228
    %v826 = vunpack.c.l.b16 %v229
    %v827 = vunpack.c.h.b16 %v229
    %v828 = vunpack.c.l.b16 %v230
    %v829 = vunpack.c.h.b16 %v230
    %v830 = vunpack.c.l.b16 %v231
    %v831 = vunpack.c.h.b16 %v231
    %v832 = vunpack.c.l.b16 %v232
    %v833 = vunpack.c.h.b16 %v232
    %v834 = vunpack.c.l.b16 %v233
    %v835 = vunpack.c.h.b16 %v233
    %v836 = vunpack.c.l.b16 %v234
    %v837 = vunpack.c.h.b16 %v234
    %v838 = vunpack.c.l.b16 %v235
    %v839 = vunpack.c.h.b16 %v235
    %v840 = vunpack.c.l.b16 %v236
    %v841 = vunpack.c.h.b16 %v236
    %v842 = vunpack.c.l.b16 %v237
    %v843 = vunpack.c.h.b16 %v237
    %v844 = vunpack.c.l.b16 %v238
    %v845 = vunpack.c.h.b16 %v238
    %v846 = vunpack.c.l.b16 %v239
    %v847 = vunpack.c.h.b16 %v239
    %v848 = vunpack.c.l.b16 %v240
    %v849 = vunpack.c.h.b16 %v240
    %v850 = vunpack.c.l.b16 %v241
    %v851 = vunpack.c.h.b16 %v241
    %v852 = vunpack.c.l.b16 %v242
    %v853 = vunpack.c.h.b16 %v242
    %v854 = vunpack.c.l.b16 %v243
    %v855 = vunpack.c.h.b16 %v243
    %v856 = vunpack.c.l.b16 %v244
    %v857 = vunpack.c.h.b16 %v244
    %v858 = vunpack.c.l.b16 %v245
    %v859 = vunpack.c.h.b16 %v245
    %v860 = vunpack.c.l.b16 %v246
    %v861 = vunpack.c.h.b16 %v246
    %v862 = vunpack.c.l.b16 %v247
    %v863 = vunpack.c.h.b16 %v247
    %v864 = vunpack.c.l.b16 %v248
    %v865 = vunpack.c.h.b16 %v248
    %v866 = vunpack.c.l.b16 %v249
    %v867 = vunpack.c.h.b16 %v249
    %v868 = vunpack.c.l.b16 %v250
    %v869 = vunpack.c.h.b16 %v250
    %v870 = vunpack.c.l.b16 %v251
    %v871 = vunpack.c.h.b16 %v251
    %v872 = vunpack.c.l.b16 %v252
    %v873 = vunpack.c.h.b16 %v252
    %v874 = vunpack.c.l.b16 %v253
    %v875 = vunpack.c.h.b16 %v253
    %v876 = vunpack.c.l.b16 %v254
    %v877 = vunpack.c.h.b16 %v254
    %v878 = vunpack.c.l.b16 %v255
    %v879 = vunpack.c.h.b16 %v255
    %v880 = vpack.c.b16 %v532, %v474
    %v881 = vpack.c.b16 %v533, %v475
    %v882 = vpack.c.b16 %v534, %v476
    %v883 = vpack.c.b16 %v535, %v477
    %v884 = vpack.c.b16 %v536, %v478
    %v885 = vpack.c.b16 %v537, %v479
    %v886 = vpack.c.b16 %v538, %v480
    %v887 = vpack.c.b16 %v539, %v481
    %v888 = vpack.c.b16 %v540, %v482
    %v889 = vpack.c.b16 %v541, %v483
    %v890 = vpack.c.b16 %v542, %v484
    %v891 = vpack.c.b16 %v543, %v485
    %v892 = vpack.c.b16 %v544, %v486
    %v893 = vpack.c.b16 %v545, %v487
    %v894 = vpack.c.b16 %v546, %v488
    %v895 = vpack.c.b16 %v547, %v489
    %v896 = vpack.c.b16 %v548, %v490
    %v897 = vpack.c.b16 %v549, %v491
    %v898 = vpack.c.b16 %v550, %v492
    %v899 = vpack.c.b16 %v551, %v493
    %v900 = vpack.c.b16 %v552, %v494
    %v901 = vpack.c.b16 %v553, %v495
    %v902 = vpack.c.b16 %v554, %v496
    %v903 = vpack.c.b16 %v555, %v497
    %v904 = vpack.c.b16 %v556, %v498
    %v905 = vpack.c.b16 %v557, %v499
    %v906 = vpack.c.b16 %v558, %v500
    %v907 = vpack.c.b16 %v559, %v501
    %v908 = vpack.c.b16 %v560, %v502
    %v909 = vpack.c.b16 %v561, %v503
    %v910 = vpack.c.b16 %v562, %v504
    %v911 = vpack.c.b16 %v563, %v505
    %v912 = vpack.c.b16 %v564, %v506
    %v913 = vpack.c.b16 %v565, %v507
    %v914 = vpack.c.b16 %v566, %v508
    %v915 = vpack.c.b16 %v567, %v509
    %v916 = vpack.c.b16 %v568, %v510
    %v917 = vpack.c.b16 %v569, %v511
    %v918 = vpack.c.b16 %v570, %v512
    %v919 = vpack.c.b16 %v571, %v513
    %v920 = vpack.c.b16 %v572, %v514
    %v921 = vpack.c.b16 %v573, %v515
    %v922 = vpack.c.b16 %v574, %v516
    %v923 = vpack.c.b16 %v575, %v517
    %v924 = vpack.c.b16 %v576, %v518
    %v925 = vpack.c.b16 %v577, %v519
    %v926 = vpack.c.b16 %v578, %v520
    %v927 = vpack.c.b16 %v579, %v521
    %v928 = vpack.c.b16 %v580, %v522
    %v929 = vpack.c.b16 %v581, %v523
    %v930 = vpack.c.b16 %v582, %v524
    %v931 = vpack.c.b16 %v583, %v525
    %v932 = vpack.c.b16 %v584, %v526
    %v933 = vpack.c.b16 %v585, %v527
    %v934 = vpack.c.b16 %v586, %v528
    %v935 = vpack.c.b16 %v587, %v529
    %v936 = vpack.c.b16 %v588, %v530
    %v937 = vpack.c.b16 %v589, %v531
    %v938 = vpack.c.b16 %v648, %v590
    %v939 = vpack.c.b16 %v649, %v591
    %v940 = vpack.c.b16 %v650, %v592
    %v941 = vpack.c.b16 %v651, %v593
    %v942 = vpack.c.b16 %v652, %v594
    %v943 = vpack.c.b16 %v653, %v595
    %v944 = vpack.c.b16 %v654, %v596
    %v945 = vpack.c.b16 %v655, %v597
    %v946 = vpack.c.b16 %v656, %v598
    %v947 = vpack.c.b16 %v657, %v599
    %v948 = vpack.c.b16 %v658, %v600
    %v949 = vpack.c.b16 %v659, %v601
    %v950 = vpack.c.b16 %v660, %v602
    %v951 = vpack.c.b16 %v661, %v603
    %v952 = vpack.c.b16 %v662, %v604
    %v953 = vpack.c.b16 %v663, %v605
    %v954 = vpack.c.b16 %v664, %v606
    %v955 = vpack.c.b16 %v665, %v607
    %v956 = vpack.c.b16 %v666, %v608
    %v957 = vpack.c.b16 %v667, %v609
    %v958 = vpack.c.b16 %v668, %v610
    %v959 = vpack.c.b16 %v669, %v611
    %v960 = vpack.c.b16 %v670, %v612
    %v961 = vpack.c.b16 %v671, %v613
    %v962 = vpack.c.b16 %v672, %v614
    %v963 = vpack.c.b16 %v673, %v615
    %v964 = vpack.c.b16 %v674, %v616
    %v965 = vpack.c.b16 %v675, %v617
    %v966 = vpack.c.b16 %v676, %v618
    %v967 = vpack.c.b16 %v677, %v619
    %v968 = vpack.c.b16 %v678, %v620
    %v969 = vpack.c.b16 %v679, %v621
    %v970 = vpack.c.b16 %v680, %v622
    %v971 = vpack.c.b16 %v681, %v623
    %v972 = vpack.c.b16 %v682, %v624
    %v973 = vpack.c.b16 %v683, %v625
    %v974 = vpack.c.b16 %v684, %v626
    %v975 = vpack.c.b16 %v685, %v627
    %v976 = vpack.c.b16 %v686, %v628
    %v977 = vpack.c.b16 %v687, %v629
    %v978 = vpack.c.b16 %v688, %v630
    %v979 = vpack.c.b16 %v689, %v631
    %v980 = vpack.c.b16 %v690, %v632
    %v981 = vpack.c.b16 %v691, %v633
    %v982 = vpack.c.b16 %v692, %v634
    %v983 = vpack.c.b16 %v693, %v635
    %v984 = vpack.c.b16 %v694, %v636
    %v985 = vpack.c.b16 %v695, %v637
    %v986 = vpack.c.b16 %v696, %v638
    %v987 = vpack.c.b16 %v697, %v639
    %v988 = vpack.c.b16 %v698, %v640
    %v989 = vpack.c.b16 %v699, %v641
    %v990 = vpack.c.b16 %v700, %v642
    %v991 = vpack.c.b16 %v701, %v643
    %v992 = vpack.c.b16 %v702, %v644
    %v993 = vpack.c.b16 %v703, %v645
    %v994 = vpack.c.b16 %v704, %v646
    %v995 = vpack.c.b16 %v705, %v647
    %v996 = vpack.c.b16 %v764, %v706
    %v997 = vpack.c.b16 %v765, %v707
    %v998 = vpack.c.b16 %v766, %v708
    %v999 = vpack.c.b16 %v767, %v709
    %v1000 = vpack.c.b16 %v768, %v710
    %v1001 = vpack.c.b16 %v769, %v711
    %v1002 = vpack.c.b16 %v770, %v712
    %v1003 = vpack.c.b16 %v771, %v713
    %v1004 = vpack.c.b16 %v772, %v714
    %v1005 = vpack.c.b16 %v773, %v715
    %v1006 = vpack.c.b16 %v774, %v716
    %v1007 = vpack.c.b16 %v775, %v717
    %v1008 = vpack.c.b16 %v776, %v718
    %v1009 = vpack.c.b16 %v777, %v719
    %v1010 = vpack.c.b16 %v778, %v720
    %v1011 = vpack.c.b16 %v779, %v721
    %v1012 = vpack.c.b16 %v780, %v722
    %v1013 = vpack.c.b16 %v781, %v723
    %v1014 = vpack.c.b16 %v782, %v724
    %v1015 = vpack.c.b16 %v783, %v725
    %v1016 = vpack.c.b16 %v784, %v726
    %v1017 = vpack.c.b16 %v785, %v727
    %v1018 = vpack.c.b16 %v786, %v728
    %v1019 = vpack.c.b16 %v787, %v729
    %v1020 = vpack.c.b16 %v788, %v730
    %v1021 = vpack.c.b16 %v789, %v731
    %v1022 = vpack.c.b16 %v790, %v732
    %v1023 = vpack.c.b16 %v791, %v733
    %v1024 = vpack.c.b16 %v792, %v734
    %v1025 = vpack.c.b16 %v793, %v735
    %v1026 = vpack.c.b16 %v794, %v736
    %v1027 = vpack.c.b16 %v795, %v737
    %v1028 = vpack.c.b16 %v796, %v738
    %v1029 = vpack.c.b16 %v797, %v739
    %v1030 = vpack.c.b16 %v798, %v740
    %v1031 = vpack.c.b16 %v799, %v741
    %v1032 = vpack.c.b16 %v800, %v742
    %v1033 = vpack.c.b16 %v801, %v743
    %v1034 = vpack.c.b16 %v802, %v744
    %v1035 = vpack.c.b16 %v803, %v745
    %v1036 = vpack.c.b16 %v804, %v746
    %v1037 = vpack.c.b16 %v805, %v747
    %v1038 = vpack.c.b16 %v806, %v748
    %v1039 = vpack.c.b16 %v807, %v749
    %v1040 = vpack.c.b16 %v808, %v750
    %v1041 = vpack.c.b16 %v809, %v751
    %v1042 = vpack.c.b16 %v810, %v752
    %v1043 = vpack.c.b16 %v811, %v753
    %v1044 = vpack.c.b16 %v812, %v754
    %v1045 = vpack.c.b16 %v813, %v755
    %v1046 = vpack.c.b16 %v814, %v756
    %v1047 = vpack.c.b16 %v815, %v757
    %v1048 = vpack.c.b16 %v816, %v758
    %v1049 = vpack.c.b16 %v817, %v759
    %v1050 = vpack.c.b16 %v818, %v760
    %v1051 = vpack.c.b16 %v819, %v761
    %v1052 = vpack.c.b16 %v820, %v762
    %v1053 = vpack.c.b16 %v821, %v763
    %v1054 = vpack.c.b16 %v822, %v822
    %v1055 = vpack.c.b16 %v823, %v823
    %v1056 = vpack.c.b16 %v824, %v824
    %v1057 = vpack.c.b16 %v825, %v825
    %v1058 = vpack.c.b16 %v826, %v826
    %v1059 = vpack.c.b16 %v827, %v827
    %v1060 = vpack.c.b16 %v828, %v828
    %v1061 = vpack.c.b16 %v829, %v829
    %v1062 = vpack.c.b16 %v830, %v830
    %v1063 = vpack.c.b16 %v831, %v831
    %v1064 = vpack.c.b16 %v832, %v832
    %v1065 = vpack.c.b16 %v833, %v833
    %v1066 = vpack.c.b16 %v834, %v834
    %v1067 = vpack.c.b16 %v835, %v835
    %v1068 = vpack.c.b16 %v836, %v836
    %v1069 = vpack.c.b16 %v837, %v837
    %v1070 = vpack.c.b16 %v838, %v838
    %v1071 = vpack.c.b16 %v839, %v839
    %v1072 = vpack.c.b16 %v840, %v840
    %v1073 = vpack.c.b16 %v841, %v841
    %v1074 = vpack.c.b16 %v842, %v842
    %v1075 = vpack.c.b16 %v843, %v843
    %v1076 = vpack.c.b16 %v844, %v844
    %v1077 = vpack.c.b16 %v845, %v845
    %v1078 = vpack.c.b16 %v846, %v846
    %v1079 = vpack.c.b16 %v847, %v847
    %v1080 = vpack.c.b16 %v848, %v848
    %v1081 = vpack.c.b16 %v849, %v849
    %v1082 = vpack.c.b16 %v850, %v850
    %v1083 = vpack.c.b16 %v851, %v851
    %v1084 = vpack.c.b16 %v852, %v852
    %v1085 = vpack.c.b16 %v853, %v853
    %v1086 = vpack.c.b16 %v854, %v854
    %v1087 = vpack.c.b16 %v855, %v855
    %v1088 = vpack.c.b16 %v856, %v856
    %v1089 = vpack.c.b16 %v857, %v857
    %v1090 = vpack.c.b16 %v858, %v858
    %v1091 = vpack.c.b16 %v859, %v859
    %v1092 = vpack.c.b16 %v860, %v860
    %v1093 = vpack.c.b16 %v861, %v861
    %v1094 = vpack.c.b16 %v862, %v862
    %v1095 = vpack.c.b16 %v863, %v863
    %v1096 = vpack.c.b16 %v864, %v864
    %v1097 = vpack.c.b16 %v865, %v865
    %v1098 = vpack.c.b16 %v866, %v866
    %v1099 = vpack.c.b16 %v867, %v867
    %v1100 = vpack.c.b16 %v868, %v868
    %v1101 = vpack.c.b16 %v869, %v869
    %v1102 = vpack.c.b16 %v870, %v870
    %v1103 = vpack.c.b16 %v871, %v871
    %v1104 = vpack.c.b16 %v872, %v872
    %v1105 = vpack.c.b16 %v873, %v873
    %v1106 = vpack.c.b16 %v874, %v874
    %v1107 = vpack.c.b16 %v875, %v875
    %v1108 = vpack.c.b16 %v876, %v876
    %v1109 = vpack.c.b16 %v877, %v877
    %v1110 = vpack.c.b16 %v878, %v878
    %v1111 = vpack.c.b16 %v879, %v879
    %v1359 = vcombine.high %v256, %v256
    %v1361 = vunpack.c.l.s4 1983009808
    %v1362 = vunpack.c.0.s8 %v1361
    %v1363 = vlaneseq
    %v1364 = vshrl.u32 %v1363, 7
    %v1365 = vsub.s32 %v1362, %v1364
    %v1366 = vrot.slane %v256, %v1365
    %v1368 = vunpack.c.l.s4 1983009808
    %v1369 = vunpack.c.0.s8 %v1368
    %v1370 = vlaneseq
    %v1371 = vshrl.u32 %v1370, 7
    %v1372 = vsub.s32 %v1369, %v1371
    %v1373 = vrot.slane %v1359, %v1372
    %v1374 = vcombine.high %v1366, %v1366
    %v1375 = vcombine.high %v1373, %v1373
    %v1376 = vcombine.high %v257, %v257
    %v1378 = vunpack.c.l.s4 1983009808
    %v1379 = vunpack.c.0.s8 %v1378
    %v1380 = vlaneseq
    %v1381 = vshrl.u32 %v1380, 7
    %v1382 = vsub.s32 %v1379, %v1381
    %v1383 = vrot.slane %v257, %v1382
    %v1385 = vunpack.c.l.s4 1983009808
    %v1386 = vunpack.c.0.s8 %v1385
    %v1387 = vlaneseq
    %v1388 = vshrl.u32 %v1387, 7
    %v1389 = vsub.s32 %v1386, %v1388
    %v1390 = vrot.slane %v1376, %v1389
    %v1391 = vcombine.high %v1383, %v1383
    %v1392 = vcombine.high %v1390, %v1390
    %v1393 = vcombine.high %v258, %v258
    %v1395 = vunpack.c.l.s4 1983009808
    %v1396 = vunpack.c.0.s8 %v1395
    %v1397 = vlaneseq
    %v1398 = vshrl.u32 %v1397, 7
    %v1399 = vsub.s32 %v1396, %v1398
    %v1400 = vrot.slane %v258, %v1399
    %v1402 = vunpack.c.l.s4 1983009808
    %v1403 = vunpack.c.0.s8 %v1402
    %v1404 = vlaneseq
    %v1405 = vshrl.u32 %v1404, 7
    %v1406 = vsub.s32 %v1403, %v1405
    %v1407 = vrot.slane %v1393, %v1406
    %v1408 = vcombine.high %v1400, %v1400
    %v1409 = vcombine.high %v1407, %v1407
    %v1410 = vcombine.high %v259, %v259
    %v1412 = vunpack.c.l.s4 1983009808
    %v1413 = vunpack.c.0.s8 %v1412
    %v1414 = vlaneseq
    %v1415 = vshrl.u32 %v1414, 7
    %v1416 = vsub.s32 %v1413, %v1415
    %v1417 = vrot.slane %v259, %v1416
    %v1419 = vunpack.c.l.s4 1983009808
    %v1420 = vunpack.c.0.s8 %v1419
    %v1421 = vlaneseq
    %v1422 = vshrl.u32 %v1421, 7
    %v1423 = vsub.s32 %v1420, %v1422
    %v1424 = vrot.slane %v1410, %v1423
    %v1425 = vcombine.high %v1417, %v1417
    %v1426 = vcombine.high %v1424, %v1424
    %v1427 = vcombine.high %v260, %v260
    %v1429 = vunpack.c.l.s4 1983009808
    %v1430 = vunpack.c.0.s8 %v1429
    %v1431 = vlaneseq
    %v1432 = vshrl.u32 %v1431, 7
    %v1433 = vsub.s32 %v1430, %v1432
    %v1434 = vrot.slane %v260, %v1433
    %v1436 = vunpack.c.l.s4 1983009808
    %v1437 = vunpack.c.0.s8 %v1436
    %v1438 = vlaneseq
    %v1439 = vshrl.u32 %v1438, 7
    %v1440 = vsub.s32 %v1437, %v1439
    %v1441 = vrot.slane %v1427, %v1440
    %v1442 = vcombine.high %v1434, %v1434
    %v1443 = vcombine.high %v1441, %v1441
    %v1444 = vcombine.high %v261, %v261
    %v1446 = vunpack.c.l.s4 1983009808
    %v1447 = vunpack.c.0.s8 %v1446
    %v1448 = vlaneseq
    %v1449 = vshrl.u32 %v1448, 7
    %v1450 = vsub.s32 %v1447, %v1449
    %v1451 = vrot.slane %v261, %v1450
    %v1453 = vunpack.c.l.s4 1983009808
    %v1454 = vunpack.c.0.s8 %v1453
    %v1455 = vlaneseq
    %v1456 = vshrl.u32 %v1455, 7
    %v1457 = vsub.s32 %v1454, %v1456
    %v1458 = vrot.slane %v1444, %v1457
    %v1459 = vcombine.high %v1451, %v1451
    %v1460 = vcombine.high %v1458, %v1458
    %v1461 = vcombine.high %v262, %v262
    %v1463 = vunpack.c.l.s4 1983009808
    %v1464 = vunpack.c.0.s8 %v1463
    %v1465 = vlaneseq
    %v1466 = vshrl.u32 %v1465, 7
    %v1467 = vsub.s32 %v1464, %v1466
    %v1468 = vrot.slane %v262, %v1467
    %v1470 = vunpack.c.l.s4 1983009808
    %v1471 = vunpack.c.0.s8 %v1470
    %v1472 = vlaneseq
    %v1473 = vshrl.u32 %v1472, 7
    %v1474 = vsub.s32 %v1471, %v1473
    %v1475 = vrot.slane %v1461, %v1474
    %v1476 = vcombine.high %v1468, %v1468
    %v1477 = vcombine.high %v1475, %v1475
    %v1478 = vcombine.high %v263, %v263
    %v1480 = vunpack.c.l.s4 1983009808
    %v1481 = vunpack.c.0.s8 %v1480
    %v1482 = vlaneseq
    %v1483 = vshrl.u32 %v1482, 7
    %v1484 = vsub.s32 %v1481, %v1483
    %v1485 = vrot.slane %v263, %v1484
    %v1487 = vunpack.c.l.s4 1983009808
    %v1488 = vunpack.c.0.s8 %v1487
    %v1489 = vlaneseq
    %v1490 = vshrl.u32 %v1489, 7
    %v1491 = vsub.s32 %v1488, %v1490
    %v1492 = vrot.slane %v1478, %v1491
    %v1493 = vcombine.high %v1485, %v1485
    %v1494 = vcombine.high %v1492, %v1492
    %v1495 = vcombine.high %v264, %v264
    %v1497 = vunpack.c.l.s4 1983009808
    %v1498 = vunpack.c.0.s8 %v1497
    %v1499 = vlaneseq
    %v1500 = vshrl.u32 %v1499, 7
    %v1501 = vsub.s32 %v1498, %v1500
    %v1502 = vrot.slane %v264, %v1501
    %v1504 = vunpack.c.l.s4 1983009808
    %v1505 = vunpack.c.0.s8 %v1504
    %v1506 = vlaneseq
    %v1507 = vshrl.u32 %v1506, 7
    %v1508 = vsub.s32 %v1505, %v1507
    %v1509 = vrot.slane %v1495, %v1508
    %v1510 = vcombine.high %v1502, %v1502
    %v1511 = vcombine.high %v1509, %v1509
    %v1512 = vcombine.high %v265, %v265
    %v1514 = vunpack.c.l.s4 1983009808
    %v1515 = vunpack.c.0.s8 %v1514
    %v1516 = vlaneseq
    %v1517 = vshrl.u32 %v1516, 7
    %v1518 = vsub.s32 %v1515, %v1517
    %v1519 = vrot.slane %v265, %v1518
    %v1521 = vunpack.c.l.s4 1983009808
    %v1522 = vunpack.c.0.s8 %v1521
    %v1523 = vlaneseq
    %v1524 = vshrl.u32 %v1523, 7
    %v1525 = vsub.s32 %v1522, %v1524
    %v1526 = vrot.slane %v1512, %v1525
    %v1527 = vcombine.high %v1519, %v1519
    %v1528 = vcombine.high %v1526, %v1526
    %v1529 = vcombine.high %v266, %v266
    %v1531 = vunpack.c.l.s4 1983009808
    %v1532 = vunpack.c.0.s8 %v1531
    %v1533 = vlaneseq
    %v1534 = vshrl.u32 %v1533, 7
    %v1535 = vsub.s32 %v1532, %v1534
    %v1536 = vrot.slane %v266, %v1535
    %v1538 = vunpack.c.l.s4 1983009808
    %v1539 = vunpack.c.0.s8 %v1538
    %v1540 = vlaneseq
    %v1541 = vshrl.u32 %v1540, 7
    %v1542 = vsub.s32 %v1539, %v1541
    %v1543 = vrot.slane %v1529, %v1542
    %v1544 = vcombine.high %v1536, %v1536
    %v1545 = vcombine.high %v1543, %v1543
    %v1546 = vcombine.high %v267, %v267
    %v1548 = vunpack.c.l.s4 1983009808
    %v1549 = vunpack.c.0.s8 %v1548
    %v1550 = vlaneseq
    %v1551 = vshrl.u32 %v1550, 7
    %v1552 = vsub.s32 %v1549, %v1551
    %v1553 = vrot.slane %v267, %v1552
    %v1555 = vunpack.c.l.s4 1983009808
    %v1556 = vunpack.c.0.s8 %v1555
    %v1557 = vlaneseq
    %v1558 = vshrl.u32 %v1557, 7
    %v1559 = vsub.s32 %v1556, %v1558
    %v1560 = vrot.slane %v1546, %v1559
    %v1561 = vcombine.high %v1553, %v1553
    %v1562 = vcombine.high %v1560, %v1560
    %v1563 = vcombine.high %v268, %v268
    %v1565 = vunpack.c.l.s4 1983009808
    %v1566 = vunpack.c.0.s8 %v1565
    %v1567 = vlaneseq
    %v1568 = vshrl.u32 %v1567, 7
    %v1569 = vsub.s32 %v1566, %v1568
    %v1570 = vrot.slane %v268, %v1569
    %v1572 = vunpack.c.l.s4 1983009808
    %v1573 = vunpack.c.0.s8 %v1572
    %v1574 = vlaneseq
    %v1575 = vshrl.u32 %v1574, 7
    %v1576 = vsub.s32 %v1573, %v1575
    %v1577 = vrot.slane %v1563, %v1576
    %v1578 = vcombine.high %v1570, %v1570
    %v1579 = vcombine.high %v1577, %v1577
    %v1580 = vcombine.high %v269, %v269
    %v1582 = vunpack.c.l.s4 1983009808
    %v1583 = vunpack.c.0.s8 %v1582
    %v1584 = vlaneseq
    %v1585 = vshrl.u32 %v1584, 7
    %v1586 = vsub.s32 %v1583, %v1585
    %v1587 = vrot.slane %v269, %v1586
    %v1589 = vunpack.c.l.s4 1983009808
    %v1590 = vunpack.c.0.s8 %v1589
    %v1591 = vlaneseq
    %v1592 = vshrl.u32 %v1591, 7
    %v1593 = vsub.s32 %v1590, %v1592
    %v1594 = vrot.slane %v1580, %v1593
    %v1595 = vcombine.high %v1587, %v1587
    %v1596 = vcombine.high %v1594, %v1594
    %v1598 = vunpack.c.l.s4 1983009808
    %v1599 = vunpack.c.0.s8 %v1598
    %v1600 = vlaneseq
    %v1601 = vshrl.u32 %v1600, 7
    %v1602 = vsub.s32 %v1599, %v1601
    %v1603 = vrot.slane %v270, %v1602
    %v1604 = vcombine.high %v1603, %v1603
    %1663 = vmatprep.subr.bf16.mxu0 0
    %1664 = vmatpush1.bf16.xpose.msra.mxu0 0
    %1665 = vmatprep.subr.bf16.mxu0 0
    %1666 = vmatpush1.bf16.xpose.msra.mxu0 0
    %1667 = vmatprep.subr.bf16.mxu0 0
    %1668 = vmatpush1.bf16.xpose.msra.mxu0 0
    %1669 = vmatprep.subr.bf16.mxu0 0
    %1670 = vmatpush1.bf16.xpose.msra.mxu0 0
    %1671 = vmatprep.subr.bf16.mxu0 0
    %1672 = vmatpush1.bf16.xpose.msra.mxu0 0
    %1673 = vmatprep.subr.bf16.mxu0 0
    %1674 = vmatpush1.bf16.xpose.msra.mxu0 0
    %1675 = vmatprep.subr.bf16.mxu0 0
    %1676 = vmatpush1.bf16.xpose.msra.mxu0 0
    %1677 = vmatprep.subr.bf16.mxu0 %v1374
    %1678 = vmatpush1.bf16.xpose.msra.mxu0 %v1366
    %1679 = vmatprep.subr.bf16.mxu0 0
    %1680 = vmatpush2.bf16.xpose.msra.mxu0 0
    %1681 = vmatprep.subr.bf16.mxu0 0
    %1682 = vmatpush2.bf16.xpose.msra.mxu0 0
    %1683 = vmatprep.subr.bf16.mxu0 0
    %1684 = vmatpush2.bf16.xpose.msra.mxu0 0
    %1685 = vmatprep.subr.bf16.mxu0 0
    %1686 = vmatpush2.bf16.xpose.msra.mxu0 0
    %1687 = vmatprep.subr.bf16.mxu0 0
    %1688 = vmatpush2.bf16.xpose.msra.mxu0 0
    %1689 = vmatprep.subr.bf16.mxu0 0
    %1690 = vmatpush2.bf16.xpose.msra.mxu0 0
    %1691 = vmatprep.subr.bf16.mxu0 0
    %1692 = vmatpush2.bf16.xpose.msra.mxu0 0
    %1693 = vmatprep.subr.bf16.mxu0 0
    %1694 = vmatpush2.bf16.xpose.msra.mxu0 0
    %1695 = vmatprep.mubr.bf16.mxu0 %v881
    %1696 = vmatmul.mubr.bf16.gmra.mxu0 %v880
    %v1697 = vpop.f32.mrf.mxu0
    %v1698 = vadd.f32 0.0, %v1697
    %v1699 = vpop.f32.mrf.mxu0
    %v1700 = vpop.f32.mrf.mxu0
    %v1701 = vadd.f32 0.0, %v1700
    %v1702 = vpop.f32.mrf.mxu0
    %1703 = vmatprep.mubr.bf16.mxu0 %v939
    %1704 = vmatmul.mubr.bf16.gmra.mxu0 %v938
    %v1705 = vpop.f32.mrf.mxu0
    %v1706 = vadd.f32 0.0, %v1705
    %v1707 = vpop.f32.mrf.mxu0
    %v1708 = vpop.f32.mrf.mxu0
    %v1709 = vadd.f32 0.0, %v1708
    %v1710 = vpop.f32.mrf.mxu0
    %1711 = vmatprep.mubr.bf16.mxu0 %v997
    %1712 = vmatmul.mubr.bf16.gmra.mxu0 %v996
    %v1713 = vpop.f32.mrf.mxu0
    %v1714 = vadd.f32 0.0, %v1713
    %v1715 = vpop.f32.mrf.mxu0
    %v1716 = vpop.f32.mrf.mxu0
    %v1717 = vadd.f32 0.0, %v1716
    %v1718 = vpop.f32.mrf.mxu0
    %1719 = vmatprep.mubr.bf16.mxu0 %v1055
    %1720 = vmatmul.mubr.bf16.gmra.mxu0 %v1054
    %v1721 = vpop.f32.mrf.mxu0
    %v1722 = vadd.f32 0.0, %v1721
    %v1723 = vpop.f32.mrf.mxu0
    %v1724 = vpop.f32.mrf.mxu0
    %v1725 = vpop.f32.mrf.mxu0
    %1726 = vdwg.mxu0
    %1727 = vmatprep.subr.bf16.mxu0 0
    %1728 = vmatpush1.bf16.xpose.msra.mxu0 0
    %1729 = vmatprep.subr.bf16.mxu0 0
    %1730 = vmatpush1.bf16.xpose.msra.mxu0 0
    %1731 = vmatprep.subr.bf16.mxu0 0
    %1732 = vmatpush1.bf16.xpose.msra.mxu0 0
    %1733 = vmatprep.subr.bf16.mxu0 0
    %1734 = vmatpush1.bf16.xpose.msra.mxu0 0
    %1735 = vmatprep.subr.bf16.mxu0 0
    %1736 = vmatpush1.bf16.xpose.msra.mxu0 0
    %1737 = vmatprep.subr.bf16.mxu0 0
    %1738 = vmatpush1.bf16.xpose.msra.mxu0 0
    %1739 = vmatprep.subr.bf16.mxu0 0
    %1740 = vmatpush1.bf16.xpose.msra.mxu0 0
    %1741 = vmatprep.subr.bf16.mxu0 %v1375
    %1742 = vmatpush1.bf16.xpose.msra.mxu0 %v1373
    %1743 = vmatprep.subr.bf16.mxu0 0
    %1744 = vmatpush2.bf16.xpose.msra.mxu0 0
    %1745 = vmatprep.subr.bf16.mxu0 0
    %1746 = vmatpush2.bf16.xpose.msra.mxu0 0
    %1747 = vmatprep.subr.bf16.mxu0 0
    %1748 = vmatpush2.bf16.xpose.msra.mxu0 0
    %1749 = vmatprep.subr.bf16.mxu0 0
    %1750 = vmatpush2.bf16.xpose.msra.mxu0 0
    %1751 = vmatprep.subr.bf16.mxu0 0
    %1752 = vmatpush2.bf16.xpose.msra.mxu0 0
    %1753 = vmatprep.subr.bf16.mxu0 0
    %1754 = vmatpush2.bf16.xpose.msra.mxu0 0
    %1755 = vmatprep.subr.bf16.mxu0 0
    %1756 = vmatpush2.bf16.xpose.msra.mxu0 0
    %1757 = vmatprep.subr.bf16.mxu0 0
    %1758 = vmatpush2.bf16.xpose.msra.mxu0 0
    %1759 = vmatprep.mubr.bf16.mxu0 %v883
    %1760 = vmatmul.mubr.bf16.gmra.mxu0 %v882
    %v1761 = vpop.f32.mrf.mxu0
    %v1762 = vadd.f32 %v1698, %v1761
    %v1763 = vpop.f32.mrf.mxu0
    %v1764 = vpop.f32.mrf.mxu0
    %v1765 = vadd.f32 %v1701, %v1764
    %v1766 = vpop.f32.mrf.mxu0
    %1767 = vmatprep.mubr.bf16.mxu0 %v941
    %1768 = vmatmul.mubr.bf16.gmra.mxu0 %v940
    %v1769 = vpop.f32.mrf.mxu0
    %v1770 = vadd.f32 %v1706, %v1769
    %v1771 = vpop.f32.mrf.mxu0
    %v1772 = vpop.f32.mrf.mxu0
    %v1773 = vadd.f32 %v1709, %v1772
    %v1774 = vpop.f32.mrf.mxu0
    %1775 = vmatprep.mubr.bf16.mxu0 %v999
    %1776 = vmatmul.mubr.bf16.gmra.mxu0 %v998
    %v1777 = vpop.f32.mrf.mxu0
    %v1778 = vadd.f32 %v1714, %v1777
    %v1779 = vpop.f32.mrf.mxu0
    %v1780 = vpop.f32.mrf.mxu0
    %v1781 = vadd.f32 %v1717, %v1780
    %v1782 = vpop.f32.mrf.mxu0
    %1783 = vmatprep.mubr.bf16.mxu0 %v1057
    %1784 = vmatmul.mubr.bf16.gmra.mxu0 %v1056
    %v1785 = vpop.f32.mrf.mxu0
    %v1786 = vadd.f32 %v1722, %v1785
    %v1787 = vpop.f32.mrf.mxu0
    %v1788 = vpop.f32.mrf.mxu0
    %v1789 = vpop.f32.mrf.mxu0
    %1790 = vdwg.mxu0
    %1791 = vmatprep.subr.bf16.mxu0 0
    %1792 = vmatpush1.bf16.xpose.msra.mxu0 0
    %1793 = vmatprep.subr.bf16.mxu0 0
    %1794 = vmatpush1.bf16.xpose.msra.mxu0 0
    %1795 = vmatprep.subr.bf16.mxu0 0
    %1796 = vmatpush1.bf16.xpose.msra.mxu0 0
    %1797 = vmatprep.subr.bf16.mxu0 0
    %1798 = vmatpush1.bf16.xpose.msra.mxu0 0
    %1799 = vmatprep.subr.bf16.mxu0 0
    %1800 = vmatpush1.bf16.xpose.msra.mxu0 0
    %1801 = vmatprep.subr.bf16.mxu0 0
    %1802 = vmatpush1.bf16.xpose.msra.mxu0 0
    %1803 = vmatprep.subr.bf16.mxu0 0
    %1804 = vmatpush1.bf16.xpose.msra.mxu0 0
    %1805 = vmatprep.subr.bf16.mxu0 %v1391
    %1806 = vmatpush1.bf16.xpose.msra.mxu0 %v1383
    %1807 = vmatprep.subr.bf16.mxu0 0
    %1808 = vmatpush2.bf16.xpose.msra.mxu0 0
    %1809 = vmatprep.subr.bf16.mxu0 0
    %1810 = vmatpush2.bf16.xpose.msra.mxu0 0
    %1811 = vmatprep.subr.bf16.mxu0 0
    %1812 = vmatpush2.bf16.xpose.msra.mxu0 0
    %1813 = vmatprep.subr.bf16.mxu0 0
    %1814 = vmatpush2.bf16.xpose.msra.mxu0 0
    %1815 = vmatprep.subr.bf16.mxu0 0
    %1816 = vmatpush2.bf16.xpose.msra.mxu0 0
    %1817 = vmatprep.subr.bf16.mxu0 0
    %1818 = vmatpush2.bf16.xpose.msra.mxu0 0
    %1819 = vmatprep.subr.bf16.mxu0 0
    %1820 = vmatpush2.bf16.xpose.msra.mxu0 0
    %1821 = vmatprep.subr.bf16.mxu0 0
    %1822 = vmatpush2.bf16.xpose.msra.mxu0 0
    %1823 = vmatprep.mubr.bf16.mxu0 %v885
    %1824 = vmatmul.mubr.bf16.gmra.mxu0 %v884
    %v1825 = vpop.f32.mrf.mxu0
    %v1826 = vadd.f32 %v1762, %v1825
    %v1827 = vpop.f32.mrf.mxu0
    %v1828 = vpop.f32.mrf.mxu0
    %v1829 = vadd.f32 %v1765, %v1828
    %v1830 = vpop.f32.mrf.mxu0
    %1831 = vmatprep.mubr.bf16.mxu0 %v943
    %1832 = vmatmul.mubr.bf16.gmra.mxu0 %v942
    %v1833 = vpop.f32.mrf.mxu0
    %v1834 = vadd.f32 %v1770, %v1833
    %v1835 = vpop.f32.mrf.mxu0
    %v1836 = vpop.f32.mrf.mxu0
    %v1837 = vadd.f32 %v1773, %v1836
    %v1838 = vpop.f32.mrf.mxu0
    %1839 = vmatprep.mubr.bf16.mxu0 %v1001
    %1840 = vmatmul.mubr.bf16.gmra.mxu0 %v1000
    %v1841 = vpop.f32.mrf.mxu0
    %v1842 = vadd.f32 %v1778, %v1841
    %v1843 = vpop.f32.mrf.mxu0
    %v1844 = vpop.f32.mrf.mxu0
    %v1845 = vadd.f32 %v1781, %v1844
    %v1846 = vpop.f32.mrf.mxu0
    %1847 = vmatprep.mubr.bf16.mxu0 %v1059
    %1848 = vmatmul.mubr.bf16.gmra.mxu0 %v1058
    %v1849 = vpop.f32.mrf.mxu0
    %v1850 = vadd.f32 %v1786, %v1849
    %v1851 = vpop.f32.mrf.mxu0
    %v1852 = vpop.f32.mrf.mxu0
    %v1853 = vpop.f32.mrf.mxu0
    %1854 = vdwg.mxu0
    %1855 = vmatprep.subr.bf16.mxu0 0
    %1856 = vmatpush1.bf16.xpose.msra.mxu0 0
    %1857 = vmatprep.subr.bf16.mxu0 0
    %1858 = vmatpush1.bf16.xpose.msra.mxu0 0
    %1859 = vmatprep.subr.bf16.mxu0 0
    %1860 = vmatpush1.bf16.xpose.msra.mxu0 0
    %1861 = vmatprep.subr.bf16.mxu0 0
    %1862 = vmatpush1.bf16.xpose.msra.mxu0 0
    %1863 = vmatprep.subr.bf16.mxu0 0
    %1864 = vmatpush1.bf16.xpose.msra.mxu0 0
    %1865 = vmatprep.subr.bf16.mxu0 0
    %1866 = vmatpush1.bf16.xpose.msra.mxu0 0
    %1867 = vmatprep.subr.bf16.mxu0 0
    %1868 = vmatpush1.bf16.xpose.msra.mxu0 0
    %1869 = vmatprep.subr.bf16.mxu0 %v1392
    %1870 = vmatpush1.bf16.xpose.msra.mxu0 %v1390
    %1871 = vmatprep.subr.bf16.mxu0 0
    %1872 = vmatpush2.bf16.xpose.msra.mxu0 0
    %1873 = vmatprep.subr.bf16.mxu0 0
    %1874 = vmatpush2.bf16.xpose.msra.mxu0 0
    %1875 = vmatprep.subr.bf16.mxu0 0
    %1876 = vmatpush2.bf16.xpose.msra.mxu0 0
    %1877 = vmatprep.subr.bf16.mxu0 0
    %1878 = vmatpush2.bf16.xpose.msra.mxu0 0
    %1879 = vmatprep.subr.bf16.mxu0 0
    %1880 = vmatpush2.bf16.xpose.msra.mxu0 0
    %1881 = vmatprep.subr.bf16.mxu0 0
    %1882 = vmatpush2.bf16.xpose.msra.mxu0 0
    %1883 = vmatprep.subr.bf16.mxu0 0
    %1884 = vmatpush2.bf16.xpose.msra.mxu0 0
    %1885 = vmatprep.subr.bf16.mxu0 0
    %1886 = vmatpush2.bf16.xpose.msra.mxu0 0
    %1887 = vmatprep.mubr.bf16.mxu0 %v887
    %1888 = vmatmul.mubr.bf16.gmra.mxu0 %v886
    %v1889 = vpop.f32.mrf.mxu0
    %v1890 = vadd.f32 %v1826, %v1889
    %v1891 = vpop.f32.mrf.mxu0
    %v1892 = vpop.f32.mrf.mxu0
    %v1893 = vadd.f32 %v1829, %v1892
    %v1894 = vpop.f32.mrf.mxu0
    %1895 = vmatprep.mubr.bf16.mxu0 %v945
    %1896 = vmatmul.mubr.bf16.gmra.mxu0 %v944
    %v1897 = vpop.f32.mrf.mxu0
    %v1898 = vadd.f32 %v1834, %v1897
    %v1899 = vpop.f32.mrf.mxu0
    %v1900 = vpop.f32.mrf.mxu0
    %v1901 = vadd.f32 %v1837, %v1900
    %v1902 = vpop.f32.mrf.mxu0
    %1903 = vmatprep.mubr.bf16.mxu0 %v1003
    %1904 = vmatmul.mubr.bf16.gmra.mxu0 %v1002
    %v1905 = vpop.f32.mrf.mxu0
    %v1906 = vadd.f32 %v1842, %v1905
    %v1907 = vpop.f32.mrf.mxu0
    %v1908 = vpop.f32.mrf.mxu0
    %v1909 = vadd.f32 %v1845, %v1908
    %v1910 = vpop.f32.mrf.mxu0
    %1911 = vmatprep.mubr.bf16.mxu0 %v1061
    %1912 = vmatmul.mubr.bf16.gmra.mxu0 %v1060
    %v1913 = vpop.f32.mrf.mxu0
    %v1914 = vadd.f32 %v1850, %v1913
    %v1915 = vpop.f32.mrf.mxu0
    %v1916 = vpop.f32.mrf.mxu0
    %v1917 = vpop.f32.mrf.mxu0
    %1918 = vdwg.mxu0
    %1919 = vmatprep.subr.bf16.mxu0 0
    %1920 = vmatpush1.bf16.xpose.msra.mxu0 0
    %1921 = vmatprep.subr.bf16.mxu0 0
    %1922 = vmatpush1.bf16.xpose.msra.mxu0 0
    %1923 = vmatprep.subr.bf16.mxu0 0
    %1924 = vmatpush1.bf16.xpose.msra.mxu0 0
    %1925 = vmatprep.subr.bf16.mxu0 0
    %1926 = vmatpush1.bf16.xpose.msra.mxu0 0
    %1927 = vmatprep.subr.bf16.mxu0 0
    %1928 = vmatpush1.bf16.xpose.msra.mxu0 0
    %1929 = vmatprep.subr.bf16.mxu0 0
    %1930 = vmatpush1.bf16.xpose.msra.mxu0 0
    %1931 = vmatprep.subr.bf16.mxu0 0
    %1932 = vmatpush1.bf16.xpose.msra.mxu0 0
    %1933 = vmatprep.subr.bf16.mxu0 %v1408
    %1934 = vmatpush1.bf16.xpose.msra.mxu0 %v1400
    %1935 = vmatprep.subr.bf16.mxu0 0
    %1936 = vmatpush2.bf16.xpose.msra.mxu0 0
    %1937 = vmatprep.subr.bf16.mxu0 0
    %1938 = vmatpush2.bf16.xpose.msra.mxu0 0
    %1939 = vmatprep.subr.bf16.mxu0 0
    %1940 = vmatpush2.bf16.xpose.msra.mxu0 0
    %1941 = vmatprep.subr.bf16.mxu0 0
    %1942 = vmatpush2.bf16.xpose.msra.mxu0 0
    %1943 = vmatprep.subr.bf16.mxu0 0
    %1944 = vmatpush2.bf16.xpose.msra.mxu0 0
    %1945 = vmatprep.subr.bf16.mxu0 0
    %1946 = vmatpush2.bf16.xpose.msra.mxu0 0
    %1947 = vmatprep.subr.bf16.mxu0 0
    %1948 = vmatpush2.bf16.xpose.msra.mxu0 0
    %1949 = vmatprep.subr.bf16.mxu0 0
    %1950 = vmatpush2.bf16.xpose.msra.mxu0 0
    %1951 = vmatprep.mubr.bf16.mxu0 %v889
    %1952 = vmatmul.mubr.bf16.gmra.mxu0 %v888
    %v1953 = vpop.f32.mrf.mxu0
    %v1954 = vadd.f32 %v1890, %v1953
    %v1955 = vpop.f32.mrf.mxu0
    %v1956 = vpop.f32.mrf.mxu0
    %v1957 = vadd.f32 %v1893, %v1956
    %v1958 = vpop.f32.mrf.mxu0
    %1959 = vmatprep.mubr.bf16.mxu0 %v947
    %1960 = vmatmul.mubr.bf16.gmra.mxu0 %v946
    %v1961 = vpop.f32.mrf.mxu0
    %v1962 = vadd.f32 %v1898, %v1961
    %v1963 = vpop.f32.mrf.mxu0
    %v1964 = vpop.f32.mrf.mxu0
    %v1965 = vadd.f32 %v1901, %v1964
    %v1966 = vpop.f32.mrf.mxu0
    %1967 = vmatprep.mubr.bf16.mxu0 %v1005
    %1968 = vmatmul.mubr.bf16.gmra.mxu0 %v1004
    %v1969 = vpop.f32.mrf.mxu0
    %v1970 = vadd.f32 %v1906, %v1969
    %v1971 = vpop.f32.mrf.mxu0
    %v1972 = vpop.f32.mrf.mxu0
    %v1973 = vadd.f32 %v1909, %v1972
    %v1974 = vpop.f32.mrf.mxu0
    %1975 = vmatprep.mubr.bf16.mxu0 %v1063
    %1976 = vmatmul.mubr.bf16.gmra.mxu0 %v1062
    %v1977 = vpop.f32.mrf.mxu0
    %v1978 = vadd.f32 %v1914, %v1977
    %v1979 = vpop.f32.mrf.mxu0
    %v1980 = vpop.f32.mrf.mxu0
    %v1981 = vpop.f32.mrf.mxu0
    %1982 = vdwg.mxu0
    %1983 = vmatprep.subr.bf16.mxu0 0
    %1984 = vmatpush1.bf16.xpose.msra.mxu0 0
    %1985 = vmatprep.subr.bf16.mxu0 0
    %1986 = vmatpush1.bf16.xpose.msra.mxu0 0
    %1987 = vmatprep.subr.bf16.mxu0 0
    %1988 = vmatpush1.bf16.xpose.msra.mxu0 0
    %1989 = vmatprep.subr.bf16.mxu0 0
    %1990 = vmatpush1.bf16.xpose.msra.mxu0 0
    %1991 = vmatprep.subr.bf16.mxu0 0
    %1992 = vmatpush1.bf16.xpose.msra.mxu0 0
    %1993 = vmatprep.subr.bf16.mxu0 0
    %1994 = vmatpush1.bf16.xpose.msra.mxu0 0
    %1995 = vmatprep.subr.bf16.mxu0 0
    %1996 = vmatpush1.bf16.xpose.msra.mxu0 0
    %1997 = vmatprep.subr.bf16.mxu0 %v1409
    %1998 = vmatpush1.bf16.xpose.msra.mxu0 %v1407
    %1999 = vmatprep.subr.bf16.mxu0 0
    %2000 = vmatpush2.bf16.xpose.msra.mxu0 0
    %2001 = vmatprep.subr.bf16.mxu0 0
    %2002 = vmatpush2.bf16.xpose.msra.mxu0 0
    %2003 = vmatprep.subr.bf16.mxu0 0
    %2004 = vmatpush2.bf16.xpose.msra.mxu0 0
    %2005 = vmatprep.subr.bf16.mxu0 0
    %2006 = vmatpush2.bf16.xpose.msra.mxu0 0
    %2007 = vmatprep.subr.bf16.mxu0 0
    %2008 = vmatpush2.bf16.xpose.msra.mxu0 0
    %2009 = vmatprep.subr.bf16.mxu0 0
    %2010 = vmatpush2.bf16.xpose.msra.mxu0 0
    %2011 = vmatprep.subr.bf16.mxu0 0
    %2012 = vmatpush2.bf16.xpose.msra.mxu0 0
    %2013 = vmatprep.subr.bf16.mxu0 0
    %2014 = vmatpush2.bf16.xpose.msra.mxu0 0
    %2015 = vmatprep.mubr.bf16.mxu0 %v891
    %2016 = vmatmul.mubr.bf16.gmra.mxu0 %v890
    %v2017 = vpop.f32.mrf.mxu0
    %v2018 = vadd.f32 %v1954, %v2017
    %v2019 = vpop.f32.mrf.mxu0
    %v2020 = vpop.f32.mrf.mxu0
    %v2021 = vadd.f32 %v1957, %v2020
    %v2022 = vpop.f32.mrf.mxu0
    %2023 = vmatprep.mubr.bf16.mxu0 %v949
    %2024 = vmatmul.mubr.bf16.gmra.mxu0 %v948
    %v2025 = vpop.f32.mrf.mxu0
    %v2026 = vadd.f32 %v1962, %v2025
    %v2027 = vpop.f32.mrf.mxu0
    %v2028 = vpop.f32.mrf.mxu0
    %v2029 = vadd.f32 %v1965, %v2028
    %v2030 = vpop.f32.mrf.mxu0
    %2031 = vmatprep.mubr.bf16.mxu0 %v1007
    %2032 = vmatmul.mubr.bf16.gmra.mxu0 %v1006
    %v2033 = vpop.f32.mrf.mxu0
    %v2034 = vadd.f32 %v1970, %v2033
    %v2035 = vpop.f32.mrf.mxu0
    %v2036 = vpop.f32.mrf.mxu0
    %v2037 = vadd.f32 %v1973, %v2036
    %v2038 = vpop.f32.mrf.mxu0
    %2039 = vmatprep.mubr.bf16.mxu0 %v1065
    %2040 = vmatmul.mubr.bf16.gmra.mxu0 %v1064
    %v2041 = vpop.f32.mrf.mxu0
    %v2042 = vadd.f32 %v1978, %v2041
    %v2043 = vpop.f32.mrf.mxu0
    %v2044 = vpop.f32.mrf.mxu0
    %v2045 = vpop.f32.mrf.mxu0
    %2046 = vdwg.mxu0
    %2047 = vmatprep.subr.bf16.mxu0 0
    %2048 = vmatpush1.bf16.xpose.msra.mxu0 0
    %2049 = vmatprep.subr.bf16.mxu0 0
    %2050 = vmatpush1.bf16.xpose.msra.mxu0 0
    %2051 = vmatprep.subr.bf16.mxu0 0
    %2052 = vmatpush1.bf16.xpose.msra.mxu0 0
    %2053 = vmatprep.subr.bf16.mxu0 0
    %2054 = vmatpush1.bf16.xpose.msra.mxu0 0
    %2055 = vmatprep.subr.bf16.mxu0 0
    %2056 = vmatpush1.bf16.xpose.msra.mxu0 0
    %2057 = vmatprep.subr.bf16.mxu0 0
    %2058 = vmatpush1.bf16.xpose.msra.mxu0 0
    %2059 = vmatprep.subr.bf16.mxu0 0
    %2060 = vmatpush1.bf16.xpose.msra.mxu0 0
    %2061 = vmatprep.subr.bf16.mxu0 %v1425
    %2062 = vmatpush1.bf16.xpose.msra.mxu0 %v1417
    %2063 = vmatprep.subr.bf16.mxu0 0
    %2064 = vmatpush2.bf16.xpose.msra.mxu0 0
    %2065 = vmatprep.subr.bf16.mxu0 0
    %2066 = vmatpush2.bf16.xpose.msra.mxu0 0
    %2067 = vmatprep.subr.bf16.mxu0 0
    %2068 = vmatpush2.bf16.xpose.msra.mxu0 0
    %2069 = vmatprep.subr.bf16.mxu0 0
    %2070 = vmatpush2.bf16.xpose.msra.mxu0 0
    %2071 = vmatprep.subr.bf16.mxu0 0
    %2072 = vmatpush2.bf16.xpose.msra.mxu0 0
    %2073 = vmatprep.subr.bf16.mxu0 0
    %2074 = vmatpush2.bf16.xpose.msra.mxu0 0
    %2075 = vmatprep.subr.bf16.mxu0 0
    %2076 = vmatpush2.bf16.xpose.msra.mxu0 0
    %2077 = vmatprep.subr.bf16.mxu0 0
    %2078 = vmatpush2.bf16.xpose.msra.mxu0 0
    %2079 = vmatprep.mubr.bf16.mxu0 %v893
    %2080 = vmatmul.mubr.bf16.gmra.mxu0 %v892
    %v2081 = vpop.f32.mrf.mxu0
    %v2082 = vadd.f32 %v2018, %v2081
    %v2083 = vpop.f32.mrf.mxu0
    %v2084 = vpop.f32.mrf.mxu0
    %v2085 = vadd.f32 %v2021, %v2084
    %v2086 = vpop.f32.mrf.mxu0
    %2087 = vmatprep.mubr.bf16.mxu0 %v951
    %2088 = vmatmul.mubr.bf16.gmra.mxu0 %v950
    %v2089 = vpop.f32.mrf.mxu0
    %v2090 = vadd.f32 %v2026, %v2089
    %v2091 = vpop.f32.mrf.mxu0
    %v2092 = vpop.f32.mrf.mxu0
    %v2093 = vadd.f32 %v2029, %v2092
    %v2094 = vpop.f32.mrf.mxu0
    %2095 = vmatprep.mubr.bf16.mxu0 %v1009
    %2096 = vmatmul.mubr.bf16.gmra.mxu0 %v1008
    %v2097 = vpop.f32.mrf.mxu0
    %v2098 = vadd.f32 %v2034, %v2097
    %v2099 = vpop.f32.mrf.mxu0
    %v2100 = vpop.f32.mrf.mxu0
    %v2101 = vadd.f32 %v2037, %v2100
    %v2102 = vpop.f32.mrf.mxu0
    %2103 = vmatprep.mubr.bf16.mxu0 %v1067
    %2104 = vmatmul.mubr.bf16.gmra.mxu0 %v1066
    %v2105 = vpop.f32.mrf.mxu0
    %v2106 = vadd.f32 %v2042, %v2105
    %v2107 = vpop.f32.mrf.mxu0
    %v2108 = vpop.f32.mrf.mxu0
    %v2109 = vpop.f32.mrf.mxu0
    %2110 = vdwg.mxu0
    %2111 = vmatprep.subr.bf16.mxu0 0
    %2112 = vmatpush1.bf16.xpose.msra.mxu0 0
    %2113 = vmatprep.subr.bf16.mxu0 0
    %2114 = vmatpush1.bf16.xpose.msra.mxu0 0
    %2115 = vmatprep.subr.bf16.mxu0 0
    %2116 = vmatpush1.bf16.xpose.msra.mxu0 0
    %2117 = vmatprep.subr.bf16.mxu0 0
    %2118 = vmatpush1.bf16.xpose.msra.mxu0 0
    %2119 = vmatprep.subr.bf16.mxu0 0
    %2120 = vmatpush1.bf16.xpose.msra.mxu0 0
    %2121 = vmatprep.subr.bf16.mxu0 0
    %2122 = vmatpush1.bf16.xpose.msra.mxu0 0
    %2123 = vmatprep.subr.bf16.mxu0 0
    %2124 = vmatpush1.bf16.xpose.msra.mxu0 0
    %2125 = vmatprep.subr.bf16.mxu0 %v1426
    %2126 = vmatpush1.bf16.xpose.msra.mxu0 %v1424
    %2127 = vmatprep.subr.bf16.mxu0 0
    %2128 = vmatpush2.bf16.xpose.msra.mxu0 0
    %2129 = vmatprep.subr.bf16.mxu0 0
    %2130 = vmatpush2.bf16.xpose.msra.mxu0 0
    %2131 = vmatprep.subr.bf16.mxu0 0
    %2132 = vmatpush2.bf16.xpose.msra.mxu0 0
    %2133 = vmatprep.subr.bf16.mxu0 0
    %2134 = vmatpush2.bf16.xpose.msra.mxu0 0
    %2135 = vmatprep.subr.bf16.mxu0 0
    %2136 = vmatpush2.bf16.xpose.msra.mxu0 0
    %2137 = vmatprep.subr.bf16.mxu0 0
    %2138 = vmatpush2.bf16.xpose.msra.mxu0 0
    %2139 = vmatprep.subr.bf16.mxu0 0
    %2140 = vmatpush2.bf16.xpose.msra.mxu0 0
    %2141 = vmatprep.subr.bf16.mxu0 0
    %2142 = vmatpush2.bf16.xpose.msra.mxu0 0
    %2143 = vmatprep.mubr.bf16.mxu0 %v895
    %2144 = vmatmul.mubr.bf16.gmra.mxu0 %v894
    %v2145 = vpop.f32.mrf.mxu0
    %v2146 = vadd.f32 %v2082, %v2145
    %v2147 = vpop.f32.mrf.mxu0
    %v2148 = vpop.f32.mrf.mxu0
    %v2149 = vadd.f32 %v2085, %v2148
    %v2150 = vpop.f32.mrf.mxu0
    %2151 = vmatprep.mubr.bf16.mxu0 %v953
    %2152 = vmatmul.mubr.bf16.gmra.mxu0 %v952
    %v2153 = vpop.f32.mrf.mxu0
    %v2154 = vadd.f32 %v2090, %v2153
    %v2155 = vpop.f32.mrf.mxu0
    %v2156 = vpop.f32.mrf.mxu0
    %v2157 = vadd.f32 %v2093, %v2156
    %v2158 = vpop.f32.mrf.mxu0
    %2159 = vmatprep.mubr.bf16.mxu0 %v1011
    %2160 = vmatmul.mubr.bf16.gmra.mxu0 %v1010
    %v2161 = vpop.f32.mrf.mxu0
    %v2162 = vadd.f32 %v2098, %v2161
    %v2163 = vpop.f32.mrf.mxu0
    %v2164 = vpop.f32.mrf.mxu0
    %v2165 = vadd.f32 %v2101, %v2164
    %v2166 = vpop.f32.mrf.mxu0
    %2167 = vmatprep.mubr.bf16.mxu0 %v1069
    %2168 = vmatmul.mubr.bf16.gmra.mxu0 %v1068
    %v2169 = vpop.f32.mrf.mxu0
    %v2170 = vadd.f32 %v2106, %v2169
    %v2171 = vpop.f32.mrf.mxu0
    %v2172 = vpop.f32.mrf.mxu0
    %v2173 = vpop.f32.mrf.mxu0
    %2174 = vdwg.mxu0
    %2175 = vmatprep.subr.bf16.mxu0 0
    %2176 = vmatpush1.bf16.xpose.msra.mxu0 0
    %2177 = vmatprep.subr.bf16.mxu0 0
    %2178 = vmatpush1.bf16.xpose.msra.mxu0 0
    %2179 = vmatprep.subr.bf16.mxu0 0
    %2180 = vmatpush1.bf16.xpose.msra.mxu0 0
    %2181 = vmatprep.subr.bf16.mxu0 0
    %2182 = vmatpush1.bf16.xpose.msra.mxu0 0
    %2183 = vmatprep.subr.bf16.mxu0 0
    %2184 = vmatpush1.bf16.xpose.msra.mxu0 0
    %2185 = vmatprep.subr.bf16.mxu0 0
    %2186 = vmatpush1.bf16.xpose.msra.mxu0 0
    %2187 = vmatprep.subr.bf16.mxu0 0
    %2188 = vmatpush1.bf16.xpose.msra.mxu0 0
    %2189 = vmatprep.subr.bf16.mxu0 %v1442
    %2190 = vmatpush1.bf16.xpose.msra.mxu0 %v1434
    %2191 = vmatprep.subr.bf16.mxu0 0
    %2192 = vmatpush2.bf16.xpose.msra.mxu0 0
    %2193 = vmatprep.subr.bf16.mxu0 0
    %2194 = vmatpush2.bf16.xpose.msra.mxu0 0
    %2195 = vmatprep.subr.bf16.mxu0 0
    %2196 = vmatpush2.bf16.xpose.msra.mxu0 0
    %2197 = vmatprep.subr.bf16.mxu0 0
    %2198 = vmatpush2.bf16.xpose.msra.mxu0 0
    %2199 = vmatprep.subr.bf16.mxu0 0
    %2200 = vmatpush2.bf16.xpose.msra.mxu0 0
    %2201 = vmatprep.subr.bf16.mxu0 0
    %2202 = vmatpush2.bf16.xpose.msra.mxu0 0
    %2203 = vmatprep.subr.bf16.mxu0 0
    %2204 = vmatpush2.bf16.xpose.msra.mxu0 0
    %2205 = vmatprep.subr.bf16.mxu0 0
    %2206 = vmatpush2.bf16.xpose.msra.mxu0 0
    %2207 = vmatprep.mubr.bf16.mxu0 %v897
    %2208 = vmatmul.mubr.bf16.gmra.mxu0 %v896
    %v2209 = vpop.f32.mrf.mxu0
    %v2210 = vadd.f32 %v2146, %v2209
    %v2211 = vpop.f32.mrf.mxu0
    %v2212 = vpop.f32.mrf.mxu0
    %v2213 = vadd.f32 %v2149, %v2212
    %v2214 = vpop.f32.mrf.mxu0
    %2215 = vmatprep.mubr.bf16.mxu0 %v955
    %2216 = vmatmul.mubr.bf16.gmra.mxu0 %v954
    %v2217 = vpop.f32.mrf.mxu0
    %v2218 = vadd.f32 %v2154, %v2217
    %v2219 = vpop.f32.mrf.mxu0
    %v2220 = vpop.f32.mrf.mxu0
    %v2221 = vadd.f32 %v2157, %v2220
    %v2222 = vpop.f32.mrf.mxu0
    %2223 = vmatprep.mubr.bf16.mxu0 %v1013
    %2224 = vmatmul.mubr.bf16.gmra.mxu0 %v1012
    %v2225 = vpop.f32.mrf.mxu0
    %v2226 = vadd.f32 %v2162, %v2225
    %v2227 = vpop.f32.mrf.mxu0
    %v2228 = vpop.f32.mrf.mxu0
    %v2229 = vadd.f32 %v2165, %v2228
    %v2230 = vpop.f32.mrf.mxu0
    %2231 = vmatprep.mubr.bf16.mxu0 %v1071
    %2232 = vmatmul.mubr.bf16.gmra.mxu0 %v1070
    %v2233 = vpop.f32.mrf.mxu0
    %v2234 = vadd.f32 %v2170, %v2233
    %v2235 = vpop.f32.mrf.mxu0
    %v2236 = vpop.f32.mrf.mxu0
    %v2237 = vpop.f32.mrf.mxu0
    %2238 = vdwg.mxu0
    %2239 = vmatprep.subr.bf16.mxu0 0
    %2240 = vmatpush1.bf16.xpose.msra.mxu0 0
    %2241 = vmatprep.subr.bf16.mxu0 0
    %2242 = vmatpush1.bf16.xpose.msra.mxu0 0
    %2243 = vmatprep.subr.bf16.mxu0 0
    %2244 = vmatpush1.bf16.xpose.msra.mxu0 0
    %2245 = vmatprep.subr.bf16.mxu0 0
    %2246 = vmatpush1.bf16.xpose.msra.mxu0 0
    %2247 = vmatprep.subr.bf16.mxu0 0
    %2248 = vmatpush1.bf16.xpose.msra.mxu0 0
    %2249 = vmatprep.subr.bf16.mxu0 0
    %2250 = vmatpush1.bf16.xpose.msra.mxu0 0
    %2251 = vmatprep.subr.bf16.mxu0 0
    %2252 = vmatpush1.bf16.xpose.msra.mxu0 0
    %2253 = vmatprep.subr.bf16.mxu0 %v1443
    %2254 = vmatpush1.bf16.xpose.msra.mxu0 %v1441
    %2255 = vmatprep.subr.bf16.mxu0 0
    %2256 = vmatpush2.bf16.xpose.msra.mxu0 0
    %2257 = vmatprep.subr.bf16.mxu0 0
    %2258 = vmatpush2.bf16.xpose.msra.mxu0 0
    %2259 = vmatprep.subr.bf16.mxu0 0
    %2260 = vmatpush2.bf16.xpose.msra.mxu0 0
    %2261 = vmatprep.subr.bf16.mxu0 0
    %2262 = vmatpush2.bf16.xpose.msra.mxu0 0
    %2263 = vmatprep.subr.bf16.mxu0 0
    %2264 = vmatpush2.bf16.xpose.msra.mxu0 0
    %2265 = vmatprep.subr.bf16.mxu0 0
    %2266 = vmatpush2.bf16.xpose.msra.mxu0 0
    %2267 = vmatprep.subr.bf16.mxu0 0
    %2268 = vmatpush2.bf16.xpose.msra.mxu0 0
    %2269 = vmatprep.subr.bf16.mxu0 0
    %2270 = vmatpush2.bf16.xpose.msra.mxu0 0
    %2271 = vmatprep.mubr.bf16.mxu0 %v899
    %2272 = vmatmul.mubr.bf16.gmra.mxu0 %v898
    %v2273 = vpop.f32.mrf.mxu0
    %v2274 = vadd.f32 %v2210, %v2273
    %v2275 = vpop.f32.mrf.mxu0
    %v2276 = vpop.f32.mrf.mxu0
    %v2277 = vadd.f32 %v2213, %v2276
    %v2278 = vpop.f32.mrf.mxu0
    %2279 = vmatprep.mubr.bf16.mxu0 %v957
    %2280 = vmatmul.mubr.bf16.gmra.mxu0 %v956
    %v2281 = vpop.f32.mrf.mxu0
    %v2282 = vadd.f32 %v2218, %v2281
    %v2283 = vpop.f32.mrf.mxu0
    %v2284 = vpop.f32.mrf.mxu0
    %v2285 = vadd.f32 %v2221, %v2284
    %v2286 = vpop.f32.mrf.mxu0
    %2287 = vmatprep.mubr.bf16.mxu0 %v1015
    %2288 = vmatmul.mubr.bf16.gmra.mxu0 %v1014
    %v2289 = vpop.f32.mrf.mxu0
    %v2290 = vadd.f32 %v2226, %v2289
    %v2291 = vpop.f32.mrf.mxu0
    %v2292 = vpop.f32.mrf.mxu0
    %v2293 = vadd.f32 %v2229, %v2292
    %v2294 = vpop.f32.mrf.mxu0
    %2295 = vmatprep.mubr.bf16.mxu0 %v1073
    %2296 = vmatmul.mubr.bf16.gmra.mxu0 %v1072
    %v2297 = vpop.f32.mrf.mxu0
    %v2298 = vadd.f32 %v2234, %v2297
    %v2299 = vpop.f32.mrf.mxu0
    %v2300 = vpop.f32.mrf.mxu0
    %v2301 = vpop.f32.mrf.mxu0
    %2302 = vdwg.mxu0
    %2303 = vmatprep.subr.bf16.mxu0 0
    %2304 = vmatpush1.bf16.xpose.msra.mxu0 0
    %2305 = vmatprep.subr.bf16.mxu0 0
    %2306 = vmatpush1.bf16.xpose.msra.mxu0 0
    %2307 = vmatprep.subr.bf16.mxu0 0
    %2308 = vmatpush1.bf16.xpose.msra.mxu0 0
    %2309 = vmatprep.subr.bf16.mxu0 0
    %2310 = vmatpush1.bf16.xpose.msra.mxu0 0
    %2311 = vmatprep.subr.bf16.mxu0 0
    %2312 = vmatpush1.bf16.xpose.msra.mxu0 0
    %2313 = vmatprep.subr.bf16.mxu0 0
    %2314 = vmatpush1.bf16.xpose.msra.mxu0 0
    %2315 = vmatprep.subr.bf16.mxu0 0
    %2316 = vmatpush1.bf16.xpose.msra.mxu0 0
    %2317 = vmatprep.subr.bf16.mxu0 %v1459
    %2318 = vmatpush1.bf16.xpose.msra.mxu0 %v1451
    %2319 = vmatprep.subr.bf16.mxu0 0
    %2320 = vmatpush2.bf16.xpose.msra.mxu0 0
    %2321 = vmatprep.subr.bf16.mxu0 0
    %2322 = vmatpush2.bf16.xpose.msra.mxu0 0
    %2323 = vmatprep.subr.bf16.mxu0 0
    %2324 = vmatpush2.bf16.xpose.msra.mxu0 0
    %2325 = vmatprep.subr.bf16.mxu0 0
    %2326 = vmatpush2.bf16.xpose.msra.mxu0 0
    %2327 = vmatprep.subr.bf16.mxu0 0
    %2328 = vmatpush2.bf16.xpose.msra.mxu0 0
    %2329 = vmatprep.subr.bf16.mxu0 0
    %2330 = vmatpush2.bf16.xpose.msra.mxu0 0
    %2331 = vmatprep.subr.bf16.mxu0 0
    %2332 = vmatpush2.bf16.xpose.msra.mxu0 0
    %2333 = vmatprep.subr.bf16.mxu0 0
    %2334 = vmatpush2.bf16.xpose.msra.mxu0 0
    %2335 = vmatprep.mubr.bf16.mxu0 %v901
    %2336 = vmatmul.mubr.bf16.gmra.mxu0 %v900
    %v2337 = vpop.f32.mrf.mxu0
    %v2338 = vadd.f32 %v2274, %v2337
    %v2339 = vpop.f32.mrf.mxu0
    %v2340 = vpop.f32.mrf.mxu0
    %v2341 = vadd.f32 %v2277, %v2340
    %v2342 = vpop.f32.mrf.mxu0
    %2343 = vmatprep.mubr.bf16.mxu0 %v959
    %2344 = vmatmul.mubr.bf16.gmra.mxu0 %v958
    %v2345 = vpop.f32.mrf.mxu0
    %v2346 = vadd.f32 %v2282, %v2345
    %v2347 = vpop.f32.mrf.mxu0
    %v2348 = vpop.f32.mrf.mxu0
    %v2349 = vadd.f32 %v2285, %v2348
    %v2350 = vpop.f32.mrf.mxu0
    %2351 = vmatprep.mubr.bf16.mxu0 %v1017
    %2352 = vmatmul.mubr.bf16.gmra.mxu0 %v1016
    %v2353 = vpop.f32.mrf.mxu0
    %v2354 = vadd.f32 %v2290, %v2353
    %v2355 = vpop.f32.mrf.mxu0
    %v2356 = vpop.f32.mrf.mxu0
    %v2357 = vadd.f32 %v2293, %v2356
    %v2358 = vpop.f32.mrf.mxu0
    %2359 = vmatprep.mubr.bf16.mxu0 %v1075
    %2360 = vmatmul.mubr.bf16.gmra.mxu0 %v1074
    %v2361 = vpop.f32.mrf.mxu0
    %v2362 = vadd.f32 %v2298, %v2361
    %v2363 = vpop.f32.mrf.mxu0
    %v2364 = vpop.f32.mrf.mxu0
    %v2365 = vpop.f32.mrf.mxu0
    %2366 = vdwg.mxu0
    %2367 = vmatprep.subr.bf16.mxu0 0
    %2368 = vmatpush1.bf16.xpose.msra.mxu0 0
    %2369 = vmatprep.subr.bf16.mxu0 0
    %2370 = vmatpush1.bf16.xpose.msra.mxu0 0
    %2371 = vmatprep.subr.bf16.mxu0 0
    %2372 = vmatpush1.bf16.xpose.msra.mxu0 0
    %2373 = vmatprep.subr.bf16.mxu0 0
    %2374 = vmatpush1.bf16.xpose.msra.mxu0 0
    %2375 = vmatprep.subr.bf16.mxu0 0
    %2376 = vmatpush1.bf16.xpose.msra.mxu0 0
    %2377 = vmatprep.subr.bf16.mxu0 0
    %2378 = vmatpush1.bf16.xpose.msra.mxu0 0
    %2379 = vmatprep.subr.bf16.mxu0 0
    %2380 = vmatpush1.bf16.xpose.msra.mxu0 0
    %2381 = vmatprep.subr.bf16.mxu0 %v1460
    %2382 = vmatpush1.bf16.xpose.msra.mxu0 %v1458
    %2383 = vmatprep.subr.bf16.mxu0 0
    %2384 = vmatpush2.bf16.xpose.msra.mxu0 0
    %2385 = vmatprep.subr.bf16.mxu0 0
    %2386 = vmatpush2.bf16.xpose.msra.mxu0 0
    %2387 = vmatprep.subr.bf16.mxu0 0
    %2388 = vmatpush2.bf16.xpose.msra.mxu0 0
    %2389 = vmatprep.subr.bf16.mxu0 0
    %2390 = vmatpush2.bf16.xpose.msra.mxu0 0
    %2391 = vmatprep.subr.bf16.mxu0 0
    %2392 = vmatpush2.bf16.xpose.msra.mxu0 0
    %2393 = vmatprep.subr.bf16.mxu0 0
    %2394 = vmatpush2.bf16.xpose.msra.mxu0 0
    %2395 = vmatprep.subr.bf16.mxu0 0
    %2396 = vmatpush2.bf16.xpose.msra.mxu0 0
    %2397 = vmatprep.subr.bf16.mxu0 0
    %2398 = vmatpush2.bf16.xpose.msra.mxu0 0
    %2399 = vmatprep.mubr.bf16.mxu0 %v903
    %2400 = vmatmul.mubr.bf16.gmra.mxu0 %v902
    %v2401 = vpop.f32.mrf.mxu0
    %v2402 = vadd.f32 %v2338, %v2401
    %v2403 = vpop.f32.mrf.mxu0
    %v2404 = vpop.f32.mrf.mxu0
    %v2405 = vadd.f32 %v2341, %v2404
    %v2406 = vpop.f32.mrf.mxu0
    %2407 = vmatprep.mubr.bf16.mxu0 %v961
    %2408 = vmatmul.mubr.bf16.gmra.mxu0 %v960
    %v2409 = vpop.f32.mrf.mxu0
    %v2410 = vadd.f32 %v2346, %v2409
    %v2411 = vpop.f32.mrf.mxu0
    %v2412 = vpop.f32.mrf.mxu0
    %v2413 = vadd.f32 %v2349, %v2412
    %v2414 = vpop.f32.mrf.mxu0
    %2415 = vmatprep.mubr.bf16.mxu0 %v1019
    %2416 = vmatmul.mubr.bf16.gmra.mxu0 %v1018
    %v2417 = vpop.f32.mrf.mxu0
    %v2418 = vadd.f32 %v2354, %v2417
    %v2419 = vpop.f32.mrf.mxu0
    %v2420 = vpop.f32.mrf.mxu0
    %v2421 = vadd.f32 %v2357, %v2420
    %v2422 = vpop.f32.mrf.mxu0
    %2423 = vmatprep.mubr.bf16.mxu0 %v1077
    %2424 = vmatmul.mubr.bf16.gmra.mxu0 %v1076
    %v2425 = vpop.f32.mrf.mxu0
    %v2426 = vadd.f32 %v2362, %v2425
    %v2427 = vpop.f32.mrf.mxu0
    %v2428 = vpop.f32.mrf.mxu0
    %v2429 = vpop.f32.mrf.mxu0
    %2430 = vdwg.mxu0
    %2431 = vmatprep.subr.bf16.mxu0 0
    %2432 = vmatpush1.bf16.xpose.msra.mxu0 0
    %2433 = vmatprep.subr.bf16.mxu0 0
    %2434 = vmatpush1.bf16.xpose.msra.mxu0 0
    %2435 = vmatprep.subr.bf16.mxu0 0
    %2436 = vmatpush1.bf16.xpose.msra.mxu0 0
    %2437 = vmatprep.subr.bf16.mxu0 0
    %2438 = vmatpush1.bf16.xpose.msra.mxu0 0
    %2439 = vmatprep.subr.bf16.mxu0 0
    %2440 = vmatpush1.bf16.xpose.msra.mxu0 0
    %2441 = vmatprep.subr.bf16.mxu0 0
    %2442 = vmatpush1.bf16.xpose.msra.mxu0 0
    %2443 = vmatprep.subr.bf16.mxu0 0
    %2444 = vmatpush1.bf16.xpose.msra.mxu0 0
    %2445 = vmatprep.subr.bf16.mxu0 %v1476
    %2446 = vmatpush1.bf16.xpose.msra.mxu0 %v1468
    %2447 = vmatprep.subr.bf16.mxu0 0
    %2448 = vmatpush2.bf16.xpose.msra.mxu0 0
    %2449 = vmatprep.subr.bf16.mxu0 0
    %2450 = vmatpush2.bf16.xpose.msra.mxu0 0
    %2451 = vmatprep.subr.bf16.mxu0 0
    %2452 = vmatpush2.bf16.xpose.msra.mxu0 0
    %2453 = vmatprep.subr.bf16.mxu0 0
    %2454 = vmatpush2.bf16.xpose.msra.mxu0 0
    %2455 = vmatprep.subr.bf16.mxu0 0
    %2456 = vmatpush2.bf16.xpose.msra.mxu0 0
    %2457 = vmatprep.subr.bf16.mxu0 0
    %2458 = vmatpush2.bf16.xpose.msra.mxu0 0
    %2459 = vmatprep.subr.bf16.mxu0 0
    %2460 = vmatpush2.bf16.xpose.msra.mxu0 0
    %2461 = vmatprep.subr.bf16.mxu0 0
    %2462 = vmatpush2.bf16.xpose.msra.mxu0 0
    %2463 = vmatprep.mubr.bf16.mxu0 %v905
    %2464 = vmatmul.mubr.bf16.gmra.mxu0 %v904
    %v2465 = vpop.f32.mrf.mxu0
    %v2466 = vadd.f32 %v2402, %v2465
    %v2467 = vpop.f32.mrf.mxu0
    %v2468 = vpop.f32.mrf.mxu0
    %v2469 = vadd.f32 %v2405, %v2468
    %v2470 = vpop.f32.mrf.mxu0
    %2471 = vmatprep.mubr.bf16.mxu0 %v963
    %2472 = vmatmul.mubr.bf16.gmra.mxu0 %v962
    %v2473 = vpop.f32.mrf.mxu0
    %v2474 = vadd.f32 %v2410, %v2473
    %v2475 = vpop.f32.mrf.mxu0
    %v2476 = vpop.f32.mrf.mxu0
    %v2477 = vadd.f32 %v2413, %v2476
    %v2478 = vpop.f32.mrf.mxu0
    %2479 = vmatprep.mubr.bf16.mxu0 %v1021
    %2480 = vmatmul.mubr.bf16.gmra.mxu0 %v1020
    %v2481 = vpop.f32.mrf.mxu0
    %v2482 = vadd.f32 %v2418, %v2481
    %v2483 = vpop.f32.mrf.mxu0
    %v2484 = vpop.f32.mrf.mxu0
    %v2485 = vadd.f32 %v2421, %v2484
    %v2486 = vpop.f32.mrf.mxu0
    %2487 = vmatprep.mubr.bf16.mxu0 %v1079
    %2488 = vmatmul.mubr.bf16.gmra.mxu0 %v1078
    %v2489 = vpop.f32.mrf.mxu0
    %v2490 = vadd.f32 %v2426, %v2489
    %v2491 = vpop.f32.mrf.mxu0
    %v2492 = vpop.f32.mrf.mxu0
    %v2493 = vpop.f32.mrf.mxu0
    %2494 = vdwg.mxu0
    %2495 = vmatprep.subr.bf16.mxu0 0
    %2496 = vmatpush1.bf16.xpose.msra.mxu0 0
    %2497 = vmatprep.subr.bf16.mxu0 0
    %2498 = vmatpush1.bf16.xpose.msra.mxu0 0
    %2499 = vmatprep.subr.bf16.mxu0 0
    %2500 = vmatpush1.bf16.xpose.msra.mxu0 0
    %2501 = vmatprep.subr.bf16.mxu0 0
    %2502 = vmatpush1.bf16.xpose.msra.mxu0 0
    %2503 = vmatprep.subr.bf16.mxu0 0
    %2504 = vmatpush1.bf16.xpose.msra.mxu0 0
    %2505 = vmatprep.subr.bf16.mxu0 0
    %2506 = vmatpush1.bf16.xpose.msra.mxu0 0
    %2507 = vmatprep.subr.bf16.mxu0 0
    %2508 = vmatpush1.bf16.xpose.msra.mxu0 0
    %2509 = vmatprep.subr.bf16.mxu0 %v1477
    %2510 = vmatpush1.bf16.xpose.msra.mxu0 %v1475
    %2511 = vmatprep.subr.bf16.mxu0 0
    %2512 = vmatpush2.bf16.xpose.msra.mxu0 0
    %2513 = vmatprep.subr.bf16.mxu0 0
    %2514 = vmatpush2.bf16.xpose.msra.mxu0 0
    %2515 = vmatprep.subr.bf16.mxu0 0
    %2516 = vmatpush2.bf16.xpose.msra.mxu0 0
    %2517 = vmatprep.subr.bf16.mxu0 0
    %2518 = vmatpush2.bf16.xpose.msra.mxu0 0
    %2519 = vmatprep.subr.bf16.mxu0 0
    %2520 = vmatpush2.bf16.xpose.msra.mxu0 0
    %2521 = vmatprep.subr.bf16.mxu0 0
    %2522 = vmatpush2.bf16.xpose.msra.mxu0 0
    %2523 = vmatprep.subr.bf16.mxu0 0
    %2524 = vmatpush2.bf16.xpose.msra.mxu0 0
    %2525 = vmatprep.subr.bf16.mxu0 0
    %2526 = vmatpush2.bf16.xpose.msra.mxu0 0
    %2527 = vmatprep.mubr.bf16.mxu0 %v907
    %2528 = vmatmul.mubr.bf16.gmra.mxu0 %v906
    %v2529 = vpop.f32.mrf.mxu0
    %v2530 = vadd.f32 %v2466, %v2529
    %v2531 = vpop.f32.mrf.mxu0
    %v2532 = vpop.f32.mrf.mxu0
    %v2533 = vadd.f32 %v2469, %v2532
    %v2534 = vpop.f32.mrf.mxu0
    %2535 = vmatprep.mubr.bf16.mxu0 %v965
    %2536 = vmatmul.mubr.bf16.gmra.mxu0 %v964
    %v2537 = vpop.f32.mrf.mxu0
    %v2538 = vadd.f32 %v2474, %v2537
    %v2539 = vpop.f32.mrf.mxu0
    %v2540 = vpop.f32.mrf.mxu0
    %v2541 = vadd.f32 %v2477, %v2540
    %v2542 = vpop.f32.mrf.mxu0
    %2543 = vmatprep.mubr.bf16.mxu0 %v1023
    %2544 = vmatmul.mubr.bf16.gmra.mxu0 %v1022
    %v2545 = vpop.f32.mrf.mxu0
    %v2546 = vadd.f32 %v2482, %v2545
    %v2547 = vpop.f32.mrf.mxu0
    %v2548 = vpop.f32.mrf.mxu0
    %v2549 = vadd.f32 %v2485, %v2548
    %v2550 = vpop.f32.mrf.mxu0
    %2551 = vmatprep.mubr.bf16.mxu0 %v1081
    %2552 = vmatmul.mubr.bf16.gmra.mxu0 %v1080
    %v2553 = vpop.f32.mrf.mxu0
    %v2554 = vadd.f32 %v2490, %v2553
    %v2555 = vpop.f32.mrf.mxu0
    %v2556 = vpop.f32.mrf.mxu0
    %v2557 = vpop.f32.mrf.mxu0
    %2558 = vdwg.mxu0
    %2559 = vmatprep.subr.bf16.mxu0 0
    %2560 = vmatpush1.bf16.xpose.msra.mxu0 0
    %2561 = vmatprep.subr.bf16.mxu0 0
    %2562 = vmatpush1.bf16.xpose.msra.mxu0 0
    %2563 = vmatprep.subr.bf16.mxu0 0
    %2564 = vmatpush1.bf16.xpose.msra.mxu0 0
    %2565 = vmatprep.subr.bf16.mxu0 0
    %2566 = vmatpush1.bf16.xpose.msra.mxu0 0
    %2567 = vmatprep.subr.bf16.mxu0 0
    %2568 = vmatpush1.bf16.xpose.msra.mxu0 0
    %2569 = vmatprep.subr.bf16.mxu0 0
    %2570 = vmatpush1.bf16.xpose.msra.mxu0 0
    %2571 = vmatprep.subr.bf16.mxu0 0
    %2572 = vmatpush1.bf16.xpose.msra.mxu0 0
    %2573 = vmatprep.subr.bf16.mxu0 %v1493
    %2574 = vmatpush1.bf16.xpose.msra.mxu0 %v1485
    %2575 = vmatprep.subr.bf16.mxu0 0
    %2576 = vmatpush2.bf16.xpose.msra.mxu0 0
    %2577 = vmatprep.subr.bf16.mxu0 0
    %2578 = vmatpush2.bf16.xpose.msra.mxu0 0
    %2579 = vmatprep.subr.bf16.mxu0 0
    %2580 = vmatpush2.bf16.xpose.msra.mxu0 0
    %2581 = vmatprep.subr.bf16.mxu0 0
    %2582 = vmatpush2.bf16.xpose.msra.mxu0 0
    %2583 = vmatprep.subr.bf16.mxu0 0
    %2584 = vmatpush2.bf16.xpose.msra.mxu0 0
    %2585 = vmatprep.subr.bf16.mxu0 0
    %2586 = vmatpush2.bf16.xpose.msra.mxu0 0
    %2587 = vmatprep.subr.bf16.mxu0 0
    %2588 = vmatpush2.bf16.xpose.msra.mxu0 0
    %2589 = vmatprep.subr.bf16.mxu0 0
    %2590 = vmatpush2.bf16.xpose.msra.mxu0 0
    %2591 = vmatprep.mubr.bf16.mxu0 %v909
    %2592 = vmatmul.mubr.bf16.gmra.mxu0 %v908
    %v2593 = vpop.f32.mrf.mxu0
    %v2594 = vadd.f32 %v2530, %v2593
    %v2595 = vpop.f32.mrf.mxu0
    %v2596 = vpop.f32.mrf.mxu0
    %v2597 = vadd.f32 %v2533, %v2596
    %v2598 = vpop.f32.mrf.mxu0
    %2599 = vmatprep.mubr.bf16.mxu0 %v967
    %2600 = vmatmul.mubr.bf16.gmra.mxu0 %v966
    %v2601 = vpop.f32.mrf.mxu0
    %v2602 = vadd.f32 %v2538, %v2601
    %v2603 = vpop.f32.mrf.mxu0
    %v2604 = vpop.f32.mrf.mxu0
    %v2605 = vadd.f32 %v2541, %v2604
    %v2606 = vpop.f32.mrf.mxu0
    %2607 = vmatprep.mubr.bf16.mxu0 %v1025
    %2608 = vmatmul.mubr.bf16.gmra.mxu0 %v1024
    %v2609 = vpop.f32.mrf.mxu0
    %v2610 = vadd.f32 %v2546, %v2609
    %v2611 = vpop.f32.mrf.mxu0
    %v2612 = vpop.f32.mrf.mxu0
    %v2613 = vadd.f32 %v2549, %v2612
    %v2614 = vpop.f32.mrf.mxu0
    %2615 = vmatprep.mubr.bf16.mxu0 %v1083
    %2616 = vmatmul.mubr.bf16.gmra.mxu0 %v1082
    %v2617 = vpop.f32.mrf.mxu0
    %v2618 = vadd.f32 %v2554, %v2617
    %v2619 = vpop.f32.mrf.mxu0
    %v2620 = vpop.f32.mrf.mxu0
    %v2621 = vpop.f32.mrf.mxu0
    %2622 = vdwg.mxu0
    %2623 = vmatprep.subr.bf16.mxu0 0
    %2624 = vmatpush1.bf16.xpose.msra.mxu0 0
    %2625 = vmatprep.subr.bf16.mxu0 0
    %2626 = vmatpush1.bf16.xpose.msra.mxu0 0
    %2627 = vmatprep.subr.bf16.mxu0 0
    %2628 = vmatpush1.bf16.xpose.msra.mxu0 0
    %2629 = vmatprep.subr.bf16.mxu0 0
    %2630 = vmatpush1.bf16.xpose.msra.mxu0 0
    %2631 = vmatprep.subr.bf16.mxu0 0
    %2632 = vmatpush1.bf16.xpose.msra.mxu0 0
    %2633 = vmatprep.subr.bf16.mxu0 0
    %2634 = vmatpush1.bf16.xpose.msra.mxu0 0
    %2635 = vmatprep.subr.bf16.mxu0 0
    %2636 = vmatpush1.bf16.xpose.msra.mxu0 0
    %2637 = vmatprep.subr.bf16.mxu0 %v1494
    %2638 = vmatpush1.bf16.xpose.msra.mxu0 %v1492
    %2639 = vmatprep.subr.bf16.mxu0 0
    %2640 = vmatpush2.bf16.xpose.msra.mxu0 0
    %2641 = vmatprep.subr.bf16.mxu0 0
    %2642 = vmatpush2.bf16.xpose.msra.mxu0 0
    %2643 = vmatprep.subr.bf16.mxu0 0
    %2644 = vmatpush2.bf16.xpose.msra.mxu0 0
    %2645 = vmatprep.subr.bf16.mxu0 0
    %2646 = vmatpush2.bf16.xpose.msra.mxu0 0
    %2647 = vmatprep.subr.bf16.mxu0 0
    %2648 = vmatpush2.bf16.xpose.msra.mxu0 0
    %2649 = vmatprep.subr.bf16.mxu0 0
    %2650 = vmatpush2.bf16.xpose.msra.mxu0 0
    %2651 = vmatprep.subr.bf16.mxu0 0
    %2652 = vmatpush2.bf16.xpose.msra.mxu0 0
    %2653 = vmatprep.subr.bf16.mxu0 0
    %2654 = vmatpush2.bf16.xpose.msra.mxu0 0
    %2655 = vmatprep.mubr.bf16.mxu0 %v911
    %2656 = vmatmul.mubr.bf16.gmra.mxu0 %v910
    %v2657 = vpop.f32.mrf.mxu0
    %v2658 = vadd.f32 %v2594, %v2657
    %v2659 = vpop.f32.mrf.mxu0
    %v2660 = vpop.f32.mrf.mxu0
    %v2661 = vadd.f32 %v2597, %v2660
    %v2662 = vpop.f32.mrf.mxu0
    %2663 = vmatprep.mubr.bf16.mxu0 %v969
    %2664 = vmatmul.mubr.bf16.gmra.mxu0 %v968
    %v2665 = vpop.f32.mrf.mxu0
    %v2666 = vadd.f32 %v2602, %v2665
    %v2667 = vpop.f32.mrf.mxu0
    %v2668 = vpop.f32.mrf.mxu0
    %v2669 = vadd.f32 %v2605, %v2668
    %v2670 = vpop.f32.mrf.mxu0
    %2671 = vmatprep.mubr.bf16.mxu0 %v1027
    %2672 = vmatmul.mubr.bf16.gmra.mxu0 %v1026
    %v2673 = vpop.f32.mrf.mxu0
    %v2674 = vadd.f32 %v2610, %v2673
    %v2675 = vpop.f32.mrf.mxu0
    %v2676 = vpop.f32.mrf.mxu0
    %v2677 = vadd.f32 %v2613, %v2676
    %v2678 = vpop.f32.mrf.mxu0
    %2679 = vmatprep.mubr.bf16.mxu0 %v1085
    %2680 = vmatmul.mubr.bf16.gmra.mxu0 %v1084
    %v2681 = vpop.f32.mrf.mxu0
    %v2682 = vadd.f32 %v2618, %v2681
    %v2683 = vpop.f32.mrf.mxu0
    %v2684 = vpop.f32.mrf.mxu0
    %v2685 = vpop.f32.mrf.mxu0
    %2686 = vdwg.mxu0
    %2687 = vmatprep.subr.bf16.mxu0 0
    %2688 = vmatpush1.bf16.xpose.msra.mxu0 0
    %2689 = vmatprep.subr.bf16.mxu0 0
    %2690 = vmatpush1.bf16.xpose.msra.mxu0 0
    %2691 = vmatprep.subr.bf16.mxu0 0
    %2692 = vmatpush1.bf16.xpose.msra.mxu0 0
    %2693 = vmatprep.subr.bf16.mxu0 0
    %2694 = vmatpush1.bf16.xpose.msra.mxu0 0
    %2695 = vmatprep.subr.bf16.mxu0 0
    %2696 = vmatpush1.bf16.xpose.msra.mxu0 0
    %2697 = vmatprep.subr.bf16.mxu0 0
    %2698 = vmatpush1.bf16.xpose.msra.mxu0 0
    %2699 = vmatprep.subr.bf16.mxu0 0
    %2700 = vmatpush1.bf16.xpose.msra.mxu0 0
    %2701 = vmatprep.subr.bf16.mxu0 %v1510
    %2702 = vmatpush1.bf16.xpose.msra.mxu0 %v1502
    %2703 = vmatprep.subr.bf16.mxu0 0
    %2704 = vmatpush2.bf16.xpose.msra.mxu0 0
    %2705 = vmatprep.subr.bf16.mxu0 0
    %2706 = vmatpush2.bf16.xpose.msra.mxu0 0
    %2707 = vmatprep.subr.bf16.mxu0 0
    %2708 = vmatpush2.bf16.xpose.msra.mxu0 0
    %2709 = vmatprep.subr.bf16.mxu0 0
    %2710 = vmatpush2.bf16.xpose.msra.mxu0 0
    %2711 = vmatprep.subr.bf16.mxu0 0
    %2712 = vmatpush2.bf16.xpose.msra.mxu0 0
    %2713 = vmatprep.subr.bf16.mxu0 0
    %2714 = vmatpush2.bf16.xpose.msra.mxu0 0
    %2715 = vmatprep.subr.bf16.mxu0 0
    %2716 = vmatpush2.bf16.xpose.msra.mxu0 0
    %2717 = vmatprep.subr.bf16.mxu0 0
    %2718 = vmatpush2.bf16.xpose.msra.mxu0 0
    %2719 = vmatprep.mubr.bf16.mxu0 %v913
    %2720 = vmatmul.mubr.bf16.gmra.mxu0 %v912
    %v2721 = vpop.f32.mrf.mxu0
    %v2722 = vadd.f32 %v2658, %v2721
    %v2723 = vpop.f32.mrf.mxu0
    %v2724 = vpop.f32.mrf.mxu0
    %v2725 = vadd.f32 %v2661, %v2724
    %v2726 = vpop.f32.mrf.mxu0
    %2727 = vmatprep.mubr.bf16.mxu0 %v971
    %2728 = vmatmul.mubr.bf16.gmra.mxu0 %v970
    %v2729 = vpop.f32.mrf.mxu0
    %v2730 = vadd.f32 %v2666, %v2729
    %v2731 = vpop.f32.mrf.mxu0
    %v2732 = vpop.f32.mrf.mxu0
    %v2733 = vadd.f32 %v2669, %v2732
    %v2734 = vpop.f32.mrf.mxu0
    %2735 = vmatprep.mubr.bf16.mxu0 %v1029
    %2736 = vmatmul.mubr.bf16.gmra.mxu0 %v1028
    %v2737 = vpop.f32.mrf.mxu0
    %v2738 = vadd.f32 %v2674, %v2737
    %v2739 = vpop.f32.mrf.mxu0
    %v2740 = vpop.f32.mrf.mxu0
    %v2741 = vadd.f32 %v2677, %v2740
    %v2742 = vpop.f32.mrf.mxu0
    %2743 = vmatprep.mubr.bf16.mxu0 %v1087
    %2744 = vmatmul.mubr.bf16.gmra.mxu0 %v1086
    %v2745 = vpop.f32.mrf.mxu0
    %v2746 = vadd.f32 %v2682, %v2745
    %v2747 = vpop.f32.mrf.mxu0
    %v2748 = vpop.f32.mrf.mxu0
    %v2749 = vpop.f32.mrf.mxu0
    %2750 = vdwg.mxu0
    %2751 = vmatprep.subr.bf16.mxu0 0
    %2752 = vmatpush1.bf16.xpose.msra.mxu0 0
    %2753 = vmatprep.subr.bf16.mxu0 0
    %2754 = vmatpush1.bf16.xpose.msra.mxu0 0
    %2755 = vmatprep.subr.bf16.mxu0 0
    %2756 = vmatpush1.bf16.xpose.msra.mxu0 0
    %2757 = vmatprep.subr.bf16.mxu0 0
    %2758 = vmatpush1.bf16.xpose.msra.mxu0 0
    %2759 = vmatprep.subr.bf16.mxu0 0
    %2760 = vmatpush1.bf16.xpose.msra.mxu0 0
    %2761 = vmatprep.subr.bf16.mxu0 0
    %2762 = vmatpush1.bf16.xpose.msra.mxu0 0
    %2763 = vmatprep.subr.bf16.mxu0 0
    %2764 = vmatpush1.bf16.xpose.msra.mxu0 0
    %2765 = vmatprep.subr.bf16.mxu0 %v1511
    %2766 = vmatpush1.bf16.xpose.msra.mxu0 %v1509
    %2767 = vmatprep.subr.bf16.mxu0 0
    %2768 = vmatpush2.bf16.xpose.msra.mxu0 0
    %2769 = vmatprep.subr.bf16.mxu0 0
    %2770 = vmatpush2.bf16.xpose.msra.mxu0 0
    %2771 = vmatprep.subr.bf16.mxu0 0
    %2772 = vmatpush2.bf16.xpose.msra.mxu0 0
    %2773 = vmatprep.subr.bf16.mxu0 0
    %2774 = vmatpush2.bf16.xpose.msra.mxu0 0
    %2775 = vmatprep.subr.bf16.mxu0 0
    %2776 = vmatpush2.bf16.xpose.msra.mxu0 0
    %2777 = vmatprep.subr.bf16.mxu0 0
    %2778 = vmatpush2.bf16.xpose.msra.mxu0 0
    %2779 = vmatprep.subr.bf16.mxu0 0
    %2780 = vmatpush2.bf16.xpose.msra.mxu0 0
    %2781 = vmatprep.subr.bf16.mxu0 0
    %2782 = vmatpush2.bf16.xpose.msra.mxu0 0
    %2783 = vmatprep.mubr.bf16.mxu0 %v915
    %2784 = vmatmul.mubr.bf16.gmra.mxu0 %v914
    %v2785 = vpop.f32.mrf.mxu0
    %v2786 = vadd.f32 %v2722, %v2785
    %v2787 = vpop.f32.mrf.mxu0
    %v2788 = vpop.f32.mrf.mxu0
    %v2789 = vadd.f32 %v2725, %v2788
    %v2790 = vpop.f32.mrf.mxu0
    %2791 = vmatprep.mubr.bf16.mxu0 %v973
    %2792 = vmatmul.mubr.bf16.gmra.mxu0 %v972
    %v2793 = vpop.f32.mrf.mxu0
    %v2794 = vadd.f32 %v2730, %v2793
    %v2795 = vpop.f32.mrf.mxu0
    %v2796 = vpop.f32.mrf.mxu0
    %v2797 = vadd.f32 %v2733, %v2796
    %v2798 = vpop.f32.mrf.mxu0
    %2799 = vmatprep.mubr.bf16.mxu0 %v1031
    %2800 = vmatmul.mubr.bf16.gmra.mxu0 %v1030
    %v2801 = vpop.f32.mrf.mxu0
    %v2802 = vadd.f32 %v2738, %v2801
    %v2803 = vpop.f32.mrf.mxu0
    %v2804 = vpop.f32.mrf.mxu0
    %v2805 = vadd.f32 %v2741, %v2804
    %v2806 = vpop.f32.mrf.mxu0
    %2807 = vmatprep.mubr.bf16.mxu0 %v1089
    %2808 = vmatmul.mubr.bf16.gmra.mxu0 %v1088
    %v2809 = vpop.f32.mrf.mxu0
    %v2810 = vadd.f32 %v2746, %v2809
    %v2811 = vpop.f32.mrf.mxu0
    %v2812 = vpop.f32.mrf.mxu0
    %v2813 = vpop.f32.mrf.mxu0
    %2814 = vdwg.mxu0
    %2815 = vmatprep.subr.bf16.mxu0 0
    %2816 = vmatpush1.bf16.xpose.msra.mxu0 0
    %2817 = vmatprep.subr.bf16.mxu0 0
    %2818 = vmatpush1.bf16.xpose.msra.mxu0 0
    %2819 = vmatprep.subr.bf16.mxu0 0
    %2820 = vmatpush1.bf16.xpose.msra.mxu0 0
    %2821 = vmatprep.subr.bf16.mxu0 0
    %2822 = vmatpush1.bf16.xpose.msra.mxu0 0
    %2823 = vmatprep.subr.bf16.mxu0 0
    %2824 = vmatpush1.bf16.xpose.msra.mxu0 0
    %2825 = vmatprep.subr.bf16.mxu0 0
    %2826 = vmatpush1.bf16.xpose.msra.mxu0 0
    %2827 = vmatprep.subr.bf16.mxu0 0
    %2828 = vmatpush1.bf16.xpose.msra.mxu0 0
    %2829 = vmatprep.subr.bf16.mxu0 %v1527
    %2830 = vmatpush1.bf16.xpose.msra.mxu0 %v1519
    %2831 = vmatprep.subr.bf16.mxu0 0
    %2832 = vmatpush2.bf16.xpose.msra.mxu0 0
    %2833 = vmatprep.subr.bf16.mxu0 0
    %2834 = vmatpush2.bf16.xpose.msra.mxu0 0
    %2835 = vmatprep.subr.bf16.mxu0 0
    %2836 = vmatpush2.bf16.xpose.msra.mxu0 0
    %2837 = vmatprep.subr.bf16.mxu0 0
    %2838 = vmatpush2.bf16.xpose.msra.mxu0 0
    %2839 = vmatprep.subr.bf16.mxu0 0
    %2840 = vmatpush2.bf16.xpose.msra.mxu0 0
    %2841 = vmatprep.subr.bf16.mxu0 0
    %2842 = vmatpush2.bf16.xpose.msra.mxu0 0
    %2843 = vmatprep.subr.bf16.mxu0 0
    %2844 = vmatpush2.bf16.xpose.msra.mxu0 0
    %2845 = vmatprep.subr.bf16.mxu0 0
    %2846 = vmatpush2.bf16.xpose.msra.mxu0 0
    %2847 = vmatprep.mubr.bf16.mxu0 %v917
    %2848 = vmatmul.mubr.bf16.gmra.mxu0 %v916
    %v2849 = vpop.f32.mrf.mxu0
    %v2850 = vadd.f32 %v2786, %v2849
    %v2851 = vpop.f32.mrf.mxu0
    %v2852 = vpop.f32.mrf.mxu0
    %v2853 = vadd.f32 %v2789, %v2852
    %v2854 = vpop.f32.mrf.mxu0
    %2855 = vmatprep.mubr.bf16.mxu0 %v975
    %2856 = vmatmul.mubr.bf16.gmra.mxu0 %v974
    %v2857 = vpop.f32.mrf.mxu0
    %v2858 = vadd.f32 %v2794, %v2857
    %v2859 = vpop.f32.mrf.mxu0
    %v2860 = vpop.f32.mrf.mxu0
    %v2861 = vadd.f32 %v2797, %v2860
    %v2862 = vpop.f32.mrf.mxu0
    %2863 = vmatprep.mubr.bf16.mxu0 %v1033
    %2864 = vmatmul.mubr.bf16.gmra.mxu0 %v1032
    %v2865 = vpop.f32.mrf.mxu0
    %v2866 = vadd.f32 %v2802, %v2865
    %v2867 = vpop.f32.mrf.mxu0
    %v2868 = vpop.f32.mrf.mxu0
    %v2869 = vadd.f32 %v2805, %v2868
    %v2870 = vpop.f32.mrf.mxu0
    %2871 = vmatprep.mubr.bf16.mxu0 %v1091
    %2872 = vmatmul.mubr.bf16.gmra.mxu0 %v1090
    %v2873 = vpop.f32.mrf.mxu0
    %v2874 = vadd.f32 %v2810, %v2873
    %v2875 = vpop.f32.mrf.mxu0
    %v2876 = vpop.f32.mrf.mxu0
    %v2877 = vpop.f32.mrf.mxu0
    %2878 = vdwg.mxu0
    %2879 = vmatprep.subr.bf16.mxu0 0
    %2880 = vmatpush1.bf16.xpose.msra.mxu0 0
    %2881 = vmatprep.subr.bf16.mxu0 0
    %2882 = vmatpush1.bf16.xpose.msra.mxu0 0
    %2883 = vmatprep.subr.bf16.mxu0 0
    %2884 = vmatpush1.bf16.xpose.msra.mxu0 0
    %2885 = vmatprep.subr.bf16.mxu0 0
    %2886 = vmatpush1.bf16.xpose.msra.mxu0 0
    %2887 = vmatprep.subr.bf16.mxu0 0
    %2888 = vmatpush1.bf16.xpose.msra.mxu0 0
    %2889 = vmatprep.subr.bf16.mxu0 0
    %2890 = vmatpush1.bf16.xpose.msra.mxu0 0
    %2891 = vmatprep.subr.bf16.mxu0 0
    %2892 = vmatpush1.bf16.xpose.msra.mxu0 0
    %2893 = vmatprep.subr.bf16.mxu0 %v1528
    %2894 = vmatpush1.bf16.xpose.msra.mxu0 %v1526
    %2895 = vmatprep.subr.bf16.mxu0 0
    %2896 = vmatpush2.bf16.xpose.msra.mxu0 0
    %2897 = vmatprep.subr.bf16.mxu0 0
    %2898 = vmatpush2.bf16.xpose.msra.mxu0 0
    %2899 = vmatprep.subr.bf16.mxu0 0
    %2900 = vmatpush2.bf16.xpose.msra.mxu0 0
    %2901 = vmatprep.subr.bf16.mxu0 0
    %2902 = vmatpush2.bf16.xpose.msra.mxu0 0
    %2903 = vmatprep.subr.bf16.mxu0 0
    %2904 = vmatpush2.bf16.xpose.msra.mxu0 0
    %2905 = vmatprep.subr.bf16.mxu0 0
    %2906 = vmatpush2.bf16.xpose.msra.mxu0 0
    %2907 = vmatprep.subr.bf16.mxu0 0
    %2908 = vmatpush2.bf16.xpose.msra.mxu0 0
    %2909 = vmatprep.subr.bf16.mxu0 0
    %2910 = vmatpush2.bf16.xpose.msra.mxu0 0
    %2911 = vmatprep.mubr.bf16.mxu0 %v919
    %2912 = vmatmul.mubr.bf16.gmra.mxu0 %v918
    %v2913 = vpop.f32.mrf.mxu0
    %v2914 = vadd.f32 %v2850, %v2913
    %v2915 = vpop.f32.mrf.mxu0
    %v2916 = vpop.f32.mrf.mxu0
    %v2917 = vadd.f32 %v2853, %v2916
    %v2918 = vpop.f32.mrf.mxu0
    %2919 = vmatprep.mubr.bf16.mxu0 %v977
    %2920 = vmatmul.mubr.bf16.gmra.mxu0 %v976
    %v2921 = vpop.f32.mrf.mxu0
    %v2922 = vadd.f32 %v2858, %v2921
    %v2923 = vpop.f32.mrf.mxu0
    %v2924 = vpop.f32.mrf.mxu0
    %v2925 = vadd.f32 %v2861, %v2924
    %v2926 = vpop.f32.mrf.mxu0
    %2927 = vmatprep.mubr.bf16.mxu0 %v1035
    %2928 = vmatmul.mubr.bf16.gmra.mxu0 %v1034
    %v2929 = vpop.f32.mrf.mxu0
    %v2930 = vadd.f32 %v2866, %v2929
    %v2931 = vpop.f32.mrf.mxu0
    %v2932 = vpop.f32.mrf.mxu0
    %v2933 = vadd.f32 %v2869, %v2932
    %v2934 = vpop.f32.mrf.mxu0
    %2935 = vmatprep.mubr.bf16.mxu0 %v1093
    %2936 = vmatmul.mubr.bf16.gmra.mxu0 %v1092
    %v2937 = vpop.f32.mrf.mxu0
    %v2938 = vadd.f32 %v2874, %v2937
    %v2939 = vpop.f32.mrf.mxu0
    %v2940 = vpop.f32.mrf.mxu0
    %v2941 = vpop.f32.mrf.mxu0
    %2942 = vdwg.mxu0
    %2943 = vmatprep.subr.bf16.mxu0 0
    %2944 = vmatpush1.bf16.xpose.msra.mxu0 0
    %2945 = vmatprep.subr.bf16.mxu0 0
    %2946 = vmatpush1.bf16.xpose.msra.mxu0 0
    %2947 = vmatprep.subr.bf16.mxu0 0
    %2948 = vmatpush1.bf16.xpose.msra.mxu0 0
    %2949 = vmatprep.subr.bf16.mxu0 0
    %2950 = vmatpush1.bf16.xpose.msra.mxu0 0
    %2951 = vmatprep.subr.bf16.mxu0 0
    %2952 = vmatpush1.bf16.xpose.msra.mxu0 0
    %2953 = vmatprep.subr.bf16.mxu0 0
    %2954 = vmatpush1.bf16.xpose.msra.mxu0 0
    %2955 = vmatprep.subr.bf16.mxu0 0
    %2956 = vmatpush1.bf16.xpose.msra.mxu0 0
    %2957 = vmatprep.subr.bf16.mxu0 %v1544
    %2958 = vmatpush1.bf16.xpose.msra.mxu0 %v1536
    %2959 = vmatprep.subr.bf16.mxu0 0
    %2960 = vmatpush2.bf16.xpose.msra.mxu0 0
    %2961 = vmatprep.subr.bf16.mxu0 0
    %2962 = vmatpush2.bf16.xpose.msra.mxu0 0
    %2963 = vmatprep.subr.bf16.mxu0 0
    %2964 = vmatpush2.bf16.xpose.msra.mxu0 0
    %2965 = vmatprep.subr.bf16.mxu0 0
    %2966 = vmatpush2.bf16.xpose.msra.mxu0 0
    %2967 = vmatprep.subr.bf16.mxu0 0
    %2968 = vmatpush2.bf16.xpose.msra.mxu0 0
    %2969 = vmatprep.subr.bf16.mxu0 0
    %2970 = vmatpush2.bf16.xpose.msra.mxu0 0
    %2971 = vmatprep.subr.bf16.mxu0 0
    %2972 = vmatpush2.bf16.xpose.msra.mxu0 0
    %2973 = vmatprep.subr.bf16.mxu0 0
    %2974 = vmatpush2.bf16.xpose.msra.mxu0 0
    %2975 = vmatprep.mubr.bf16.mxu0 %v921
    %2976 = vmatmul.mubr.bf16.gmra.mxu0 %v920
    %v2977 = vpop.f32.mrf.mxu0
    %v2978 = vadd.f32 %v2914, %v2977
    %v2979 = vpop.f32.mrf.mxu0
    %v2980 = vpop.f32.mrf.mxu0
    %v2981 = vadd.f32 %v2917, %v2980
    %v2982 = vpop.f32.mrf.mxu0
    %2983 = vmatprep.mubr.bf16.mxu0 %v979
    %2984 = vmatmul.mubr.bf16.gmra.mxu0 %v978
    %v2985 = vpop.f32.mrf.mxu0
    %v2986 = vadd.f32 %v2922, %v2985
    %v2987 = vpop.f32.mrf.mxu0
    %v2988 = vpop.f32.mrf.mxu0
    %v2989 = vadd.f32 %v2925, %v2988
    %v2990 = vpop.f32.mrf.mxu0
    %2991 = vmatprep.mubr.bf16.mxu0 %v1037
    %2992 = vmatmul.mubr.bf16.gmra.mxu0 %v1036
    %v2993 = vpop.f32.mrf.mxu0
    %v2994 = vadd.f32 %v2930, %v2993
    %v2995 = vpop.f32.mrf.mxu0
    %v2996 = vpop.f32.mrf.mxu0
    %v2997 = vadd.f32 %v2933, %v2996
    %v2998 = vpop.f32.mrf.mxu0
    %2999 = vmatprep.mubr.bf16.mxu0 %v1095
    %3000 = vmatmul.mubr.bf16.gmra.mxu0 %v1094
    %v3001 = vpop.f32.mrf.mxu0
    %v3002 = vadd.f32 %v2938, %v3001
    %v3003 = vpop.f32.mrf.mxu0
    %v3004 = vpop.f32.mrf.mxu0
    %v3005 = vpop.f32.mrf.mxu0
    %3006 = vdwg.mxu0
    %3007 = vmatprep.subr.bf16.mxu0 0
    %3008 = vmatpush1.bf16.xpose.msra.mxu0 0
    %3009 = vmatprep.subr.bf16.mxu0 0
    %3010 = vmatpush1.bf16.xpose.msra.mxu0 0
    %3011 = vmatprep.subr.bf16.mxu0 0
    %3012 = vmatpush1.bf16.xpose.msra.mxu0 0
    %3013 = vmatprep.subr.bf16.mxu0 0
    %3014 = vmatpush1.bf16.xpose.msra.mxu0 0
    %3015 = vmatprep.subr.bf16.mxu0 0
    %3016 = vmatpush1.bf16.xpose.msra.mxu0 0
    %3017 = vmatprep.subr.bf16.mxu0 0
    %3018 = vmatpush1.bf16.xpose.msra.mxu0 0
    %3019 = vmatprep.subr.bf16.mxu0 0
    %3020 = vmatpush1.bf16.xpose.msra.mxu0 0
    %3021 = vmatprep.subr.bf16.mxu0 %v1545
    %3022 = vmatpush1.bf16.xpose.msra.mxu0 %v1543
    %3023 = vmatprep.subr.bf16.mxu0 0
    %3024 = vmatpush2.bf16.xpose.msra.mxu0 0
    %3025 = vmatprep.subr.bf16.mxu0 0
    %3026 = vmatpush2.bf16.xpose.msra.mxu0 0
    %3027 = vmatprep.subr.bf16.mxu0 0
    %3028 = vmatpush2.bf16.xpose.msra.mxu0 0
    %3029 = vmatprep.subr.bf16.mxu0 0
    %3030 = vmatpush2.bf16.xpose.msra.mxu0 0
    %3031 = vmatprep.subr.bf16.mxu0 0
    %3032 = vmatpush2.bf16.xpose.msra.mxu0 0
    %3033 = vmatprep.subr.bf16.mxu0 0
    %3034 = vmatpush2.bf16.xpose.msra.mxu0 0
    %3035 = vmatprep.subr.bf16.mxu0 0
    %3036 = vmatpush2.bf16.xpose.msra.mxu0 0
    %3037 = vmatprep.subr.bf16.mxu0 0
    %3038 = vmatpush2.bf16.xpose.msra.mxu0 0
    %3039 = vmatprep.mubr.bf16.mxu0 %v923
    %3040 = vmatmul.mubr.bf16.gmra.mxu0 %v922
    %v3041 = vpop.f32.mrf.mxu0
    %v3042 = vadd.f32 %v2978, %v3041
    %v3043 = vpop.f32.mrf.mxu0
    %v3044 = vpop.f32.mrf.mxu0
    %v3045 = vadd.f32 %v2981, %v3044
    %v3046 = vpop.f32.mrf.mxu0
    %3047 = vmatprep.mubr.bf16.mxu0 %v981
    %3048 = vmatmul.mubr.bf16.gmra.mxu0 %v980
    %v3049 = vpop.f32.mrf.mxu0
    %v3050 = vadd.f32 %v2986, %v3049
    %v3051 = vpop.f32.mrf.mxu0
    %v3052 = vpop.f32.mrf.mxu0
    %v3053 = vadd.f32 %v2989, %v3052
    %v3054 = vpop.f32.mrf.mxu0
    %3055 = vmatprep.mubr.bf16.mxu0 %v1039
    %3056 = vmatmul.mubr.bf16.gmra.mxu0 %v1038
    %v3057 = vpop.f32.mrf.mxu0
    %v3058 = vadd.f32 %v2994, %v3057
    %v3059 = vpop.f32.mrf.mxu0
    %v3060 = vpop.f32.mrf.mxu0
    %v3061 = vadd.f32 %v2997, %v3060
    %v3062 = vpop.f32.mrf.mxu0
    %3063 = vmatprep.mubr.bf16.mxu0 %v1097
    %3064 = vmatmul.mubr.bf16.gmra.mxu0 %v1096
    %v3065 = vpop.f32.mrf.mxu0
    %v3066 = vadd.f32 %v3002, %v3065
    %v3067 = vpop.f32.mrf.mxu0
    %v3068 = vpop.f32.mrf.mxu0
    %v3069 = vpop.f32.mrf.mxu0
    %3070 = vdwg.mxu0
    %3071 = vmatprep.subr.bf16.mxu0 0
    %3072 = vmatpush1.bf16.xpose.msra.mxu0 0
    %3073 = vmatprep.subr.bf16.mxu0 0
    %3074 = vmatpush1.bf16.xpose.msra.mxu0 0
    %3075 = vmatprep.subr.bf16.mxu0 0
    %3076 = vmatpush1.bf16.xpose.msra.mxu0 0
    %3077 = vmatprep.subr.bf16.mxu0 0
    %3078 = vmatpush1.bf16.xpose.msra.mxu0 0
    %3079 = vmatprep.subr.bf16.mxu0 0
    %3080 = vmatpush1.bf16.xpose.msra.mxu0 0
    %3081 = vmatprep.subr.bf16.mxu0 0
    %3082 = vmatpush1.bf16.xpose.msra.mxu0 0
    %3083 = vmatprep.subr.bf16.mxu0 0
    %3084 = vmatpush1.bf16.xpose.msra.mxu0 0
    %3085 = vmatprep.subr.bf16.mxu0 %v1561
    %3086 = vmatpush1.bf16.xpose.msra.mxu0 %v1553
    %3087 = vmatprep.subr.bf16.mxu0 0
    %3088 = vmatpush2.bf16.xpose.msra.mxu0 0
    %3089 = vmatprep.subr.bf16.mxu0 0
    %3090 = vmatpush2.bf16.xpose.msra.mxu0 0
    %3091 = vmatprep.subr.bf16.mxu0 0
    %3092 = vmatpush2.bf16.xpose.msra.mxu0 0
    %3093 = vmatprep.subr.bf16.mxu0 0
    %3094 = vmatpush2.bf16.xpose.msra.mxu0 0
    %3095 = vmatprep.subr.bf16.mxu0 0
    %3096 = vmatpush2.bf16.xpose.msra.mxu0 0
    %3097 = vmatprep.subr.bf16.mxu0 0
    %3098 = vmatpush2.bf16.xpose.msra.mxu0 0
    %3099 = vmatprep.subr.bf16.mxu0 0
    %3100 = vmatpush2.bf16.xpose.msra.mxu0 0
    %3101 = vmatprep.subr.bf16.mxu0 0
    %3102 = vmatpush2.bf16.xpose.msra.mxu0 0
    %3103 = vmatprep.mubr.bf16.mxu0 %v925
    %3104 = vmatmul.mubr.bf16.gmra.mxu0 %v924
    %v3105 = vpop.f32.mrf.mxu0
    %v3106 = vadd.f32 %v3042, %v3105
    %v3107 = vpop.f32.mrf.mxu0
    %v3108 = vpop.f32.mrf.mxu0
    %v3109 = vadd.f32 %v3045, %v3108
    %v3110 = vpop.f32.mrf.mxu0
    %3111 = vmatprep.mubr.bf16.mxu0 %v983
    %3112 = vmatmul.mubr.bf16.gmra.mxu0 %v982
    %v3113 = vpop.f32.mrf.mxu0
    %v3114 = vadd.f32 %v3050, %v3113
    %v3115 = vpop.f32.mrf.mxu0
    %v3116 = vpop.f32.mrf.mxu0
    %v3117 = vadd.f32 %v3053, %v3116
    %v3118 = vpop.f32.mrf.mxu0
    %3119 = vmatprep.mubr.bf16.mxu0 %v1041
    %3120 = vmatmul.mubr.bf16.gmra.mxu0 %v1040
    %v3121 = vpop.f32.mrf.mxu0
    %v3122 = vadd.f32 %v3058, %v3121
    %v3123 = vpop.f32.mrf.mxu0
    %v3124 = vpop.f32.mrf.mxu0
    %v3125 = vadd.f32 %v3061, %v3124
    %v3126 = vpop.f32.mrf.mxu0
    %3127 = vmatprep.mubr.bf16.mxu0 %v1099
    %3128 = vmatmul.mubr.bf16.gmra.mxu0 %v1098
    %v3129 = vpop.f32.mrf.mxu0
    %v3130 = vadd.f32 %v3066, %v3129
    %v3131 = vpop.f32.mrf.mxu0
    %v3132 = vpop.f32.mrf.mxu0
    %v3133 = vpop.f32.mrf.mxu0
    %3134 = vdwg.mxu0
    %3135 = vmatprep.subr.bf16.mxu0 0
    %3136 = vmatpush1.bf16.xpose.msra.mxu0 0
    %3137 = vmatprep.subr.bf16.mxu0 0
    %3138 = vmatpush1.bf16.xpose.msra.mxu0 0
    %3139 = vmatprep.subr.bf16.mxu0 0
    %3140 = vmatpush1.bf16.xpose.msra.mxu0 0
    %3141 = vmatprep.subr.bf16.mxu0 0
    %3142 = vmatpush1.bf16.xpose.msra.mxu0 0
    %3143 = vmatprep.subr.bf16.mxu0 0
    %3144 = vmatpush1.bf16.xpose.msra.mxu0 0
    %3145 = vmatprep.subr.bf16.mxu0 0
    %3146 = vmatpush1.bf16.xpose.msra.mxu0 0
    %3147 = vmatprep.subr.bf16.mxu0 0
    %3148 = vmatpush1.bf16.xpose.msra.mxu0 0
    %3149 = vmatprep.subr.bf16.mxu0 %v1562
    %3150 = vmatpush1.bf16.xpose.msra.mxu0 %v1560
    %3151 = vmatprep.subr.bf16.mxu0 0
    %3152 = vmatpush2.bf16.xpose.msra.mxu0 0
    %3153 = vmatprep.subr.bf16.mxu0 0
    %3154 = vmatpush2.bf16.xpose.msra.mxu0 0
    %3155 = vmatprep.subr.bf16.mxu0 0
    %3156 = vmatpush2.bf16.xpose.msra.mxu0 0
    %3157 = vmatprep.subr.bf16.mxu0 0
    %3158 = vmatpush2.bf16.xpose.msra.mxu0 0
    %3159 = vmatprep.subr.bf16.mxu0 0
    %3160 = vmatpush2.bf16.xpose.msra.mxu0 0
    %3161 = vmatprep.subr.bf16.mxu0 0
    %3162 = vmatpush2.bf16.xpose.msra.mxu0 0
    %3163 = vmatprep.subr.bf16.mxu0 0
    %3164 = vmatpush2.bf16.xpose.msra.mxu0 0
    %3165 = vmatprep.subr.bf16.mxu0 0
    %3166 = vmatpush2.bf16.xpose.msra.mxu0 0
    %3167 = vmatprep.mubr.bf16.mxu0 %v927
    %3168 = vmatmul.mubr.bf16.gmra.mxu0 %v926
    %v3169 = vpop.f32.mrf.mxu0
    %v3170 = vadd.f32 %v3106, %v3169
    %v3171 = vpop.f32.mrf.mxu0
    %v3172 = vpop.f32.mrf.mxu0
    %v3173 = vadd.f32 %v3109, %v3172
    %v3174 = vpop.f32.mrf.mxu0
    %3175 = vmatprep.mubr.bf16.mxu0 %v985
    %3176 = vmatmul.mubr.bf16.gmra.mxu0 %v984
    %v3177 = vpop.f32.mrf.mxu0
    %v3178 = vadd.f32 %v3114, %v3177
    %v3179 = vpop.f32.mrf.mxu0
    %v3180 = vpop.f32.mrf.mxu0
    %v3181 = vadd.f32 %v3117, %v3180
    %v3182 = vpop.f32.mrf.mxu0
    %3183 = vmatprep.mubr.bf16.mxu0 %v1043
    %3184 = vmatmul.mubr.bf16.gmra.mxu0 %v1042
    %v3185 = vpop.f32.mrf.mxu0
    %v3186 = vadd.f32 %v3122, %v3185
    %v3187 = vpop.f32.mrf.mxu0
    %v3188 = vpop.f32.mrf.mxu0
    %v3189 = vadd.f32 %v3125, %v3188
    %v3190 = vpop.f32.mrf.mxu0
    %3191 = vmatprep.mubr.bf16.mxu0 %v1101
    %3192 = vmatmul.mubr.bf16.gmra.mxu0 %v1100
    %v3193 = vpop.f32.mrf.mxu0
    %v3194 = vadd.f32 %v3130, %v3193
    %v3195 = vpop.f32.mrf.mxu0
    %v3196 = vpop.f32.mrf.mxu0
    %v3197 = vpop.f32.mrf.mxu0
    %3198 = vdwg.mxu0
    %3199 = vmatprep.subr.bf16.mxu0 0
    %3200 = vmatpush1.bf16.xpose.msra.mxu0 0
    %3201 = vmatprep.subr.bf16.mxu0 0
    %3202 = vmatpush1.bf16.xpose.msra.mxu0 0
    %3203 = vmatprep.subr.bf16.mxu0 0
    %3204 = vmatpush1.bf16.xpose.msra.mxu0 0
    %3205 = vmatprep.subr.bf16.mxu0 0
    %3206 = vmatpush1.bf16.xpose.msra.mxu0 0
    %3207 = vmatprep.subr.bf16.mxu0 0
    %3208 = vmatpush1.bf16.xpose.msra.mxu0 0
    %3209 = vmatprep.subr.bf16.mxu0 0
    %3210 = vmatpush1.bf16.xpose.msra.mxu0 0
    %3211 = vmatprep.subr.bf16.mxu0 0
    %3212 = vmatpush1.bf16.xpose.msra.mxu0 0
    %3213 = vmatprep.subr.bf16.mxu0 %v1578
    %3214 = vmatpush1.bf16.xpose.msra.mxu0 %v1570
    %3215 = vmatprep.subr.bf16.mxu0 0
    %3216 = vmatpush2.bf16.xpose.msra.mxu0 0
    %3217 = vmatprep.subr.bf16.mxu0 0
    %3218 = vmatpush2.bf16.xpose.msra.mxu0 0
    %3219 = vmatprep.subr.bf16.mxu0 0
    %3220 = vmatpush2.bf16.xpose.msra.mxu0 0
    %3221 = vmatprep.subr.bf16.mxu0 0
    %3222 = vmatpush2.bf16.xpose.msra.mxu0 0
    %3223 = vmatprep.subr.bf16.mxu0 0
    %3224 = vmatpush2.bf16.xpose.msra.mxu0 0
    %3225 = vmatprep.subr.bf16.mxu0 0
    %3226 = vmatpush2.bf16.xpose.msra.mxu0 0
    %3227 = vmatprep.subr.bf16.mxu0 0
    %3228 = vmatpush2.bf16.xpose.msra.mxu0 0
    %3229 = vmatprep.subr.bf16.mxu0 0
    %3230 = vmatpush2.bf16.xpose.msra.mxu0 0
    %3231 = vmatprep.mubr.bf16.mxu0 %v929
    %3232 = vmatmul.mubr.bf16.gmra.mxu0 %v928
    %v3233 = vpop.f32.mrf.mxu0
    %v3234 = vadd.f32 %v3170, %v3233
    %v3235 = vpop.f32.mrf.mxu0
    %v3236 = vpop.f32.mrf.mxu0
    %v3237 = vadd.f32 %v3173, %v3236
    %v3238 = vpop.f32.mrf.mxu0
    %3239 = vmatprep.mubr.bf16.mxu0 %v987
    %3240 = vmatmul.mubr.bf16.gmra.mxu0 %v986
    %v3241 = vpop.f32.mrf.mxu0
    %v3242 = vadd.f32 %v3178, %v3241
    %v3243 = vpop.f32.mrf.mxu0
    %v3244 = vpop.f32.mrf.mxu0
    %v3245 = vadd.f32 %v3181, %v3244
    %v3246 = vpop.f32.mrf.mxu0
    %3247 = vmatprep.mubr.bf16.mxu0 %v1045
    %3248 = vmatmul.mubr.bf16.gmra.mxu0 %v1044
    %v3249 = vpop.f32.mrf.mxu0
    %v3250 = vadd.f32 %v3186, %v3249
    %v3251 = vpop.f32.mrf.mxu0
    %v3252 = vpop.f32.mrf.mxu0
    %v3253 = vadd.f32 %v3189, %v3252
    %v3254 = vpop.f32.mrf.mxu0
    %3255 = vmatprep.mubr.bf16.mxu0 %v1103
    %3256 = vmatmul.mubr.bf16.gmra.mxu0 %v1102
    %v3257 = vpop.f32.mrf.mxu0
    %v3258 = vadd.f32 %v3194, %v3257
    %v3259 = vpop.f32.mrf.mxu0
    %v3260 = vpop.f32.mrf.mxu0
    %v3261 = vpop.f32.mrf.mxu0
    %3262 = vdwg.mxu0
    %3263 = vmatprep.subr.bf16.mxu0 0
    %3264 = vmatpush1.bf16.xpose.msra.mxu0 0
    %3265 = vmatprep.subr.bf16.mxu0 0
    %3266 = vmatpush1.bf16.xpose.msra.mxu0 0
    %3267 = vmatprep.subr.bf16.mxu0 0
    %3268 = vmatpush1.bf16.xpose.msra.mxu0 0
    %3269 = vmatprep.subr.bf16.mxu0 0
    %3270 = vmatpush1.bf16.xpose.msra.mxu0 0
    %3271 = vmatprep.subr.bf16.mxu0 0
    %3272 = vmatpush1.bf16.xpose.msra.mxu0 0
    %3273 = vmatprep.subr.bf16.mxu0 0
    %3274 = vmatpush1.bf16.xpose.msra.mxu0 0
    %3275 = vmatprep.subr.bf16.mxu0 0
    %3276 = vmatpush1.bf16.xpose.msra.mxu0 0
    %3277 = vmatprep.subr.bf16.mxu0 %v1579
    %3278 = vmatpush1.bf16.xpose.msra.mxu0 %v1577
    %3279 = vmatprep.subr.bf16.mxu0 0
    %3280 = vmatpush2.bf16.xpose.msra.mxu0 0
    %3281 = vmatprep.subr.bf16.mxu0 0
    %3282 = vmatpush2.bf16.xpose.msra.mxu0 0
    %3283 = vmatprep.subr.bf16.mxu0 0
    %3284 = vmatpush2.bf16.xpose.msra.mxu0 0
    %3285 = vmatprep.subr.bf16.mxu0 0
    %3286 = vmatpush2.bf16.xpose.msra.mxu0 0
    %3287 = vmatprep.subr.bf16.mxu0 0
    %3288 = vmatpush2.bf16.xpose.msra.mxu0 0
    %3289 = vmatprep.subr.bf16.mxu0 0
    %3290 = vmatpush2.bf16.xpose.msra.mxu0 0
    %3291 = vmatprep.subr.bf16.mxu0 0
    %3292 = vmatpush2.bf16.xpose.msra.mxu0 0
    %3293 = vmatprep.subr.bf16.mxu0 0
    %3294 = vmatpush2.bf16.xpose.msra.mxu0 0
    %3295 = vmatprep.mubr.bf16.mxu0 %v931
    %3296 = vmatmul.mubr.bf16.gmra.mxu0 %v930
    %v3297 = vpop.f32.mrf.mxu0
    %v3298 = vadd.f32 %v3234, %v3297
    %v3299 = vpop.f32.mrf.mxu0
    %v3300 = vpop.f32.mrf.mxu0
    %v3301 = vadd.f32 %v3237, %v3300
    %v3302 = vpop.f32.mrf.mxu0
    %3303 = vmatprep.mubr.bf16.mxu0 %v989
    %3304 = vmatmul.mubr.bf16.gmra.mxu0 %v988
    %v3305 = vpop.f32.mrf.mxu0
    %v3306 = vadd.f32 %v3242, %v3305
    %v3307 = vpop.f32.mrf.mxu0
    %v3308 = vpop.f32.mrf.mxu0
    %v3309 = vadd.f32 %v3245, %v3308
    %v3310 = vpop.f32.mrf.mxu0
    %3311 = vmatprep.mubr.bf16.mxu0 %v1047
    %3312 = vmatmul.mubr.bf16.gmra.mxu0 %v1046
    %v3313 = vpop.f32.mrf.mxu0
    %v3314 = vadd.f32 %v3250, %v3313
    %v3315 = vpop.f32.mrf.mxu0
    %v3316 = vpop.f32.mrf.mxu0
    %v3317 = vadd.f32 %v3253, %v3316
    %v3318 = vpop.f32.mrf.mxu0
    %3319 = vmatprep.mubr.bf16.mxu0 %v1105
    %3320 = vmatmul.mubr.bf16.gmra.mxu0 %v1104
    %v3321 = vpop.f32.mrf.mxu0
    %v3322 = vadd.f32 %v3258, %v3321
    %v3323 = vpop.f32.mrf.mxu0
    %v3324 = vpop.f32.mrf.mxu0
    %v3325 = vpop.f32.mrf.mxu0
    %3326 = vdwg.mxu0
    %3327 = vmatprep.subr.bf16.mxu0 0
    %3328 = vmatpush1.bf16.xpose.msra.mxu0 0
    %3329 = vmatprep.subr.bf16.mxu0 0
    %3330 = vmatpush1.bf16.xpose.msra.mxu0 0
    %3331 = vmatprep.subr.bf16.mxu0 0
    %3332 = vmatpush1.bf16.xpose.msra.mxu0 0
    %3333 = vmatprep.subr.bf16.mxu0 0
    %3334 = vmatpush1.bf16.xpose.msra.mxu0 0
    %3335 = vmatprep.subr.bf16.mxu0 0
    %3336 = vmatpush1.bf16.xpose.msra.mxu0 0
    %3337 = vmatprep.subr.bf16.mxu0 0
    %3338 = vmatpush1.bf16.xpose.msra.mxu0 0
    %3339 = vmatprep.subr.bf16.mxu0 0
    %3340 = vmatpush1.bf16.xpose.msra.mxu0 0
    %3341 = vmatprep.subr.bf16.mxu0 %v1595
    %3342 = vmatpush1.bf16.xpose.msra.mxu0 %v1587
    %3343 = vmatprep.subr.bf16.mxu0 0
    %3344 = vmatpush2.bf16.xpose.msra.mxu0 0
    %3345 = vmatprep.subr.bf16.mxu0 0
    %3346 = vmatpush2.bf16.xpose.msra.mxu0 0
    %3347 = vmatprep.subr.bf16.mxu0 0
    %3348 = vmatpush2.bf16.xpose.msra.mxu0 0
    %3349 = vmatprep.subr.bf16.mxu0 0
    %3350 = vmatpush2.bf16.xpose.msra.mxu0 0
    %3351 = vmatprep.subr.bf16.mxu0 0
    %3352 = vmatpush2.bf16.xpose.msra.mxu0 0
    %3353 = vmatprep.subr.bf16.mxu0 0
    %3354 = vmatpush2.bf16.xpose.msra.mxu0 0
    %3355 = vmatprep.subr.bf16.mxu0 0
    %3356 = vmatpush2.bf16.xpose.msra.mxu0 0
    %3357 = vmatprep.subr.bf16.mxu0 0
    %3358 = vmatpush2.bf16.xpose.msra.mxu0 0
    %3359 = vmatprep.mubr.bf16.mxu0 %v933
    %3360 = vmatmul.mubr.bf16.gmra.mxu0 %v932
    %v3361 = vpop.f32.mrf.mxu0
    %v3362 = vadd.f32 %v3298, %v3361
    %v3363 = vpop.f32.mrf.mxu0
    %v3364 = vpop.f32.mrf.mxu0
    %v3365 = vadd.f32 %v3301, %v3364
    %v3366 = vpop.f32.mrf.mxu0
    %3367 = vmatprep.mubr.bf16.mxu0 %v991
    %3368 = vmatmul.mubr.bf16.gmra.mxu0 %v990
    %v3369 = vpop.f32.mrf.mxu0
    %v3370 = vadd.f32 %v3306, %v3369
    %v3371 = vpop.f32.mrf.mxu0
    %v3372 = vpop.f32.mrf.mxu0
    %v3373 = vadd.f32 %v3309, %v3372
    %v3374 = vpop.f32.mrf.mxu0
    %3375 = vmatprep.mubr.bf16.mxu0 %v1049
    %3376 = vmatmul.mubr.bf16.gmra.mxu0 %v1048
    %v3377 = vpop.f32.mrf.mxu0
    %v3378 = vadd.f32 %v3314, %v3377
    %v3379 = vpop.f32.mrf.mxu0
    %v3380 = vpop.f32.mrf.mxu0
    %v3381 = vadd.f32 %v3317, %v3380
    %v3382 = vpop.f32.mrf.mxu0
    %3383 = vmatprep.mubr.bf16.mxu0 %v1107
    %3384 = vmatmul.mubr.bf16.gmra.mxu0 %v1106
    %v3385 = vpop.f32.mrf.mxu0
    %v3386 = vadd.f32 %v3322, %v3385
    %v3387 = vpop.f32.mrf.mxu0
    %v3388 = vpop.f32.mrf.mxu0
    %v3389 = vpop.f32.mrf.mxu0
    %3390 = vdwg.mxu0
    %3391 = vmatprep.subr.bf16.mxu0 0
    %3392 = vmatpush1.bf16.xpose.msra.mxu0 0
    %3393 = vmatprep.subr.bf16.mxu0 0
    %3394 = vmatpush1.bf16.xpose.msra.mxu0 0
    %3395 = vmatprep.subr.bf16.mxu0 0
    %3396 = vmatpush1.bf16.xpose.msra.mxu0 0
    %3397 = vmatprep.subr.bf16.mxu0 0
    %3398 = vmatpush1.bf16.xpose.msra.mxu0 0
    %3399 = vmatprep.subr.bf16.mxu0 0
    %3400 = vmatpush1.bf16.xpose.msra.mxu0 0
    %3401 = vmatprep.subr.bf16.mxu0 0
    %3402 = vmatpush1.bf16.xpose.msra.mxu0 0
    %3403 = vmatprep.subr.bf16.mxu0 0
    %3404 = vmatpush1.bf16.xpose.msra.mxu0 0
    %3405 = vmatprep.subr.bf16.mxu0 %v1596
    %3406 = vmatpush1.bf16.xpose.msra.mxu0 %v1594
    %3407 = vmatprep.subr.bf16.mxu0 0
    %3408 = vmatpush2.bf16.xpose.msra.mxu0 0
    %3409 = vmatprep.subr.bf16.mxu0 0
    %3410 = vmatpush2.bf16.xpose.msra.mxu0 0
    %3411 = vmatprep.subr.bf16.mxu0 0
    %3412 = vmatpush2.bf16.xpose.msra.mxu0 0
    %3413 = vmatprep.subr.bf16.mxu0 0
    %3414 = vmatpush2.bf16.xpose.msra.mxu0 0
    %3415 = vmatprep.subr.bf16.mxu0 0
    %3416 = vmatpush2.bf16.xpose.msra.mxu0 0
    %3417 = vmatprep.subr.bf16.mxu0 0
    %3418 = vmatpush2.bf16.xpose.msra.mxu0 0
    %3419 = vmatprep.subr.bf16.mxu0 0
    %3420 = vmatpush2.bf16.xpose.msra.mxu0 0
    %3421 = vmatprep.subr.bf16.mxu0 0
    %3422 = vmatpush2.bf16.xpose.msra.mxu0 0
    %3423 = vmatprep.mubr.bf16.mxu0 %v935
    %3424 = vmatmul.mubr.bf16.gmra.mxu0 %v934
    %v3425 = vpop.f32.mrf.mxu0
    %v3426 = vadd.f32 %v3362, %v3425
    %v3427 = vpop.f32.mrf.mxu0
    %v3428 = vpop.f32.mrf.mxu0
    %v3429 = vadd.f32 %v3365, %v3428
    %v3430 = vpop.f32.mrf.mxu0
    %3431 = vmatprep.mubr.bf16.mxu0 %v993
    %3432 = vmatmul.mubr.bf16.gmra.mxu0 %v992
    %v3433 = vpop.f32.mrf.mxu0
    %v3434 = vadd.f32 %v3370, %v3433
    %v3435 = vpop.f32.mrf.mxu0
    %v3436 = vpop.f32.mrf.mxu0
    %v3437 = vadd.f32 %v3373, %v3436
    %v3438 = vpop.f32.mrf.mxu0
    %3439 = vmatprep.mubr.bf16.mxu0 %v1051
    %3440 = vmatmul.mubr.bf16.gmra.mxu0 %v1050
    %v3441 = vpop.f32.mrf.mxu0
    %v3442 = vadd.f32 %v3378, %v3441
    %v3443 = vpop.f32.mrf.mxu0
    %v3444 = vpop.f32.mrf.mxu0
    %v3445 = vadd.f32 %v3381, %v3444
    %v3446 = vpop.f32.mrf.mxu0
    %3447 = vmatprep.mubr.bf16.mxu0 %v1109
    %3448 = vmatmul.mubr.bf16.gmra.mxu0 %v1108
    %v3449 = vpop.f32.mrf.mxu0
    %v3450 = vadd.f32 %v3386, %v3449
    %v3451 = vpop.f32.mrf.mxu0
    %v3452 = vpop.f32.mrf.mxu0
    %v3453 = vpop.f32.mrf.mxu0
    %3454 = vdwg.mxu0
    %3455 = vmatprep.subr.bf16.mxu0 0
    %3456 = vmatpush1.bf16.xpose.msra.mxu0 0
    %3457 = vmatprep.subr.bf16.mxu0 0
    %3458 = vmatpush1.bf16.xpose.msra.mxu0 0
    %3459 = vmatprep.subr.bf16.mxu0 0
    %3460 = vmatpush1.bf16.xpose.msra.mxu0 0
    %3461 = vmatprep.subr.bf16.mxu0 0
    %3462 = vmatpush1.bf16.xpose.msra.mxu0 0
    %3463 = vmatprep.subr.bf16.mxu0 0
    %3464 = vmatpush1.bf16.xpose.msra.mxu0 0
    %3465 = vmatprep.subr.bf16.mxu0 0
    %3466 = vmatpush1.bf16.xpose.msra.mxu0 0
    %3467 = vmatprep.subr.bf16.mxu0 0
    %3468 = vmatpush1.bf16.xpose.msra.mxu0 0
    %3469 = vmatprep.subr.bf16.mxu0 %v1604
    %3470 = vmatpush1.bf16.xpose.msra.mxu0 %v1603
    %3471 = vmatprep.subr.bf16.mxu0 0
    %3472 = vmatpush2.bf16.xpose.msra.mxu0 0
    %3473 = vmatprep.subr.bf16.mxu0 0
    %3474 = vmatpush2.bf16.xpose.msra.mxu0 0
    %3475 = vmatprep.subr.bf16.mxu0 0
    %3476 = vmatpush2.bf16.xpose.msra.mxu0 0
    %3477 = vmatprep.subr.bf16.mxu0 0
    %3478 = vmatpush2.bf16.xpose.msra.mxu0 0
    %3479 = vmatprep.subr.bf16.mxu0 0
    %3480 = vmatpush2.bf16.xpose.msra.mxu0 0
    %3481 = vmatprep.subr.bf16.mxu0 0
    %3482 = vmatpush2.bf16.xpose.msra.mxu0 0
    %3483 = vmatprep.subr.bf16.mxu0 0
    %3484 = vmatpush2.bf16.xpose.msra.mxu0 0
    %3485 = vmatprep.subr.bf16.mxu0 0
    %3486 = vmatpush2.bf16.xpose.msra.mxu0 0
    %3487 = vmatprep.mubr.bf16.mxu0 %v937
    %3488 = vmatmul.mubr.bf16.gmra.mxu0 %v936
    %v3489 = vpop.f32.mrf.mxu0
    %v3490 = vadd.f32 %v3426, %v3489
    %v3491 = vpop.f32.mrf.mxu0
    %v3492 = vpop.f32.mrf.mxu0
    %v3493 = vadd.f32 %v3429, %v3492
    %v3494 = vpop.f32.mrf.mxu0
    %3495 = vmatprep.mubr.bf16.mxu0 %v995
    %3496 = vmatmul.mubr.bf16.gmra.mxu0 %v994
    %v3497 = vpop.f32.mrf.mxu0
    %v3498 = vadd.f32 %v3434, %v3497
    %v3499 = vpop.f32.mrf.mxu0
    %v3500 = vpop.f32.mrf.mxu0
    %v3501 = vadd.f32 %v3437, %v3500
    %v3502 = vpop.f32.mrf.mxu0
    %3503 = vmatprep.mubr.bf16.mxu0 %v1053
    %3504 = vmatmul.mubr.bf16.gmra.mxu0 %v1052
    %v3505 = vpop.f32.mrf.mxu0
    %v3506 = vadd.f32 %v3442, %v3505
    %v3507 = vpop.f32.mrf.mxu0
    %v3508 = vpop.f32.mrf.mxu0
    %v3509 = vadd.f32 %v3445, %v3508
    %v3510 = vpop.f32.mrf.mxu0
    %3511 = vmatprep.mubr.bf16.mxu0 %v1111
    %3512 = vmatmul.mubr.bf16.gmra.mxu0 %v1110
    %v3513 = vpop.f32.mrf.mxu0
    %v3514 = vadd.f32 %v3450, %v3513
    %v3515 = vpop.f32.mrf.mxu0
    %v3516 = vpop.f32.mrf.mxu0
    %v3517 = vpop.f32.mrf.mxu0
    %3518 = vdwg.mxu0
    %v3519 = vadd.f32 %v46, %v3490
    %v3520 = vadd.f32 %v47, %v3493
    %v3521 = vadd.f32 %v48, %v3498
    %v3522 = vadd.f32 %v49, %v3501
    %v3523 = vadd.f32 %v50, %v3506
    %v3524 = vadd.f32 %v51, %v3509
    %v3525 = vadd.f32 %v52, %v3514
    %vm3526 = vcmask 23552
    %3527 = vst.msk [vmem:[#allocation2] sm:$0xff] %vm3526, %v3519
    %3528 = vst.msk [vmem:[#allocation2 + $0x8] sm:$0xff] %vm3526, %v3520
    %3529 = vst.msk [vmem:[#allocation2 + $0x10] sm:$0xff] %vm3526, %v3521
    %3530 = vst.msk [vmem:[#allocation2 + $0x18] sm:$0xff] %vm3526, %v3522
    %3531 = vst.msk [vmem:[#allocation2 + $0x20] sm:$0xff] %vm3526, %v3523
    %3532 = vst.msk [vmem:[#allocation2 + $0x28] sm:$0xff] %vm3526, %v3524
    %vm3533 = vcmask 16384
    %3534 = vst.msk [vmem:[#allocation2 + $0x30] sm:$0x1] %vm3533, %v3525
    // Predicated region
    $region26: #{conv_transpose_silu.1} parent=1 // pred_check
      %p3535 = pneg %p33
    $region27: #{conv_transpose_silu.1} parent=1 // pred_check_branch
      %3537 = sbr.rel (%p3535) target = $region29
    $region28: #{conv_transpose_silu.1} parent=1 // pred_region
      %v3538 = vld [vmem:[#allocation2] sm:$0xff]
      %v3539 = vld [vmem:[#allocation2 + $0x8] sm:$0xff]
      %v3540 = vld [vmem:[#allocation2 + $0x10] sm:$0xff]
      %v3541 = vld [vmem:[#allocation2 + $0x18] sm:$0xff]
      %v3542 = vld [vmem:[#allocation2 + $0x20] sm:$0xff]
      %v3543 = vld [vmem:[#allocation2 + $0x28] sm:$0xff]
      %v3544 = vld [vmem:[#allocation2 + $0x30] sm:$0x1]
      %v3545 = vld [vmem:[%s2] sm:$0xff]
      %v3546 = vld [vmem:[%s2 + $0x8] sm:$0xff]
      %v3547 = vld [vmem:[%s2 + $0x10] sm:$0xff]
      %v3548 = vld [vmem:[%s2 + $0x18] sm:$0xff]
      %v3549 = vld [vmem:[%s2 + $0x20] sm:$0xff]
      %v3550 = vld [vmem:[%s2 + $0x28] sm:$0xff]
      %v3551 = vld [vmem:[%s2 + $0x30] sm:$0x1]
      %3553 = vset.pattern.permute.xlu0 0
      %3554 = vperm.xlu0 %3553, %v3538
      %v3555 = vpop.permute.xlu0 %3554
      %3558 = vset.pattern.permute.xlu0 0
      %3559 = vperm.xlu0 %3558, %v3539
      %v3560 = vpop.permute.xlu0 %3559
      %3563 = vset.pattern.permute.xlu0 0
      %3564 = vperm.xlu0 %3563, %v3540
      %v3565 = vpop.permute.xlu0 %3564
      %3568 = vset.pattern.permute.xlu0 0
      %3569 = vperm.xlu0 %3568, %v3541
      %v3570 = vpop.permute.xlu0 %3569
      %3573 = vset.pattern.permute.xlu0 0
      %3574 = vperm.xlu0 %3573, %v3542
      %v3575 = vpop.permute.xlu0 %3574
      %3578 = vset.pattern.permute.xlu0 0
      %3579 = vperm.xlu0 %3578, %v3543
      %v3580 = vpop.permute.xlu0 %3579
      %3583 = vset.pattern.permute.xlu0 0
      %3584 = vperm.xlu0 %3583, %v3544
      %v3585 = vpop.permute.xlu0 %3584
      %v3587 = vmul.f32 %v3555, %v3545
      %v3588 = vmul.f32 %v3560, %v3546
      %v3589 = vmul.f32 %v3565, %v3547
      %v3590 = vmul.f32 %v3570, %v3548
      %v3591 = vmul.f32 %v3575, %v3549
      %v3592 = vmul.f32 %v3580, %v3550
      %v3593 = vmul.f32 %v3585, %v3551
      %v3594 = vadd.f32 %v3587, 0.0
      %v3595 = vadd.f32 %v3588, 0.0
      %v3596 = vadd.f32 %v3589, 0.0
      %v3597 = vadd.f32 %v3590, 0.0
      %v3598 = vadd.f32 %v3591, 0.0
      %v3599 = vadd.f32 %v3592, 0.0
      %v3600 = vadd.f32 %v3593, 0.0
      %s3601 = scalar_lea.vmem %s2, 56
      %v3602 = vld [vmem:[%s3601] sm:$0xff]
      %v3603 = vld [vmem:[%s3601 + $0x8] sm:$0xff]
      %v3604 = vld [vmem:[%s3601 + $0x10] sm:$0xff]
      %v3605 = vld [vmem:[%s3601 + $0x18] sm:$0xff]
      %v3606 = vld [vmem:[%s3601 + $0x20] sm:$0xff]
      %v3607 = vld [vmem:[%s3601 + $0x28] sm:$0xff]
      %v3608 = vld [vmem:[%s3601 + $0x30] sm:$0x1]
      %3609 = vset.pattern.permute.xlu0 1
      %3610 = vperm.xlu0 %3609, %v3538
      %v3611 = vpop.permute.xlu0 %3610
      %3613 = vset.pattern.permute.xlu0 1
      %3614 = vperm.xlu0 %3613, %v3539
      %v3615 = vpop.permute.xlu0 %3614
      %3617 = vset.pattern.permute.xlu0 1
      %3618 = vperm.xlu0 %3617, %v3540
      %v3619 = vpop.permute.xlu0 %3618
      %3621 = vset.pattern.permute.xlu0 1
      %3622 = vperm.xlu0 %3621, %v3541
      %v3623 = vpop.permute.xlu0 %3622
      %3625 = vset.pattern.permute.xlu0 1
      %3626 = vperm.xlu0 %3625, %v3542
      %v3627 = vpop.permute.xlu0 %3626
      %3629 = vset.pattern.permute.xlu0 1
      %3630 = vperm.xlu0 %3629, %v3543
      %v3631 = vpop.permute.xlu0 %3630
      %3633 = vset.pattern.permute.xlu0 1
      %3634 = vperm.xlu0 %3633, %v3544
      %v3635 = vpop.permute.xlu0 %3634
      %v3637 = vmul.f32 %v3611, %v3602
      %v3638 = vmul.f32 %v3615, %v3603
      %v3639 = vmul.f32 %v3619, %v3604
      %v3640 = vmul.f32 %v3623, %v3605
      %v3641 = vmul.f32 %v3627, %v3606
      %v3642 = vmul.f32 %v3631, %v3607
      %v3643 = vmul.f32 %v3635, %v3608
      %v3644 = vadd.f32 %v3594, %v3637
      %v3645 = vadd.f32 %v3595, %v3638
      %v3646 = vadd.f32 %v3596, %v3639
      %v3647 = vadd.f32 %v3597, %v3640
      %v3648 = vadd.f32 %v3598, %v3641
      %v3649 = vadd.f32 %v3599, %v3642
      %v3650 = vadd.f32 %v3600, %v3643
      %s3651 = scalar_lea.vmem %s2, 112
      %v3652 = vld [vmem:[%s3651] sm:$0xff]
      %v3653 = vld [vmem:[%s3651 + $0x8] sm:$0xff]
      %v3654 = vld [vmem:[%s3651 + $0x10] sm:$0xff]
      %v3655 = vld [vmem:[%s3651 + $0x18] sm:$0xff]
      %v3656 = vld [vmem:[%s3651 + $0x20] sm:$0xff]
      %v3657 = vld [vmem:[%s3651 + $0x28] sm:$0xff]
      %v3658 = vld [vmem:[%s3651 + $0x30] sm:$0x1]
      %3659 = vset.pattern.permute.xlu0 2
      %3660 = vperm.xlu0 %3659, %v3538
      %v3661 = vpop.permute.xlu0 %3660
      %3663 = vset.pattern.permute.xlu0 2
      %3664 = vperm.xlu0 %3663, %v3539
      %v3665 = vpop.permute.xlu0 %3664
      %3667 = vset.pattern.permute.xlu0 2
      %3668 = vperm.xlu0 %3667, %v3540
      %v3669 = vpop.permute.xlu0 %3668
      %3671 = vset.pattern.permute.xlu0 2
      %3672 = vperm.xlu0 %3671, %v3541
      %v3673 = vpop.permute.xlu0 %3672
      %3675 = vset.pattern.permute.xlu0 2
      %3676 = vperm.xlu0 %3675, %v3542
      %v3677 = vpop.permute.xlu0 %3676
      %3679 = vset.pattern.permute.xlu0 2
      %3680 = vperm.xlu0 %3679, %v3543
      %v3681 = vpop.permute.xlu0 %3680
      %3683 = vset.pattern.permute.xlu0 2
      %3684 = vperm.xlu0 %3683, %v3544
      %v3685 = vpop.permute.xlu0 %3684
      %v3687 = vmul.f32 %v3661, %v3652
      %v3688 = vmul.f32 %v3665, %v3653
      %v3689 = vmul.f32 %v3669, %v3654
      %v3690 = vmul.f32 %v3673, %v3655
      %v3691 = vmul.f32 %v3677, %v3656
      %v3692 = vmul.f32 %v3681, %v3657
      %v3693 = vmul.f32 %v3685, %v3658
      %v3694 = vadd.f32 %v3644, %v3687
      %v3695 = vadd.f32 %v3645, %v3688
      %v3696 = vadd.f32 %v3646, %v3689
      %v3697 = vadd.f32 %v3647, %v3690
      %v3698 = vadd.f32 %v3648, %v3691
      %v3699 = vadd.f32 %v3649, %v3692
      %v3700 = vadd.f32 %v3650, %v3693
      %vm3701 = vcmask 285696
      %v3702 = vsel %vm3701, %v3694, 0.0
      %v3703 = vsel %vm3701, %v3695, 0.0
      %v3704 = vadd.f32 %v3702, %v3703
      %v3705 = vsel %vm3701, %v3696, 0.0
      %v3706 = vadd.f32 %v3704, %v3705
      %v3707 = vsel %vm3701, %v3697, 0.0
      %v3708 = vadd.f32 %v3706, %v3707
      %v3709 = vsel %vm3701, %v3698, 0.0
      %v3710 = vadd.f32 %v3708, %v3709
      %v3711 = vsel %vm3701, %v3699, 0.0
      %v3712 = vadd.f32 %v3710, %v3711
      %vm3713 = vcmask 278528
      %v3714 = vsel %vm3713, %v3700, 0.0
      %v3715 = vadd.f32 %v3712, %v3714
      %v3716 = vrot.slane %v3715, 4
      %v3717 = vadd.f32 %v3715, %v3716
      %v3718 = vrot.slane %v3717, 2
      %v3719 = vadd.f32 %v3717, %v3718
      %v3720 = vrot.slane %v3719, 1
      %v3721 = vadd.f32 %v3719, %v3720
      %s3722 = sld [smem:[#allocation3]]
      %v3723 = vstv %s3722
      %v3724 = vadd.f32 %v3721, %v3723
      %v3725 = vsub.f32 0.0, %v3724
      %v3726 = vmul.f32 %v3725, 1.442695
      %v3727 = vpow.pop %v3726
      %v3728 = vadd.f32 %v3727, 1.0
      %v3729 = vrcp.pop %v3728
      %v3730 = vmul.f32 1.0, %v3729
      %v3731 = vmul.f32 %v3724, %v3730
      %3732 = vst.msk [vmem:[%s4] sm:$0x1] %vm3713, %v3731
    $region29: #{conv_transpose_silu.1} parent=1 // pred_fallthru
      _
    // Predicated region
    $region30: #{conv_transpose_silu.1} parent=1 // pred_check
      _
    $region31: #{conv_transpose_silu.1} parent=1 // pred_check_branch
      %3734 = sbr.rel (0) target = $region33
    $region32: #{conv_transpose_silu.1} parent=1 // pred_region
      _
    $region33: #{conv_transpose_silu.1} parent=1 // pred_fallthru
      _
    // Predicated region
    $region34: #{conv_transpose_silu.1} parent=1 // pred_check
      _
    $region35: #{conv_transpose_silu.1} parent=1 // pred_check_branch
      %3736 = sbr.rel (0) target = $region37
    $region36: #{conv_transpose_silu.1} parent=1 // pred_region
      _
    $region37: #{conv_transpose_silu.1} parent=1 // pred_fallthru
      _
    %3737 = vsyncpa [#allocation5], 1

</llo_original>
